<compile_context>
chip_gen: v6e
topology: v6e:2x2x1
jax: 0.10.0
libtpu: 0.0.40
codegen_flags: <defaults>
</compile_context>

<pallas_src>
import functools

import jax
import jax.numpy as jnp
import numpy as np
from jax.experimental import pallas as pl
from jax.experimental.pallas import tpu as pltpu

COUT_PAD = 128   # lane-padded conv output channels (real: 8)
EMBED_PAD = 128  # lane-padded embedding dim       (real: 32)


# ----------------------------- Pallas kernel -------------------------------
def branch_kernel(a_ref, w1_ref, b1_ref, w2_ref, b2_ref, out_ref, pooled_ref,
                  *, nb, h, w, hp):
  # a_ref : (NB*Hp*W, 3*C) bf16  -- horizontal-triplet rows, images stacked
  # w1_ref: (3, 3*C, COUT_PAD) bf16 -- one (3C, COUT_PAD) slice per vertical tap
  # b1_ref: (1, COUT_PAD) f32      b2_ref: (1, EMBED_PAD) f32
  # w2_ref: (COUT_PAD, EMBED_PAD) f32 (mean-pool 1/HW scale already folded in)
  # out_ref: (NB, EMBED_PAD) f32   pooled_ref: (NB, COUT_PAD) f32 scratch
  hw = h * w
  m_h = a_ref.shape[0] - 2 * w          # rows of the conv-output buffer

  # Conv as 3 accumulating matmuls: vertical tap ki <-> row slab A[ki*W : ki*W + M_h].
  # Offsets 0, W, 2W are multiples of 8 -> sublane-aligned slices, no relayout.
  acc = jnp.dot(a_ref[0:m_h, :], w1_ref[0],
                preferred_element_type=jnp.float32)
  acc += jnp.dot(a_ref[w:w + m_h, :], w1_ref[1],
                 preferred_element_type=jnp.float32)
  acc += jnp.dot(a_ref[2 * w:2 * w + m_h, :], w1_ref[2],
                 preferred_element_type=jnp.float32)
  hbuf = jnp.maximum(acc + b1_ref[...], 0.0)          # (M_h, COUT_PAD) f32

  # Global mean pool: valid pixels of image b occupy the contiguous row range
  # [b*Hp*W, b*Hp*W + H*W) of hbuf (per-image pad rows fall outside it).
  for b in range(nb):
    start = b * hp * w
    pooled_ref[b:b + 1, :] = jnp.sum(hbuf[start:start + hw, :],
                                     axis=0, keepdims=True)

  out_ref[...] = (jnp.dot(pooled_ref[...], w2_ref[...],
                          preferred_element_type=jnp.float32)
                  + b2_ref[...]).astype(out_ref.dtype)


# ------------------------------- JAX glue -----------------------------------
def make_params(key, c_in=4, c_out=8, embed=32):
  k1, k2, k3, k4 = jax.random.split(key, 4)
  w_conv = jax.random.normal(k1, (c_out, c_in, 3, 3), jnp.float32) * (
      1.0 / np.sqrt(c_in * 9))
  b_conv = jax.random.normal(k2, (c_out,), jnp.float32) * 0.01
  w_fc = jax.random.normal(k3, (c_out, embed), jnp.float32) * (
      1.0 / np.sqrt(c_out))
  b_fc = jax.random.normal(k4, (embed,), jnp.float32) * 0.01
  return dict(w_conv=w_conv, b_conv=b_conv, w_fc=w_fc, b_fc=b_fc)


def _pad_params(params, c_in, hw):
  """Lane-pad weights; conv weights as per-vertical-tap bf16 slices.

  A's lane index is kj*C + c, so W1[ki][kj*C + c, o] = w_conv[o, c, ki, kj].
  The 1/(H*W) mean-pool scale is folded into the FC weight (linear, so free).
  """
  c_out = params["w_conv"].shape[0]
  embed = params["w_fc"].shape[1]

  w1 = jnp.transpose(params["w_conv"], (2, 3, 1, 0))          # (KH, KW, C, O)
  w1 = w1.reshape(3, 3 * c_in, c_out)                         # (ki, kj*C+c, O)
  w1p = jnp.zeros((3, 3 * c_in, COUT_PAD), jnp.float32).at[:, :, :c_out].set(w1)
  w1p = w1p.astype(jnp.bfloat16)                              # bf16 MXU operand

  b1p = jnp.zeros((1, COUT_PAD), jnp.float32).at[0, :c_out].set(
      params["b_conv"])
  w2p = jnp.zeros((COUT_PAD, EMBED_PAD), jnp.float32).at[:c_out, :embed].set(
      params["w_fc"] * (1.0 / hw))                            # fold mean scale
  b2p = jnp.zeros((1, EMBED_PAD), jnp.float32).at[0, :embed].set(
      params["b_fc"])
  return w1p, b1p, w2p, b2p, embed


@jax.jit
def seqnet_forward(img1, img2, params):
  """SeqNet.forward: the SAME branch (shared weights) on both images, fused
  into ONE pallas_call (images merged into the batch dimension)."""
  n, c, h, w = img1.shape
  nb = 2 * n
  hp, wp = h + 2, w + 2
  hw = h * w
  k3 = 3 * c

  # NCHW -> NHWC, zero-pad spatial, build the 3-wide horizontal triplets
  # (3x expansion instead of 9x), flatten rows, cast to bf16.
  x = jnp.concatenate([img1, img2], axis=0)                   # (NB, C, H, W)
  x = jnp.transpose(x, (0, 2, 3, 1))                          # (NB, H, W, C)
  xpad = jnp.pad(x, ((0, 0), (1, 1), (1, 1), (0, 0)))         # (NB, Hp, Wp, C)
  a = jnp.concatenate([xpad[:, :, j:j + w, :] for j in range(3)],
                      axis=-1)                                # (NB, Hp, W, 3C)
  a = a.reshape(nb * hp * w, k3).astype(jnp.bfloat16)         # (NB*Hp*W, 3C)

  w1p, b1p, w2p, b2p, embed = _pad_params(params, c, hw)

  out = pl.pallas_call(
      functools.partial(branch_kernel, nb=nb, h=h, w=w, hp=hp),
      out_shape=jax.ShapeDtypeStruct((nb, EMBED_PAD), jnp.float32),
      grid=(1,),
      in_specs=[
          pl.BlockSpec((nb * hp * w, k3), lambda i: (0, 0)),
          pl.BlockSpec((3, k3, COUT_PAD), lambda i: (0, 0, 0)),
          pl.BlockSpec((1, COUT_PAD), lambda i: (0, 0)),
          pl.BlockSpec((COUT_PAD, EMBED_PAD), lambda i: (0, 0)),
          pl.BlockSpec((1, EMBED_PAD), lambda i: (0, 0)),
      ],
      out_specs=pl.BlockSpec((nb, EMBED_PAD), lambda i: (0, 0)),
      scratch_shapes=[pltpu.VMEM((nb, COUT_PAD), jnp.float32)],
      compiler_params=pltpu.CompilerParams(
          dimension_semantics=("arbitrary",)),
  )(a, w1p, b1p, w2p, b2p)

  res = out[:, :embed]
  return res[:n], res[n:]


# Pure-JAX reference for validation (lax conv path, f32 end to end).
def branch_reference(x_nchw, params):
  y = jax.lax.conv_general_dilated(
      x_nchw, params["w_conv"], window_strides=(1, 1), padding="SAME",
      dimension_numbers=("NCHW", "OIHW", "NCHW"))
  y = jnp.maximum(y + params["b_conv"][None, :, None, None], 0.0)
  pooled = y.mean(axis=(2, 3))                                # (N, Cout)
  return pooled @ params["w_fc"] + params["b_fc"]


if __name__ == "__main__":
  key = jax.random.PRNGKey(0)
  k_params, k_img1, k_img2 = jax.random.split(key, 3)

  params = make_params(k_params, c_in=4, c_out=8, embed=32)
  img1 = jax.random.normal(k_img1, (2, 4, 16, 16), jnp.float32)  # NCHW
  img2 = jax.random.normal(k_img2, (2, 4, 16, 16), jnp.float32)  # NCHW

  res1, res2 = seqnet_forward(img1, img2, params)
  jax.block_until_ready((res1, res2))

  ref1 = branch_reference(img1, params)
  ref2 = branch_reference(img2, params)
  # bf16 matmul operands -> loosen tolerance vs. the pure-f32 reference.
  assert np.allclose(np.asarray(res1), np.asarray(ref1), atol=2e-2, rtol=2e-2)
  assert np.allclose(np.asarray(res2), np.asarray(ref2), atol=2e-2, rtol=2e-2)
  assert res1.shape == (2, 32) and res2.shape == (2, 32)

  print("KERNEL_OK")
</pallas_src>

<mosaic_0001>
module attributes {stable_mosaic.version = 11 : i64} {
  func.func @branch_kernel(%arg0: i32, %arg1: memref<1152x12xbf16, #tpu.memory_space<vmem>>, %arg2: memref<3x12x128xbf16, #tpu.memory_space<vmem>>, %arg3: memref<1x128xf32, #tpu.memory_space<vmem>>, %arg4: memref<128x128xf32, #tpu.memory_space<vmem>>, %arg5: memref<1x128xf32, #tpu.memory_space<vmem>>, %arg6: memref<4x128xf32, #tpu.memory_space<vmem>>, %arg7: memref<4x128xf32, #tpu.memory_space<vmem>>) attributes {dimension_semantics = [#tpu.dimension_semantics<arbitrary>], iteration_bounds = array<i64: 1>, scalar_prefetch = 0 : i64, scratch_operands = 1 : i64, tpu.core_type = #tpu.core_type<tc>, window_params = [{pipeline_mode = #tpu.pipeline_mode<synchronous>, transform_indices = @transform_0, window_bounds = array<i64: 1152, 12>}, {pipeline_mode = #tpu.pipeline_mode<synchronous>, transform_indices = @transform_1, window_bounds = array<i64: 3, 12, 128>}, {pipeline_mode = #tpu.pipeline_mode<synchronous>, transform_indices = @transform_2, window_bounds = array<i64: 1, 128>}, {pipeline_mode = #tpu.pipeline_mode<synchronous>, transform_indices = @transform_3, window_bounds = array<i64: 128, 128>}, {pipeline_mode = #tpu.pipeline_mode<synchronous>, transform_indices = @transform_4, window_bounds = array<i64: 1, 128>}, {pipeline_mode = #tpu.pipeline_mode<synchronous>, transform_indices = @transform_5, window_bounds = array<i64: 4, 128>}]} {
    %c0 = arith.constant 0 : index
    %c0_0 = arith.constant 0 : index
    %0 = vector.load %arg1[%c0, %c0_0] : memref<1152x12xbf16, #tpu.memory_space<vmem>>, vector<1120x12xbf16>
    %c0_1 = arith.constant 0 : index
    %c0_2 = arith.constant 0 : index
    %c0_3 = arith.constant 0 : index
    %1 = vector.load %arg2[%c0_1, %c0_2, %c0_3] : memref<3x12x128xbf16, #tpu.memory_space<vmem>>, vector<1x12x128xbf16>
    %2 = vector.shape_cast %1 : vector<1x12x128xbf16> to vector<12x128xbf16>
    %cst = arith.constant dense<0.000000e+00> : vector<1120x128xf32>
    %3 = tpu.matmul %0, %2, %cst {dimension_numbers = #tpu.dot_dimension_numbers<[1], [0], [0], [1], [0, 0, 1, 1], [], []>} : vector<1120x12xbf16>, vector<12x128xbf16>, vector<1120x128xf32> -> vector<1120x128xf32>
    %c16 = arith.constant 16 : index
    %c0_4 = arith.constant 0 : index
    %4 = vector.load %arg1[%c16, %c0_4] : memref<1152x12xbf16, #tpu.memory_space<vmem>>, vector<1120x12xbf16>
    %c1 = arith.constant 1 : index
    %c0_5 = arith.constant 0 : index
    %c0_6 = arith.constant 0 : index
    %5 = vector.load %arg2[%c1, %c0_5, %c0_6] : memref<3x12x128xbf16, #tpu.memory_space<vmem>>, vector<1x12x128xbf16>
    %6 = vector.shape_cast %5 : vector<1x12x128xbf16> to vector<12x128xbf16>
    %cst_7 = arith.constant dense<0.000000e+00> : vector<1120x128xf32>
    %7 = tpu.matmul %4, %6, %cst_7 {dimension_numbers = #tpu.dot_dimension_numbers<[1], [0], [0], [1], [0, 0, 1, 1], [], []>} : vector<1120x12xbf16>, vector<12x128xbf16>, vector<1120x128xf32> -> vector<1120x128xf32>
    %8 = arith.addf %3, %7 : vector<1120x128xf32>
    %c32 = arith.constant 32 : index
    %c0_8 = arith.constant 0 : index
    %9 = vector.load %arg1[%c32, %c0_8] : memref<1152x12xbf16, #tpu.memory_space<vmem>>, vector<1120x12xbf16>
    %c2 = arith.constant 2 : index
    %c0_9 = arith.constant 0 : index
    %c0_10 = arith.constant 0 : index
    %10 = vector.load %arg2[%c2, %c0_9, %c0_10] : memref<3x12x128xbf16, #tpu.memory_space<vmem>>, vector<1x12x128xbf16>
    %11 = vector.shape_cast %10 : vector<1x12x128xbf16> to vector<12x128xbf16>
    %cst_11 = arith.constant dense<0.000000e+00> : vector<1120x128xf32>
    %12 = tpu.matmul %9, %11, %cst_11 {dimension_numbers = #tpu.dot_dimension_numbers<[1], [0], [0], [1], [0, 0, 1, 1], [], []>} : vector<1120x12xbf16>, vector<12x128xbf16>, vector<1120x128xf32> -> vector<1120x128xf32>
    %13 = arith.addf %8, %12 : vector<1120x128xf32>
    %c0_12 = arith.constant 0 : index
    %c0_13 = arith.constant 0 : index
    %14 = vector.load %arg3[%c0_12, %c0_13] : memref<1x128xf32, #tpu.memory_space<vmem>>, vector<1x128xf32>
    %15 = vector.broadcast %14 : vector<1x128xf32> to vector<1120x128xf32>
    %16 = arith.addf %13, %15 : vector<1120x128xf32>
    %cst_14 = arith.constant 0.000000e+00 : f32
    %17 = vector.broadcast %cst_14 : f32 to vector<1120x128xf32>
    %18 = arith.maximumf %16, %17 : vector<1120x128xf32>
    %19 = vector.extract_strided_slice %18 {offsets = [0, 0], sizes = [256, 128], strides = [1, 1]} : vector<1120x128xf32> to vector<256x128xf32>
    %cst_15 = arith.constant dense<0.000000e+00> : vector<128xf32>
    %20 = vector.multi_reduction <add>, %19, %cst_15 [0] : vector<256x128xf32> to vector<128xf32>
    %21 = vector.shape_cast %20 : vector<128xf32> to vector<1x128xf32>
    %c0_16 = arith.constant 0 : index
    %c0_17 = arith.constant 0 : index
    %22 = vector.load %arg7[%c0_16, %c0_17] : memref<4x128xf32, #tpu.memory_space<vmem>>, vector<1x128xf32>
    tpu.vector_store %arg7[%c0_16, %c0_17], %21 {strides = array<i32>} : memref<4x128xf32, #tpu.memory_space<vmem>>, vector<1x128xf32>,
    %23 = vector.extract_strided_slice %18 {offsets = [288, 0], sizes = [256, 128], strides = [1, 1]} : vector<1120x128xf32> to vector<256x128xf32>
    %cst_18 = arith.constant dense<0.000000e+00> : vector<128xf32>
    %24 = vector.multi_reduction <add>, %23, %cst_18 [0] : vector<256x128xf32> to vector<128xf32>
    %25 = vector.shape_cast %24 : vector<128xf32> to vector<1x128xf32>
    %c1_19 = arith.constant 1 : index
    %c0_20 = arith.constant 0 : index
    %26 = vector.load %arg7[%c1_19, %c0_20] : memref<4x128xf32, #tpu.memory_space<vmem>>, vector<1x128xf32>
    tpu.vector_store %arg7[%c1_19, %c0_20], %25 {strides = array<i32>} : memref<4x128xf32, #tpu.memory_space<vmem>>, vector<1x128xf32>,
    %27 = vector.extract_strided_slice %18 {offsets = [576, 0], sizes = [256, 128], strides = [1, 1]} : vector<1120x128xf32> to vector<256x128xf32>
    %cst_21 = arith.constant dense<0.000000e+00> : vector<128xf32>
    %28 = vector.multi_reduction <add>, %27, %cst_21 [0] : vector<256x128xf32> to vector<128xf32>
    %29 = vector.shape_cast %28 : vector<128xf32> to vector<1x128xf32>
    %c2_22 = arith.constant 2 : index
    %c0_23 = arith.constant 0 : index
    %30 = vector.load %arg7[%c2_22, %c0_23] : memref<4x128xf32, #tpu.memory_space<vmem>>, vector<1x128xf32>
    tpu.vector_store %arg7[%c2_22, %c0_23], %29 {strides = array<i32>} : memref<4x128xf32, #tpu.memory_space<vmem>>, vector<1x128xf32>,
    %31 = vector.extract_strided_slice %18 {offsets = [864, 0], sizes = [256, 128], strides = [1, 1]} : vector<1120x128xf32> to vector<256x128xf32>
    %cst_24 = arith.constant dense<0.000000e+00> : vector<128xf32>
    %32 = vector.multi_reduction <add>, %31, %cst_24 [0] : vector<256x128xf32> to vector<128xf32>
    %33 = vector.shape_cast %32 : vector<128xf32> to vector<1x128xf32>
    %c3 = arith.constant 3 : index
    %c0_25 = arith.constant 0 : index
    %34 = vector.load %arg7[%c3, %c0_25] : memref<4x128xf32, #tpu.memory_space<vmem>>, vector<1x128xf32>
    tpu.vector_store %arg7[%c3, %c0_25], %33 {strides = array<i32>} : memref<4x128xf32, #tpu.memory_space<vmem>>, vector<1x128xf32>,
    %c0_26 = arith.constant 0 : index
    %c0_27 = arith.constant 0 : index
    %35 = vector.load %arg7[%c0_26, %c0_27] : memref<4x128xf32, #tpu.memory_space<vmem>>, vector<4x128xf32>
    %c0_28 = arith.constant 0 : index
    %c0_29 = arith.constant 0 : index
    %36 = vector.load %arg4[%c0_28, %c0_29] : memref<128x128xf32, #tpu.memory_space<vmem>>, vector<128x128xf32>
    %cst_30 = arith.constant dense<0.000000e+00> : vector<4x128xf32>
    %37 = tpu.matmul %35, %36, %cst_30 {dimension_numbers = #tpu.dot_dimension_numbers<[1], [0], [0], [1], [0, 0, 1, 1], [], []>} : vector<4x128xf32>, vector<128x128xf32>, vector<4x128xf32> -> vector<4x128xf32>
    %c0_31 = arith.constant 0 : index
    %c0_32 = arith.constant 0 : index
    %38 = vector.load %arg5[%c0_31, %c0_32] : memref<1x128xf32, #tpu.memory_space<vmem>>, vector<1x128xf32>
    %39 = vector.broadcast %38 : vector<1x128xf32> to vector<4x128xf32>
    %40 = arith.addf %37, %39 : vector<4x128xf32>
    %c0_33 = arith.constant 0 : index
    %c0_34 = arith.constant 0 : index
    %41 = vector.load %arg6[%c0_33, %c0_34] : memref<4x128xf32, #tpu.memory_space<vmem>>, vector<4x128xf32>
    tpu.vector_store %arg6[%c0_33, %c0_34], %40 {strides = array<i32>} : memref<4x128xf32, #tpu.memory_space<vmem>>, vector<4x128xf32>,
    return
  }
  func.func @transform_0(%arg0: i32) -> (i32, i32) {
    %c0_i32 = arith.constant 0 : i32
    %c0_i32_0 = arith.constant 0 : i32
    %c0_i32_1 = arith.constant 0 : i32
    return %c0_i32, %c0_i32_0 : i32, i32
  }
  func.func @transform_1(%arg0: i32) -> (i32, i32, i32) {
    %c0_i32 = arith.constant 0 : i32
    %c0_i32_0 = arith.constant 0 : i32
    %c0_i32_1 = arith.constant 0 : i32
    %c0_i32_2 = arith.constant 0 : i32
    return %c0_i32, %c0_i32_0, %c0_i32_1 : i32, i32, i32
  }
  func.func @transform_2(%arg0: i32) -> (i32, i32) {
    %c0_i32 = arith.constant 0 : i32
    %c0_i32_0 = arith.constant 0 : i32
    %c0_i32_1 = arith.constant 0 : i32
    return %c0_i32, %c0_i32_0 : i32, i32
  }
  func.func @transform_3(%arg0: i32) -> (i32, i32) {
    %c0_i32 = arith.constant 0 : i32
    %c0_i32_0 = arith.constant 0 : i32
    %c0_i32_1 = arith.constant 0 : i32
    return %c0_i32, %c0_i32_0 : i32, i32
  }
  func.func @transform_4(%arg0: i32) -> (i32, i32) {
    %c0_i32 = arith.constant 0 : i32
    %c0_i32_0 = arith.constant 0 : i32
    %c0_i32_1 = arith.constant 0 : i32
    return %c0_i32, %c0_i32_0 : i32, i32
  }
  func.func @transform_5(%arg0: i32) -> (i32, i32) {
    %c0_i32 = arith.constant 0 : i32
    %c0_i32_0 = arith.constant 0 : i32
    %c0_i32_1 = arith.constant 0 : i32
    return %c0_i32, %c0_i32_0 : i32, i32
  }
}

</mosaic_0001>

<llo_original>
// kernel: seqnet_forward.1
$region0: #{seqnet_forward.1}
  #allocation0 [shape = 'u32[]', space=smem, size = 0x4, offset = 0x4, fixed_abs, tag = 'smem constant byte address 0x4 - core index']
  #allocation1 [shape = 'u32[144,128]{1,0:T(1,128)}', space=vmem, size = 0x12000, scoped, tag = 'internal scratch']
  #allocation2 [shape = 'f32[4,128]{1,0:T(4,128)}', space=vmem, size = 0x800, scoped, tag = 'scratch operand']
  %s0 = inlined_call_operand.vmem [shape: bf16[1152,12], index: 0, kind: input, shape index: {}]
  %s1 = inlined_call_operand.vmem [shape: bf16[3,12,128], index: 1, kind: input, shape index: {}]
  %s2 = inlined_call_operand.vmem [shape: f32[1,128], index: 2, kind: input, shape index: {}]
  %s3 = inlined_call_operand.vmem [shape: f32[128,128], index: 3, kind: input, shape index: {}]
  %s4 = inlined_call_operand.vmem [shape: f32[1,128], index: 4, kind: input, shape index: {}]
  %s5 = inlined_call_operand.vmem [shape: f32[4,128], index: 5, kind: output, shape index: {}]
  %s6 = sld [smem:[#allocation0]]
  $region30: #{seqnet_forward.1} parent=0
    _
  %s8 = ssub.s32 1, %s6
  %s9 = scalar_select 0, %s8, %s6
  // Predicated region
  $region2: #{seqnet_forward.1} parent=0 // pred_check
    _
  $region3: #{seqnet_forward.1} parent=0 // pred_check_branch
    %11 = sbr.rel (0) target = $region5
  $region4: #{seqnet_forward.1} parent=0 // pred_region
    _
  $region5: #{seqnet_forward.1} parent=0 // pred_fallthru
    _
  // Predicated region
  $region6: #{seqnet_forward.1} parent=0 // pred_check
    _
  $region7: #{seqnet_forward.1} parent=0 // pred_check_branch
    %13 = sbr.rel (0) target = $region9
  $region8: #{seqnet_forward.1} parent=0 // pred_region
    _
  $region9: #{seqnet_forward.1} parent=0 // pred_fallthru
    _
  // Predicated region
  $region10: #{seqnet_forward.1} parent=0 // pred_check
    _
  $region11: #{seqnet_forward.1} parent=0 // pred_check_branch
    %15 = sbr.rel (0) target = $region13
  $region12: #{seqnet_forward.1} parent=0 // pred_region
    _
  $region13: #{seqnet_forward.1} parent=0 // pred_fallthru
    _
  // Predicated region
  $region14: #{seqnet_forward.1} parent=0 // pred_check
    _
  $region15: #{seqnet_forward.1} parent=0 // pred_check_branch
    %17 = sbr.rel (0) target = $region17
  $region16: #{seqnet_forward.1} parent=0 // pred_region
    _
  $region17: #{seqnet_forward.1} parent=0 // pred_fallthru
    _
  // Predicated region
  $region18: #{seqnet_forward.1} parent=0 // pred_check
    _
  $region19: #{seqnet_forward.1} parent=0 // pred_check_branch
    %19 = sbr.rel (0) target = $region21
  $region20: #{seqnet_forward.1} parent=0 // pred_region
    _
  $region21: #{seqnet_forward.1} parent=0 // pred_fallthru
    _
  %v21 = vld [vmem:[%s0] sm:$0xf]
  %v22 = vld [vmem:[%s0 + $0x4] sm:$0xf]
  %v23 = vld [vmem:[%s0 + $0x8] sm:$0xf]
  %v24 = vld [vmem:[%s0 + $0xc] sm:$0xf]
  %v25 = vld [vmem:[%s0 + $0x10] sm:$0xf]
  %v26 = vld [vmem:[%s0 + $0x14] sm:$0xf]
  %v27 = vld [vmem:[%s0 + $0x18] sm:$0xf]
  %v28 = vld [vmem:[%s0 + $0x1c] sm:$0xf]
  %v29 = vld [vmem:[%s0 + $0x20] sm:$0xf]
  %v30 = vld [vmem:[%s0 + $0x24] sm:$0xf]
  %v31 = vld [vmem:[%s0 + $0x28] sm:$0xf]
  %v32 = vld [vmem:[%s0 + $0x2c] sm:$0xf]
  %v33 = vld [vmem:[%s0 + $0x30] sm:$0xf]
  %v34 = vld [vmem:[%s0 + $0x34] sm:$0xf]
  %v35 = vld [vmem:[%s0 + $0x38] sm:$0xf]
  %v36 = vld [vmem:[%s0 + $0x3c] sm:$0xf]
  %v37 = vld [vmem:[%s0 + $0x40] sm:$0xf]
  %v38 = vld [vmem:[%s0 + $0x44] sm:$0xf]
  %v39 = vld [vmem:[%s0 + $0x48] sm:$0xf]
  %v40 = vld [vmem:[%s0 + $0x4c] sm:$0xf]
  %v41 = vld [vmem:[%s0 + $0x50] sm:$0xf]
  %v42 = vld [vmem:[%s0 + $0x54] sm:$0xf]
  %v43 = vld [vmem:[%s0 + $0x58] sm:$0xf]
  %v44 = vld [vmem:[%s0 + $0x5c] sm:$0xf]
  %v45 = vld [vmem:[%s0 + $0x60] sm:$0xf]
  %v46 = vld [vmem:[%s0 + $0x64] sm:$0xf]
  %v47 = vld [vmem:[%s0 + $0x68] sm:$0xf]
  %v48 = vld [vmem:[%s0 + $0x6c] sm:$0xf]
  %v49 = vld [vmem:[%s0 + $0x70] sm:$0xf]
  %v50 = vld [vmem:[%s0 + $0x74] sm:$0xf]
  %v51 = vld [vmem:[%s0 + $0x78] sm:$0xf]
  %v52 = vld [vmem:[%s0 + $0x7c] sm:$0xf]
  %v53 = vld [vmem:[%s0 + $0x80] sm:$0xf]
  %v54 = vld [vmem:[%s0 + $0x84] sm:$0xf]
  %v55 = vld [vmem:[%s0 + $0x88] sm:$0xf]
  %v56 = vld [vmem:[%s0 + $0x8c] sm:$0xf]
  %v57 = vld [vmem:[%s0 + $0x90] sm:$0xf]
  %v58 = vld [vmem:[%s0 + $0x94] sm:$0xf]
  %v59 = vld [vmem:[%s0 + $0x98] sm:$0xf]
  %v60 = vld [vmem:[%s0 + $0x9c] sm:$0xf]
  %v61 = vld [vmem:[%s0 + $0xa0] sm:$0xf]
  %v62 = vld [vmem:[%s0 + $0xa4] sm:$0xf]
  %v63 = vld [vmem:[%s0 + $0xa8] sm:$0xf]
  %v64 = vld [vmem:[%s0 + $0xac] sm:$0xf]
  %v65 = vld [vmem:[%s0 + $0xb0] sm:$0xf]
  %v66 = vld [vmem:[%s0 + $0xb4] sm:$0xf]
  %v67 = vld [vmem:[%s0 + $0xb8] sm:$0xf]
  %v68 = vld [vmem:[%s0 + $0xbc] sm:$0xf]
  %v69 = vld [vmem:[%s0 + $0xc0] sm:$0xf]
  %v70 = vld [vmem:[%s0 + $0xc4] sm:$0xf]
  %v71 = vld [vmem:[%s0 + $0xc8] sm:$0xf]
  %v72 = vld [vmem:[%s0 + $0xcc] sm:$0xf]
  %v73 = vld [vmem:[%s0 + $0xd0] sm:$0xf]
  %v74 = vld [vmem:[%s0 + $0xd4] sm:$0xf]
  %v75 = vld [vmem:[%s0 + $0xd8] sm:$0xf]
  %v76 = vld [vmem:[%s0 + $0xdc] sm:$0xf]
  %v77 = vld [vmem:[%s0 + $0xe0] sm:$0xf]
  %v78 = vld [vmem:[%s0 + $0xe4] sm:$0xf]
  %v79 = vld [vmem:[%s0 + $0xe8] sm:$0xf]
  %v80 = vld [vmem:[%s0 + $0xec] sm:$0xf]
  %v81 = vld [vmem:[%s0 + $0xf0] sm:$0xf]
  %v82 = vld [vmem:[%s0 + $0xf4] sm:$0xf]
  %v83 = vld [vmem:[%s0 + $0xf8] sm:$0xf]
  %v84 = vld [vmem:[%s0 + $0xfc] sm:$0xf]
  %v85 = vld [vmem:[%s0 + $0x100] sm:$0xf]
  %v86 = vld [vmem:[%s0 + $0x104] sm:$0xf]
  %v87 = vld [vmem:[%s0 + $0x108] sm:$0xf]
  %v88 = vld [vmem:[%s0 + $0x10c] sm:$0xf]
  %v89 = vld [vmem:[%s0 + $0x110] sm:$0xf]
  %v90 = vld [vmem:[%s0 + $0x114] sm:$0xf]
  %v91 = vld [vmem:[%s0 + $0x118] sm:$0xf]
  %v92 = vld [vmem:[%s0 + $0x11c] sm:$0xf]
  %v93 = vld [vmem:[%s0 + $0x120] sm:$0xf]
  %v94 = vld [vmem:[%s0 + $0x124] sm:$0xf]
  %v95 = vld [vmem:[%s0 + $0x128] sm:$0xf]
  %v96 = vld [vmem:[%s0 + $0x12c] sm:$0xf]
  %v97 = vld [vmem:[%s0 + $0x130] sm:$0xf]
  %v98 = vld [vmem:[%s0 + $0x134] sm:$0xf]
  %v99 = vld [vmem:[%s0 + $0x138] sm:$0xf]
  %v100 = vld [vmem:[%s0 + $0x13c] sm:$0xf]
  %v101 = vld [vmem:[%s0 + $0x140] sm:$0xf]
  %v102 = vld [vmem:[%s0 + $0x144] sm:$0xf]
  %v103 = vld [vmem:[%s0 + $0x148] sm:$0xf]
  %v104 = vld [vmem:[%s0 + $0x14c] sm:$0xf]
  %v105 = vld [vmem:[%s0 + $0x150] sm:$0xf]
  %v106 = vld [vmem:[%s0 + $0x154] sm:$0xf]
  %v107 = vld [vmem:[%s0 + $0x158] sm:$0xf]
  %v108 = vld [vmem:[%s0 + $0x15c] sm:$0xf]
  %v109 = vld [vmem:[%s0 + $0x160] sm:$0xf]
  %v110 = vld [vmem:[%s0 + $0x164] sm:$0xf]
  %v111 = vld [vmem:[%s0 + $0x168] sm:$0xf]
  %v112 = vld [vmem:[%s0 + $0x16c] sm:$0xf]
  %v113 = vld [vmem:[%s0 + $0x170] sm:$0xf]
  %v114 = vld [vmem:[%s0 + $0x174] sm:$0xf]
  %v115 = vld [vmem:[%s0 + $0x178] sm:$0xf]
  %v116 = vld [vmem:[%s0 + $0x17c] sm:$0xf]
  %v117 = vld [vmem:[%s0 + $0x180] sm:$0xf]
  %v118 = vld [vmem:[%s0 + $0x184] sm:$0xf]
  %v119 = vld [vmem:[%s0 + $0x188] sm:$0xf]
  %v120 = vld [vmem:[%s0 + $0x18c] sm:$0xf]
  %v121 = vld [vmem:[%s0 + $0x190] sm:$0xf]
  %v122 = vld [vmem:[%s0 + $0x194] sm:$0xf]
  %v123 = vld [vmem:[%s0 + $0x198] sm:$0xf]
  %v124 = vld [vmem:[%s0 + $0x19c] sm:$0xf]
  %v125 = vld [vmem:[%s0 + $0x1a0] sm:$0xf]
  %v126 = vld [vmem:[%s0 + $0x1a4] sm:$0xf]
  %v127 = vld [vmem:[%s0 + $0x1a8] sm:$0xf]
  %v128 = vld [vmem:[%s0 + $0x1ac] sm:$0xf]
  %v129 = vld [vmem:[%s0 + $0x1b0] sm:$0xf]
  %v130 = vld [vmem:[%s0 + $0x1b4] sm:$0xf]
  %v131 = vld [vmem:[%s0 + $0x1b8] sm:$0xf]
  %v132 = vld [vmem:[%s0 + $0x1bc] sm:$0xf]
  %v133 = vld [vmem:[%s0 + $0x1c0] sm:$0xf]
  %v134 = vld [vmem:[%s0 + $0x1c4] sm:$0xf]
  %v135 = vld [vmem:[%s0 + $0x1c8] sm:$0xf]
  %v136 = vld [vmem:[%s0 + $0x1cc] sm:$0xf]
  %v137 = vld [vmem:[%s0 + $0x1d0] sm:$0xf]
  %v138 = vld [vmem:[%s0 + $0x1d4] sm:$0xf]
  %v139 = vld [vmem:[%s0 + $0x1d8] sm:$0xf]
  %v140 = vld [vmem:[%s0 + $0x1dc] sm:$0xf]
  %v141 = vld [vmem:[%s0 + $0x1e0] sm:$0xf]
  %v142 = vld [vmem:[%s0 + $0x1e4] sm:$0xf]
  %v143 = vld [vmem:[%s0 + $0x1e8] sm:$0xf]
  %v144 = vld [vmem:[%s0 + $0x1ec] sm:$0xf]
  %v145 = vld [vmem:[%s0 + $0x1f0] sm:$0xf]
  %v146 = vld [vmem:[%s0 + $0x1f4] sm:$0xf]
  %v147 = vld [vmem:[%s0 + $0x1f8] sm:$0xf]
  %v148 = vld [vmem:[%s0 + $0x1fc] sm:$0xf]
  %v149 = vld [vmem:[%s0 + $0x200] sm:$0xf]
  %v150 = vld [vmem:[%s0 + $0x204] sm:$0xf]
  %v151 = vld [vmem:[%s0 + $0x208] sm:$0xf]
  %v152 = vld [vmem:[%s0 + $0x20c] sm:$0xf]
  %v153 = vld [vmem:[%s0 + $0x210] sm:$0xf]
  %v154 = vld [vmem:[%s0 + $0x214] sm:$0xf]
  %v155 = vld [vmem:[%s0 + $0x218] sm:$0xf]
  %v156 = vld [vmem:[%s0 + $0x21c] sm:$0xf]
  %v157 = vld [vmem:[%s0 + $0x220] sm:$0xf]
  %v158 = vld [vmem:[%s0 + $0x224] sm:$0xf]
  %v159 = vld [vmem:[%s0 + $0x228] sm:$0xf]
  %v160 = vld [vmem:[%s0 + $0x22c] sm:$0xf]
  %v161 = vld [vmem:[%s1] sm:$0xf]
  %v162 = vld [vmem:[%s1 + $0x4] sm:$0x3]
  %v163 = vld [vmem:[%s0 + $0x230] sm:$0xf]
  %v164 = vld [vmem:[%s0 + $0x234] sm:$0xf]
  %s165 = scalar_lea.vmem %s1, 8
  %v166 = vld [vmem:[%s165] sm:$0xf]
  %v167 = vld [vmem:[%s165 + $0x4] sm:$0x3]
  %v308 = vunpack.c.l.b16 %v23
  %v309 = vunpack.c.l.b16 %v24
  %v310 = vunpack.c.l.b16 %v25
  %v311 = vunpack.c.l.b16 %v26
  %v312 = vunpack.c.l.b16 %v27
  %v313 = vunpack.c.l.b16 %v28
  %v314 = vunpack.c.l.b16 %v29
  %v315 = vunpack.c.l.b16 %v30
  %v316 = vunpack.c.l.b16 %v31
  %v317 = vunpack.c.l.b16 %v32
  %v318 = vunpack.c.l.b16 %v33
  %v319 = vunpack.c.l.b16 %v34
  %v320 = vunpack.c.l.b16 %v35
  %v321 = vunpack.c.l.b16 %v36
  %v322 = vunpack.c.l.b16 %v37
  %v323 = vunpack.c.l.b16 %v38
  %v324 = vunpack.c.l.b16 %v39
  %v325 = vunpack.c.l.b16 %v40
  %v326 = vunpack.c.l.b16 %v41
  %v327 = vunpack.c.l.b16 %v42
  %v328 = vunpack.c.l.b16 %v43
  %v329 = vunpack.c.l.b16 %v44
  %v330 = vunpack.c.l.b16 %v45
  %v331 = vunpack.c.l.b16 %v46
  %v332 = vunpack.c.l.b16 %v47
  %v333 = vunpack.c.l.b16 %v48
  %v334 = vunpack.c.l.b16 %v49
  %v335 = vunpack.c.l.b16 %v50
  %v336 = vunpack.c.l.b16 %v51
  %v337 = vunpack.c.l.b16 %v52
  %v338 = vunpack.c.l.b16 %v53
  %v339 = vunpack.c.l.b16 %v54
  %v340 = vunpack.c.l.b16 %v55
  %v341 = vunpack.c.l.b16 %v56
  %v342 = vunpack.c.l.b16 %v57
  %v343 = vunpack.c.l.b16 %v58
  %v344 = vunpack.c.l.b16 %v59
  %v345 = vunpack.c.l.b16 %v60
  %v346 = vunpack.c.l.b16 %v61
  %v347 = vunpack.c.l.b16 %v62
  %v348 = vunpack.c.l.b16 %v63
  %v349 = vunpack.c.l.b16 %v64
  %v350 = vunpack.c.l.b16 %v65
  %v351 = vunpack.c.l.b16 %v66
  %v352 = vunpack.c.l.b16 %v67
  %v353 = vunpack.c.l.b16 %v68
  %v354 = vunpack.c.l.b16 %v69
  %v355 = vunpack.c.l.b16 %v70
  %v356 = vunpack.c.l.b16 %v71
  %v357 = vunpack.c.l.b16 %v72
  %v358 = vunpack.c.l.b16 %v73
  %v359 = vunpack.c.l.b16 %v74
  %v360 = vunpack.c.l.b16 %v75
  %v361 = vunpack.c.l.b16 %v76
  %v362 = vunpack.c.l.b16 %v77
  %v363 = vunpack.c.l.b16 %v78
  %v364 = vunpack.c.l.b16 %v79
  %v365 = vunpack.c.l.b16 %v80
  %v366 = vunpack.c.l.b16 %v81
  %v367 = vunpack.c.l.b16 %v82
  %v368 = vunpack.c.l.b16 %v83
  %v369 = vunpack.c.l.b16 %v84
  %v370 = vunpack.c.l.b16 %v85
  %v371 = vunpack.c.l.b16 %v86
  %v372 = vunpack.c.l.b16 %v87
  %v373 = vunpack.c.l.b16 %v88
  %v374 = vunpack.c.l.b16 %v89
  %v375 = vunpack.c.l.b16 %v90
  %v376 = vunpack.c.l.b16 %v91
  %v377 = vunpack.c.l.b16 %v92
  %v378 = vunpack.c.l.b16 %v93
  %v379 = vunpack.c.l.b16 %v94
  %v380 = vunpack.c.l.b16 %v95
  %v381 = vunpack.c.l.b16 %v96
  %v382 = vunpack.c.l.b16 %v97
  %v383 = vunpack.c.l.b16 %v98
  %v384 = vunpack.c.l.b16 %v99
  %v385 = vunpack.c.l.b16 %v100
  %v386 = vunpack.c.l.b16 %v101
  %v387 = vunpack.c.l.b16 %v102
  %v388 = vunpack.c.l.b16 %v103
  %v389 = vunpack.c.l.b16 %v104
  %v390 = vunpack.c.l.b16 %v105
  %v391 = vunpack.c.l.b16 %v106
  %v392 = vunpack.c.l.b16 %v107
  %v393 = vunpack.c.l.b16 %v108
  %v394 = vunpack.c.l.b16 %v109
  %v395 = vunpack.c.l.b16 %v110
  %v396 = vunpack.c.l.b16 %v111
  %v397 = vunpack.c.l.b16 %v112
  %v398 = vunpack.c.l.b16 %v113
  %v399 = vunpack.c.l.b16 %v114
  %v400 = vunpack.c.l.b16 %v115
  %v401 = vunpack.c.l.b16 %v116
  %v402 = vunpack.c.l.b16 %v117
  %v403 = vunpack.c.l.b16 %v118
  %v404 = vunpack.c.l.b16 %v119
  %v405 = vunpack.c.l.b16 %v120
  %v406 = vunpack.c.l.b16 %v121
  %v407 = vunpack.c.l.b16 %v122
  %v408 = vunpack.c.l.b16 %v123
  %v409 = vunpack.c.l.b16 %v124
  %v410 = vunpack.c.l.b16 %v125
  %v411 = vunpack.c.l.b16 %v126
  %v412 = vunpack.c.l.b16 %v127
  %v413 = vunpack.c.l.b16 %v128
  %v414 = vunpack.c.l.b16 %v129
  %v415 = vunpack.c.l.b16 %v130
  %v416 = vunpack.c.l.b16 %v131
  %v417 = vunpack.c.l.b16 %v132
  %v418 = vunpack.c.l.b16 %v133
  %v419 = vunpack.c.l.b16 %v134
  %v420 = vunpack.c.l.b16 %v135
  %v421 = vunpack.c.l.b16 %v136
  %v422 = vunpack.c.l.b16 %v137
  %v423 = vunpack.c.l.b16 %v138
  %v424 = vunpack.c.l.b16 %v139
  %v425 = vunpack.c.l.b16 %v140
  %v426 = vunpack.c.l.b16 %v141
  %v427 = vunpack.c.l.b16 %v142
  %v428 = vunpack.c.l.b16 %v143
  %v429 = vunpack.c.l.b16 %v144
  %v430 = vunpack.c.l.b16 %v145
  %v431 = vunpack.c.l.b16 %v146
  %v432 = vunpack.c.l.b16 %v147
  %v433 = vunpack.c.l.b16 %v148
  %v434 = vunpack.c.l.b16 %v149
  %v435 = vunpack.c.l.b16 %v150
  %v436 = vunpack.c.l.b16 %v151
  %v437 = vunpack.c.l.b16 %v152
  %v438 = vunpack.c.l.b16 %v153
  %v439 = vunpack.c.l.b16 %v154
  %v440 = vunpack.c.l.b16 %v155
  %v441 = vunpack.c.l.b16 %v156
  %v442 = vunpack.c.l.b16 %v157
  %v443 = vunpack.c.l.b16 %v158
  %v444 = vunpack.c.l.b16 %v159
  %v445 = vunpack.c.l.b16 %v160
  %v446 = vunpack.c.l.b16 %v163
  %v447 = vunpack.c.l.b16 %v164
  %v448 = vpack.c.b16 %v309, %v308
  %v449 = vpack.c.b16 %v311, %v310
  %v450 = vpack.c.b16 %v313, %v312
  %v451 = vpack.c.b16 %v315, %v314
  %v452 = vpack.c.b16 %v317, %v316
  %v453 = vpack.c.b16 %v319, %v318
  %v454 = vpack.c.b16 %v321, %v320
  %v455 = vpack.c.b16 %v323, %v322
  %v456 = vpack.c.b16 %v325, %v324
  %v457 = vpack.c.b16 %v327, %v326
  %v458 = vpack.c.b16 %v329, %v328
  %v459 = vpack.c.b16 %v331, %v330
  %v460 = vpack.c.b16 %v333, %v332
  %v461 = vpack.c.b16 %v335, %v334
  %v462 = vpack.c.b16 %v337, %v336
  %v463 = vpack.c.b16 %v339, %v338
  %v464 = vpack.c.b16 %v341, %v340
  %v465 = vpack.c.b16 %v343, %v342
  %v466 = vpack.c.b16 %v345, %v344
  %v467 = vpack.c.b16 %v347, %v346
  %v468 = vpack.c.b16 %v349, %v348
  %v469 = vpack.c.b16 %v351, %v350
  %v470 = vpack.c.b16 %v353, %v352
  %v471 = vpack.c.b16 %v355, %v354
  %v472 = vpack.c.b16 %v357, %v356
  %v473 = vpack.c.b16 %v359, %v358
  %v474 = vpack.c.b16 %v361, %v360
  %v475 = vpack.c.b16 %v363, %v362
  %v476 = vpack.c.b16 %v365, %v364
  %v477 = vpack.c.b16 %v367, %v366
  %v478 = vpack.c.b16 %v369, %v368
  %v479 = vpack.c.b16 %v371, %v370
  %v480 = vpack.c.b16 %v373, %v372
  %v481 = vpack.c.b16 %v375, %v374
  %v482 = vpack.c.b16 %v377, %v376
  %v483 = vpack.c.b16 %v379, %v378
  %v484 = vpack.c.b16 %v381, %v380
  %v485 = vpack.c.b16 %v383, %v382
  %v486 = vpack.c.b16 %v385, %v384
  %v487 = vpack.c.b16 %v387, %v386
  %v488 = vpack.c.b16 %v389, %v388
  %v489 = vpack.c.b16 %v391, %v390
  %v490 = vpack.c.b16 %v393, %v392
  %v491 = vpack.c.b16 %v395, %v394
  %v492 = vpack.c.b16 %v397, %v396
  %v493 = vpack.c.b16 %v399, %v398
  %v494 = vpack.c.b16 %v401, %v400
  %v495 = vpack.c.b16 %v403, %v402
  %v496 = vpack.c.b16 %v405, %v404
  %v497 = vpack.c.b16 %v407, %v406
  %v498 = vpack.c.b16 %v409, %v408
  %v499 = vpack.c.b16 %v411, %v410
  %v500 = vpack.c.b16 %v413, %v412
  %v501 = vpack.c.b16 %v415, %v414
  %v502 = vpack.c.b16 %v417, %v416
  %v503 = vpack.c.b16 %v419, %v418
  %v504 = vpack.c.b16 %v421, %v420
  %v505 = vpack.c.b16 %v423, %v422
  %v506 = vpack.c.b16 %v425, %v424
  %v507 = vpack.c.b16 %v427, %v426
  %v508 = vpack.c.b16 %v429, %v428
  %v509 = vpack.c.b16 %v431, %v430
  %v510 = vpack.c.b16 %v433, %v432
  %v511 = vpack.c.b16 %v435, %v434
  %v512 = vpack.c.b16 %v437, %v436
  %v513 = vpack.c.b16 %v439, %v438
  %v514 = vpack.c.b16 %v441, %v440
  %v515 = vpack.c.b16 %v443, %v442
  %v516 = vpack.c.b16 %v445, %v444
  %v517 = vpack.c.b16 %v447, %v446
  %v520 = vunpack.c.l.b16 %v166
  %v521 = vunpack.c.l.b16 %v167
  %v522 = vpack.c.b16 %v521, %v520
  %vm523 = vcmask 97280
  %v525 = vsel %vm523, %v448, 0
  %v528 = vsel %vm523, %v449, 0
  %v531 = vsel %vm523, %v450, 0
  %v534 = vsel %vm523, %v451, 0
  %v537 = vsel %vm523, %v452, 0
  %v540 = vsel %vm523, %v453, 0
  %v543 = vsel %vm523, %v454, 0
  %v546 = vsel %vm523, %v455, 0
  %v549 = vsel %vm523, %v456, 0
  %v552 = vsel %vm523, %v457, 0
  %v555 = vsel %vm523, %v458, 0
  %v558 = vsel %vm523, %v459, 0
  %v561 = vsel %vm523, %v460, 0
  %v564 = vsel %vm523, %v461, 0
  %v567 = vsel %vm523, %v462, 0
  %v570 = vsel %vm523, %v463, 0
  %v573 = vsel %vm523, %v464, 0
  %v576 = vsel %vm523, %v465, 0
  %v579 = vsel %vm523, %v466, 0
  %v582 = vsel %vm523, %v467, 0
  %v585 = vsel %vm523, %v468, 0
  %v588 = vsel %vm523, %v469, 0
  %v591 = vsel %vm523, %v470, 0
  %v594 = vsel %vm523, %v471, 0
  %v597 = vsel %vm523, %v472, 0
  %v600 = vsel %vm523, %v473, 0
  %v603 = vsel %vm523, %v474, 0
  %v606 = vsel %vm523, %v475, 0
  %v609 = vsel %vm523, %v476, 0
  %v612 = vsel %vm523, %v477, 0
  %v615 = vsel %vm523, %v478, 0
  %v618 = vsel %vm523, %v479, 0
  %v621 = vsel %vm523, %v480, 0
  %v624 = vsel %vm523, %v481, 0
  %v627 = vsel %vm523, %v482, 0
  %v630 = vsel %vm523, %v483, 0
  %v633 = vsel %vm523, %v484, 0
  %v636 = vsel %vm523, %v485, 0
  %v639 = vsel %vm523, %v486, 0
  %v642 = vsel %vm523, %v487, 0
  %v645 = vsel %vm523, %v488, 0
  %v648 = vsel %vm523, %v489, 0
  %v651 = vsel %vm523, %v490, 0
  %v654 = vsel %vm523, %v491, 0
  %v657 = vsel %vm523, %v492, 0
  %v660 = vsel %vm523, %v493, 0
  %v663 = vsel %vm523, %v494, 0
  %v666 = vsel %vm523, %v495, 0
  %v669 = vsel %vm523, %v496, 0
  %v672 = vsel %vm523, %v497, 0
  %v675 = vsel %vm523, %v498, 0
  %v678 = vsel %vm523, %v499, 0
  %v681 = vsel %vm523, %v500, 0
  %v684 = vsel %vm523, %v501, 0
  %v687 = vsel %vm523, %v502, 0
  %v690 = vsel %vm523, %v503, 0
  %v693 = vsel %vm523, %v504, 0
  %v696 = vsel %vm523, %v505, 0
  %v699 = vsel %vm523, %v506, 0
  %v702 = vsel %vm523, %v507, 0
  %v705 = vsel %vm523, %v508, 0
  %v708 = vsel %vm523, %v509, 0
  %v711 = vsel %vm523, %v510, 0
  %v714 = vsel %vm523, %v511, 0
  %v717 = vsel %vm523, %v512, 0
  %v720 = vsel %vm523, %v513, 0
  %v723 = vsel %vm523, %v514, 0
  %v726 = vsel %vm523, %v515, 0
  %v729 = vsel %vm523, %v516, 0
  %v732 = vsel %vm523, %v517, 0
  %vm734 = vcmask 1045504
  %v736 = vsel %vm734, %v522, 0
  %738 = vmatprep.subr.bf16.mxu0 0
  %739 = vmatpush1.bf16.msra.mxu0 0
  %740 = vmatprep.subr.bf16.mxu0 0
  %741 = vmatpush1.bf16.msra.mxu0 0
  %742 = vmatprep.subr.bf16.mxu0 0
  %743 = vmatpush1.bf16.msra.mxu0 0
  %744 = vmatprep.subr.bf16.mxu0 0
  %745 = vmatpush1.bf16.msra.mxu0 0
  %746 = vmatprep.subr.bf16.mxu0 0
  %747 = vmatpush1.bf16.msra.mxu0 0
  %748 = vmatprep.subr.bf16.mxu0 0
  %749 = vmatpush1.bf16.msra.mxu0 0
  %750 = vmatprep.subr.bf16.mxu0 0
  %751 = vmatpush1.bf16.msra.mxu0 0
  %752 = vmatprep.subr.bf16.mxu0 0
  %753 = vmatpush1.bf16.msra.mxu0 %v736
  %754 = vmatprep.subr.bf16.mxu0 0
  %755 = vmatpush2.bf16.msra.mxu0 0
  %756 = vmatprep.subr.bf16.mxu0 0
  %757 = vmatpush2.bf16.msra.mxu0 0
  %758 = vmatprep.subr.bf16.mxu0 0
  %759 = vmatpush2.bf16.msra.mxu0 0
  %760 = vmatprep.subr.bf16.mxu0 0
  %761 = vmatpush2.bf16.msra.mxu0 0
  %762 = vmatprep.subr.bf16.mxu0 0
  %763 = vmatpush2.bf16.msra.mxu0 0
  %764 = vmatprep.subr.bf16.mxu0 0
  %765 = vmatpush2.bf16.msra.mxu0 0
  %766 = vmatprep.subr.bf16.mxu0 0
  %767 = vmatpush2.bf16.msra.mxu0 0
  %768 = vmatprep.subr.bf16.mxu0 0
  %769 = vmatpush2.bf16.msra.mxu0 0
  %770 = vmatprep.mubr.bf16.mxu0 0
  %771 = vmatmul.mubr.bf16.gmra.mxu0 %v525
  %v772 = vpop.f32.mrf.mxu0
  %v773 = vadd.f32 0.0, %v772
  %v774 = vpop.f32.mrf.mxu0
  %v775 = vpop.f32.mrf.mxu0
  %v776 = vadd.f32 0.0, %v775
  %v777 = vpop.f32.mrf.mxu0
  %778 = vmatprep.mubr.bf16.mxu0 0
  %779 = vmatmul.mubr.bf16.gmra.mxu0 %v528
  %v780 = vpop.f32.mrf.mxu0
  %v781 = vadd.f32 0.0, %v780
  %v782 = vpop.f32.mrf.mxu0
  %v783 = vpop.f32.mrf.mxu0
  %v784 = vadd.f32 0.0, %v783
  %v785 = vpop.f32.mrf.mxu0
  %786 = vmatprep.mubr.bf16.mxu0 0
  %787 = vmatmul.mubr.bf16.gmra.mxu0 %v531
  %v788 = vpop.f32.mrf.mxu0
  %v789 = vadd.f32 0.0, %v788
  %v790 = vpop.f32.mrf.mxu0
  %v791 = vpop.f32.mrf.mxu0
  %v792 = vadd.f32 0.0, %v791
  %v793 = vpop.f32.mrf.mxu0
  %794 = vmatprep.mubr.bf16.mxu0 0
  %795 = vmatmul.mubr.bf16.gmra.mxu0 %v534
  %v796 = vpop.f32.mrf.mxu0
  %v797 = vadd.f32 0.0, %v796
  %v798 = vpop.f32.mrf.mxu0
  %v799 = vpop.f32.mrf.mxu0
  %v800 = vadd.f32 0.0, %v799
  %v801 = vpop.f32.mrf.mxu0
  %802 = vmatprep.mubr.bf16.mxu0 0
  %803 = vmatmul.mubr.bf16.gmra.mxu0 %v537
  %v804 = vpop.f32.mrf.mxu0
  %v805 = vadd.f32 0.0, %v804
  %v806 = vpop.f32.mrf.mxu0
  %v807 = vpop.f32.mrf.mxu0
  %v808 = vadd.f32 0.0, %v807
  %v809 = vpop.f32.mrf.mxu0
  %810 = vmatprep.mubr.bf16.mxu0 0
  %811 = vmatmul.mubr.bf16.gmra.mxu0 %v540
  %v812 = vpop.f32.mrf.mxu0
  %v813 = vadd.f32 0.0, %v812
  %v814 = vpop.f32.mrf.mxu0
  %v815 = vpop.f32.mrf.mxu0
  %v816 = vadd.f32 0.0, %v815
  %v817 = vpop.f32.mrf.mxu0
  %818 = vmatprep.mubr.bf16.mxu0 0
  %819 = vmatmul.mubr.bf16.gmra.mxu0 %v543
  %v820 = vpop.f32.mrf.mxu0
  %v821 = vadd.f32 0.0, %v820
  %v822 = vpop.f32.mrf.mxu0
  %v823 = vpop.f32.mrf.mxu0
  %v824 = vadd.f32 0.0, %v823
  %v825 = vpop.f32.mrf.mxu0
  %826 = vmatprep.mubr.bf16.mxu0 0
  %827 = vmatmul.mubr.bf16.gmra.mxu0 %v546
  %v828 = vpop.f32.mrf.mxu0
  %v829 = vadd.f32 0.0, %v828
  %v830 = vpop.f32.mrf.mxu0
  %v831 = vpop.f32.mrf.mxu0
  %v832 = vadd.f32 0.0, %v831
  %v833 = vpop.f32.mrf.mxu0
  %834 = vmatprep.mubr.bf16.mxu0 0
  %835 = vmatmul.mubr.bf16.gmra.mxu0 %v549
  %v836 = vpop.f32.mrf.mxu0
  %v837 = vadd.f32 0.0, %v836
  %v838 = vpop.f32.mrf.mxu0
  %v839 = vpop.f32.mrf.mxu0
  %v840 = vadd.f32 0.0, %v839
  %v841 = vpop.f32.mrf.mxu0
  %842 = vmatprep.mubr.bf16.mxu0 0
  %843 = vmatmul.mubr.bf16.gmra.mxu0 %v552
  %v844 = vpop.f32.mrf.mxu0
  %v845 = vadd.f32 0.0, %v844
  %v846 = vpop.f32.mrf.mxu0
  %v847 = vpop.f32.mrf.mxu0
  %v848 = vadd.f32 0.0, %v847
  %v849 = vpop.f32.mrf.mxu0
  %850 = vmatprep.mubr.bf16.mxu0 0
  %851 = vmatmul.mubr.bf16.gmra.mxu0 %v555
  %v852 = vpop.f32.mrf.mxu0
  %v853 = vadd.f32 0.0, %v852
  %v854 = vpop.f32.mrf.mxu0
  %v855 = vpop.f32.mrf.mxu0
  %v856 = vadd.f32 0.0, %v855
  %v857 = vpop.f32.mrf.mxu0
  %858 = vmatprep.mubr.bf16.mxu0 0
  %859 = vmatmul.mubr.bf16.gmra.mxu0 %v558
  %v860 = vpop.f32.mrf.mxu0
  %v861 = vadd.f32 0.0, %v860
  %v862 = vpop.f32.mrf.mxu0
  %v863 = vpop.f32.mrf.mxu0
  %v864 = vadd.f32 0.0, %v863
  %v865 = vpop.f32.mrf.mxu0
  %866 = vmatprep.mubr.bf16.mxu0 0
  %867 = vmatmul.mubr.bf16.gmra.mxu0 %v561
  %v868 = vpop.f32.mrf.mxu0
  %v869 = vadd.f32 0.0, %v868
  %v870 = vpop.f32.mrf.mxu0
  %v871 = vpop.f32.mrf.mxu0
  %v872 = vadd.f32 0.0, %v871
  %v873 = vpop.f32.mrf.mxu0
  %874 = vmatprep.mubr.bf16.mxu0 0
  %875 = vmatmul.mubr.bf16.gmra.mxu0 %v564
  %v876 = vpop.f32.mrf.mxu0
  %v877 = vadd.f32 0.0, %v876
  %v878 = vpop.f32.mrf.mxu0
  %v879 = vpop.f32.mrf.mxu0
  %v880 = vadd.f32 0.0, %v879
  %v881 = vpop.f32.mrf.mxu0
  %882 = vmatprep.mubr.bf16.mxu0 0
  %883 = vmatmul.mubr.bf16.gmra.mxu0 %v567
  %v884 = vpop.f32.mrf.mxu0
  %v885 = vadd.f32 0.0, %v884
  %v886 = vpop.f32.mrf.mxu0
  %v887 = vpop.f32.mrf.mxu0
  %v888 = vadd.f32 0.0, %v887
  %v889 = vpop.f32.mrf.mxu0
  %890 = vmatprep.mubr.bf16.mxu0 0
  %891 = vmatmul.mubr.bf16.gmra.mxu0 %v570
  %v892 = vpop.f32.mrf.mxu0
  %v893 = vadd.f32 0.0, %v892
  %v894 = vpop.f32.mrf.mxu0
  %v895 = vpop.f32.mrf.mxu0
  %v896 = vadd.f32 0.0, %v895
  %v897 = vpop.f32.mrf.mxu0
  %898 = vmatprep.mubr.bf16.mxu0 0
  %899 = vmatmul.mubr.bf16.gmra.mxu0 %v573
  %v900 = vpop.f32.mrf.mxu0
  %v901 = vpop.f32.mrf.mxu0
  %v902 = vpop.f32.mrf.mxu0
  %v903 = vpop.f32.mrf.mxu0
  %904 = vmatprep.mubr.bf16.mxu0 0
  %905 = vmatmul.mubr.bf16.gmra.mxu0 %v576
  %v906 = vpop.f32.mrf.mxu0
  %v907 = vpop.f32.mrf.mxu0
  %v908 = vpop.f32.mrf.mxu0
  %v909 = vpop.f32.mrf.mxu0
  %910 = vmatprep.mubr.bf16.mxu0 0
  %911 = vmatmul.mubr.bf16.gmra.mxu0 %v579
  %v912 = vpop.f32.mrf.mxu0
  %v913 = vadd.f32 0.0, %v912
  %v914 = vpop.f32.mrf.mxu0
  %v915 = vpop.f32.mrf.mxu0
  %v916 = vadd.f32 0.0, %v915
  %v917 = vpop.f32.mrf.mxu0
  %918 = vmatprep.mubr.bf16.mxu0 0
  %919 = vmatmul.mubr.bf16.gmra.mxu0 %v582
  %v920 = vpop.f32.mrf.mxu0
  %v921 = vadd.f32 0.0, %v920
  %v922 = vpop.f32.mrf.mxu0
  %v923 = vpop.f32.mrf.mxu0
  %v924 = vadd.f32 0.0, %v923
  %v925 = vpop.f32.mrf.mxu0
  %926 = vmatprep.mubr.bf16.mxu0 0
  %927 = vmatmul.mubr.bf16.gmra.mxu0 %v585
  %v928 = vpop.f32.mrf.mxu0
  %v929 = vadd.f32 0.0, %v928
  %v930 = vpop.f32.mrf.mxu0
  %v931 = vpop.f32.mrf.mxu0
  %v932 = vadd.f32 0.0, %v931
  %v933 = vpop.f32.mrf.mxu0
  %934 = vmatprep.mubr.bf16.mxu0 0
  %935 = vmatmul.mubr.bf16.gmra.mxu0 %v588
  %v936 = vpop.f32.mrf.mxu0
  %v937 = vadd.f32 0.0, %v936
  %v938 = vpop.f32.mrf.mxu0
  %v939 = vpop.f32.mrf.mxu0
  %v940 = vadd.f32 0.0, %v939
  %v941 = vpop.f32.mrf.mxu0
  %942 = vmatprep.mubr.bf16.mxu0 0
  %943 = vmatmul.mubr.bf16.gmra.mxu0 %v591
  %v944 = vpop.f32.mrf.mxu0
  %v945 = vadd.f32 0.0, %v944
  %v946 = vpop.f32.mrf.mxu0
  %v947 = vpop.f32.mrf.mxu0
  %v948 = vadd.f32 0.0, %v947
  %v949 = vpop.f32.mrf.mxu0
  %950 = vmatprep.mubr.bf16.mxu0 0
  %951 = vmatmul.mubr.bf16.gmra.mxu0 %v594
  %v952 = vpop.f32.mrf.mxu0
  %v953 = vadd.f32 0.0, %v952
  %v954 = vpop.f32.mrf.mxu0
  %v955 = vpop.f32.mrf.mxu0
  %v956 = vadd.f32 0.0, %v955
  %v957 = vpop.f32.mrf.mxu0
  %958 = vmatprep.mubr.bf16.mxu0 0
  %959 = vmatmul.mubr.bf16.gmra.mxu0 %v597
  %v960 = vpop.f32.mrf.mxu0
  %v961 = vadd.f32 0.0, %v960
  %v962 = vpop.f32.mrf.mxu0
  %v963 = vpop.f32.mrf.mxu0
  %v964 = vadd.f32 0.0, %v963
  %v965 = vpop.f32.mrf.mxu0
  %966 = vmatprep.mubr.bf16.mxu0 0
  %967 = vmatmul.mubr.bf16.gmra.mxu0 %v600
  %v968 = vpop.f32.mrf.mxu0
  %v969 = vadd.f32 0.0, %v968
  %v970 = vpop.f32.mrf.mxu0
  %v971 = vpop.f32.mrf.mxu0
  %v972 = vadd.f32 0.0, %v971
  %v973 = vpop.f32.mrf.mxu0
  %974 = vmatprep.mubr.bf16.mxu0 0
  %975 = vmatmul.mubr.bf16.gmra.mxu0 %v603
  %v976 = vpop.f32.mrf.mxu0
  %v977 = vadd.f32 0.0, %v976
  %v978 = vpop.f32.mrf.mxu0
  %v979 = vpop.f32.mrf.mxu0
  %v980 = vadd.f32 0.0, %v979
  %v981 = vpop.f32.mrf.mxu0
  %982 = vmatprep.mubr.bf16.mxu0 0
  %983 = vmatmul.mubr.bf16.gmra.mxu0 %v606
  %v984 = vpop.f32.mrf.mxu0
  %v985 = vadd.f32 0.0, %v984
  %v986 = vpop.f32.mrf.mxu0
  %v987 = vpop.f32.mrf.mxu0
  %v988 = vadd.f32 0.0, %v987
  %v989 = vpop.f32.mrf.mxu0
  %990 = vmatprep.mubr.bf16.mxu0 0
  %991 = vmatmul.mubr.bf16.gmra.mxu0 %v609
  %v992 = vpop.f32.mrf.mxu0
  %v993 = vadd.f32 0.0, %v992
  %v994 = vpop.f32.mrf.mxu0
  %v995 = vpop.f32.mrf.mxu0
  %v996 = vadd.f32 0.0, %v995
  %v997 = vpop.f32.mrf.mxu0
  %998 = vmatprep.mubr.bf16.mxu0 0
  %999 = vmatmul.mubr.bf16.gmra.mxu0 %v612
  %v1000 = vpop.f32.mrf.mxu0
  %v1001 = vadd.f32 0.0, %v1000
  %v1002 = vpop.f32.mrf.mxu0
  %v1003 = vpop.f32.mrf.mxu0
  %v1004 = vadd.f32 0.0, %v1003
  %v1005 = vpop.f32.mrf.mxu0
  %1006 = vmatprep.mubr.bf16.mxu0 0
  %1007 = vmatmul.mubr.bf16.gmra.mxu0 %v615
  %v1008 = vpop.f32.mrf.mxu0
  %v1009 = vadd.f32 0.0, %v1008
  %v1010 = vpop.f32.mrf.mxu0
  %v1011 = vpop.f32.mrf.mxu0
  %v1012 = vadd.f32 0.0, %v1011
  %v1013 = vpop.f32.mrf.mxu0
  %1014 = vmatprep.mubr.bf16.mxu0 0
  %1015 = vmatmul.mubr.bf16.gmra.mxu0 %v618
  %v1016 = vpop.f32.mrf.mxu0
  %v1017 = vadd.f32 0.0, %v1016
  %v1018 = vpop.f32.mrf.mxu0
  %v1019 = vpop.f32.mrf.mxu0
  %v1020 = vadd.f32 0.0, %v1019
  %v1021 = vpop.f32.mrf.mxu0
  %1022 = vmatprep.mubr.bf16.mxu0 0
  %1023 = vmatmul.mubr.bf16.gmra.mxu0 %v621
  %v1024 = vpop.f32.mrf.mxu0
  %v1025 = vadd.f32 0.0, %v1024
  %v1026 = vpop.f32.mrf.mxu0
  %v1027 = vpop.f32.mrf.mxu0
  %v1028 = vadd.f32 0.0, %v1027
  %v1029 = vpop.f32.mrf.mxu0
  %1030 = vmatprep.mubr.bf16.mxu0 0
  %1031 = vmatmul.mubr.bf16.gmra.mxu0 %v624
  %v1032 = vpop.f32.mrf.mxu0
  %v1033 = vadd.f32 0.0, %v1032
  %v1034 = vpop.f32.mrf.mxu0
  %v1035 = vpop.f32.mrf.mxu0
  %v1036 = vadd.f32 0.0, %v1035
  %v1037 = vpop.f32.mrf.mxu0
  %1038 = vmatprep.mubr.bf16.mxu0 0
  %1039 = vmatmul.mubr.bf16.gmra.mxu0 %v627
  %v1040 = vpop.f32.mrf.mxu0
  %v1041 = vpop.f32.mrf.mxu0
  %v1042 = vpop.f32.mrf.mxu0
  %v1043 = vpop.f32.mrf.mxu0
  %1044 = vmatprep.mubr.bf16.mxu0 0
  %1045 = vmatmul.mubr.bf16.gmra.mxu0 %v630
  %v1046 = vpop.f32.mrf.mxu0
  %v1047 = vpop.f32.mrf.mxu0
  %v1048 = vpop.f32.mrf.mxu0
  %v1049 = vpop.f32.mrf.mxu0
  %1050 = vmatprep.mubr.bf16.mxu0 0
  %1051 = vmatmul.mubr.bf16.gmra.mxu0 %v633
  %v1052 = vpop.f32.mrf.mxu0
  %v1053 = vadd.f32 0.0, %v1052
  %v1054 = vpop.f32.mrf.mxu0
  %v1055 = vpop.f32.mrf.mxu0
  %v1056 = vadd.f32 0.0, %v1055
  %v1057 = vpop.f32.mrf.mxu0
  %1058 = vmatprep.mubr.bf16.mxu0 0
  %1059 = vmatmul.mubr.bf16.gmra.mxu0 %v636
  %v1060 = vpop.f32.mrf.mxu0
  %v1061 = vadd.f32 0.0, %v1060
  %v1062 = vpop.f32.mrf.mxu0
  %v1063 = vpop.f32.mrf.mxu0
  %v1064 = vadd.f32 0.0, %v1063
  %v1065 = vpop.f32.mrf.mxu0
  %1066 = vmatprep.mubr.bf16.mxu0 0
  %1067 = vmatmul.mubr.bf16.gmra.mxu0 %v639
  %v1068 = vpop.f32.mrf.mxu0
  %v1069 = vadd.f32 0.0, %v1068
  %v1070 = vpop.f32.mrf.mxu0
  %v1071 = vpop.f32.mrf.mxu0
  %v1072 = vadd.f32 0.0, %v1071
  %v1073 = vpop.f32.mrf.mxu0
  %1074 = vmatprep.mubr.bf16.mxu0 0
  %1075 = vmatmul.mubr.bf16.gmra.mxu0 %v642
  %v1076 = vpop.f32.mrf.mxu0
  %v1077 = vadd.f32 0.0, %v1076
  %v1078 = vpop.f32.mrf.mxu0
  %v1079 = vpop.f32.mrf.mxu0
  %v1080 = vadd.f32 0.0, %v1079
  %v1081 = vpop.f32.mrf.mxu0
  %1082 = vmatprep.mubr.bf16.mxu0 0
  %1083 = vmatmul.mubr.bf16.gmra.mxu0 %v645
  %v1084 = vpop.f32.mrf.mxu0
  %v1085 = vadd.f32 0.0, %v1084
  %v1086 = vpop.f32.mrf.mxu0
  %v1087 = vpop.f32.mrf.mxu0
  %v1088 = vadd.f32 0.0, %v1087
  %v1089 = vpop.f32.mrf.mxu0
  %1090 = vmatprep.mubr.bf16.mxu0 0
  %1091 = vmatmul.mubr.bf16.gmra.mxu0 %v648
  %v1092 = vpop.f32.mrf.mxu0
  %v1093 = vadd.f32 0.0, %v1092
  %v1094 = vpop.f32.mrf.mxu0
  %v1095 = vpop.f32.mrf.mxu0
  %v1096 = vadd.f32 0.0, %v1095
  %v1097 = vpop.f32.mrf.mxu0
  %1098 = vmatprep.mubr.bf16.mxu0 0
  %1099 = vmatmul.mubr.bf16.gmra.mxu0 %v651
  %v1100 = vpop.f32.mrf.mxu0
  %v1101 = vadd.f32 0.0, %v1100
  %v1102 = vpop.f32.mrf.mxu0
  %v1103 = vpop.f32.mrf.mxu0
  %v1104 = vadd.f32 0.0, %v1103
  %v1105 = vpop.f32.mrf.mxu0
  %1106 = vmatprep.mubr.bf16.mxu0 0
  %1107 = vmatmul.mubr.bf16.gmra.mxu0 %v654
  %v1108 = vpop.f32.mrf.mxu0
  %v1109 = vadd.f32 0.0, %v1108
  %v1110 = vpop.f32.mrf.mxu0
  %v1111 = vpop.f32.mrf.mxu0
  %v1112 = vadd.f32 0.0, %v1111
  %v1113 = vpop.f32.mrf.mxu0
  %1114 = vmatprep.mubr.bf16.mxu0 0
  %1115 = vmatmul.mubr.bf16.gmra.mxu0 %v657
  %v1116 = vpop.f32.mrf.mxu0
  %v1117 = vadd.f32 0.0, %v1116
  %v1118 = vpop.f32.mrf.mxu0
  %v1119 = vpop.f32.mrf.mxu0
  %v1120 = vadd.f32 0.0, %v1119
  %v1121 = vpop.f32.mrf.mxu0
  %1122 = vmatprep.mubr.bf16.mxu0 0
  %1123 = vmatmul.mubr.bf16.gmra.mxu0 %v660
  %v1124 = vpop.f32.mrf.mxu0
  %v1125 = vadd.f32 0.0, %v1124
  %v1126 = vpop.f32.mrf.mxu0
  %v1127 = vpop.f32.mrf.mxu0
  %v1128 = vadd.f32 0.0, %v1127
  %v1129 = vpop.f32.mrf.mxu0
  %1130 = vmatprep.mubr.bf16.mxu0 0
  %1131 = vmatmul.mubr.bf16.gmra.mxu0 %v663
  %v1132 = vpop.f32.mrf.mxu0
  %v1133 = vadd.f32 0.0, %v1132
  %v1134 = vpop.f32.mrf.mxu0
  %v1135 = vpop.f32.mrf.mxu0
  %v1136 = vadd.f32 0.0, %v1135
  %v1137 = vpop.f32.mrf.mxu0
  %1138 = vmatprep.mubr.bf16.mxu0 0
  %1139 = vmatmul.mubr.bf16.gmra.mxu0 %v666
  %v1140 = vpop.f32.mrf.mxu0
  %v1141 = vadd.f32 0.0, %v1140
  %v1142 = vpop.f32.mrf.mxu0
  %v1143 = vpop.f32.mrf.mxu0
  %v1144 = vadd.f32 0.0, %v1143
  %v1145 = vpop.f32.mrf.mxu0
  %1146 = vmatprep.mubr.bf16.mxu0 0
  %1147 = vmatmul.mubr.bf16.gmra.mxu0 %v669
  %v1148 = vpop.f32.mrf.mxu0
  %v1149 = vadd.f32 0.0, %v1148
  %v1150 = vpop.f32.mrf.mxu0
  %v1151 = vpop.f32.mrf.mxu0
  %v1152 = vadd.f32 0.0, %v1151
  %v1153 = vpop.f32.mrf.mxu0
  %1154 = vmatprep.mubr.bf16.mxu0 0
  %1155 = vmatmul.mubr.bf16.gmra.mxu0 %v672
  %v1156 = vpop.f32.mrf.mxu0
  %v1157 = vadd.f32 0.0, %v1156
  %v1158 = vpop.f32.mrf.mxu0
  %v1159 = vpop.f32.mrf.mxu0
  %v1160 = vadd.f32 0.0, %v1159
  %v1161 = vpop.f32.mrf.mxu0
  %1162 = vmatprep.mubr.bf16.mxu0 0
  %1163 = vmatmul.mubr.bf16.gmra.mxu0 %v675
  %v1164 = vpop.f32.mrf.mxu0
  %v1165 = vadd.f32 0.0, %v1164
  %v1166 = vpop.f32.mrf.mxu0
  %v1167 = vpop.f32.mrf.mxu0
  %v1168 = vadd.f32 0.0, %v1167
  %v1169 = vpop.f32.mrf.mxu0
  %1170 = vmatprep.mubr.bf16.mxu0 0
  %1171 = vmatmul.mubr.bf16.gmra.mxu0 %v678
  %v1172 = vpop.f32.mrf.mxu0
  %v1173 = vadd.f32 0.0, %v1172
  %v1174 = vpop.f32.mrf.mxu0
  %v1175 = vpop.f32.mrf.mxu0
  %v1176 = vadd.f32 0.0, %v1175
  %v1177 = vpop.f32.mrf.mxu0
  %1178 = vmatprep.mubr.bf16.mxu0 0
  %1179 = vmatmul.mubr.bf16.gmra.mxu0 %v681
  %v1180 = vpop.f32.mrf.mxu0
  %v1181 = vpop.f32.mrf.mxu0
  %v1182 = vpop.f32.mrf.mxu0
  %v1183 = vpop.f32.mrf.mxu0
  %1184 = vmatprep.mubr.bf16.mxu0 0
  %1185 = vmatmul.mubr.bf16.gmra.mxu0 %v684
  %v1186 = vpop.f32.mrf.mxu0
  %v1187 = vpop.f32.mrf.mxu0
  %v1188 = vpop.f32.mrf.mxu0
  %v1189 = vpop.f32.mrf.mxu0
  %1190 = vmatprep.mubr.bf16.mxu0 0
  %1191 = vmatmul.mubr.bf16.gmra.mxu0 %v687
  %v1192 = vpop.f32.mrf.mxu0
  %v1193 = vadd.f32 0.0, %v1192
  %v1194 = vpop.f32.mrf.mxu0
  %v1195 = vpop.f32.mrf.mxu0
  %v1196 = vadd.f32 0.0, %v1195
  %v1197 = vpop.f32.mrf.mxu0
  %1198 = vmatprep.mubr.bf16.mxu0 0
  %1199 = vmatmul.mubr.bf16.gmra.mxu0 %v690
  %v1200 = vpop.f32.mrf.mxu0
  %v1201 = vadd.f32 0.0, %v1200
  %v1202 = vpop.f32.mrf.mxu0
  %v1203 = vpop.f32.mrf.mxu0
  %v1204 = vadd.f32 0.0, %v1203
  %v1205 = vpop.f32.mrf.mxu0
  %1206 = vmatprep.mubr.bf16.mxu0 0
  %1207 = vmatmul.mubr.bf16.gmra.mxu0 %v693
  %v1208 = vpop.f32.mrf.mxu0
  %v1209 = vadd.f32 0.0, %v1208
  %v1210 = vpop.f32.mrf.mxu0
  %v1211 = vpop.f32.mrf.mxu0
  %v1212 = vadd.f32 0.0, %v1211
  %v1213 = vpop.f32.mrf.mxu0
  %1214 = vmatprep.mubr.bf16.mxu0 0
  %1215 = vmatmul.mubr.bf16.gmra.mxu0 %v696
  %v1216 = vpop.f32.mrf.mxu0
  %v1217 = vadd.f32 0.0, %v1216
  %v1218 = vpop.f32.mrf.mxu0
  %v1219 = vpop.f32.mrf.mxu0
  %v1220 = vadd.f32 0.0, %v1219
  %v1221 = vpop.f32.mrf.mxu0
  %1222 = vmatprep.mubr.bf16.mxu0 0
  %1223 = vmatmul.mubr.bf16.gmra.mxu0 %v699
  %v1224 = vpop.f32.mrf.mxu0
  %v1225 = vadd.f32 0.0, %v1224
  %v1226 = vpop.f32.mrf.mxu0
  %v1227 = vpop.f32.mrf.mxu0
  %v1228 = vadd.f32 0.0, %v1227
  %v1229 = vpop.f32.mrf.mxu0
  %1230 = vmatprep.mubr.bf16.mxu0 0
  %1231 = vmatmul.mubr.bf16.gmra.mxu0 %v702
  %v1232 = vpop.f32.mrf.mxu0
  %v1233 = vadd.f32 0.0, %v1232
  %v1234 = vpop.f32.mrf.mxu0
  %v1235 = vpop.f32.mrf.mxu0
  %v1236 = vadd.f32 0.0, %v1235
  %v1237 = vpop.f32.mrf.mxu0
  %1238 = vmatprep.mubr.bf16.mxu0 0
  %1239 = vmatmul.mubr.bf16.gmra.mxu0 %v705
  %v1240 = vpop.f32.mrf.mxu0
  %v1241 = vadd.f32 0.0, %v1240
  %v1242 = vpop.f32.mrf.mxu0
  %v1243 = vpop.f32.mrf.mxu0
  %v1244 = vadd.f32 0.0, %v1243
  %v1245 = vpop.f32.mrf.mxu0
  %1246 = vmatprep.mubr.bf16.mxu0 0
  %1247 = vmatmul.mubr.bf16.gmra.mxu0 %v708
  %v1248 = vpop.f32.mrf.mxu0
  %v1249 = vadd.f32 0.0, %v1248
  %v1250 = vpop.f32.mrf.mxu0
  %v1251 = vpop.f32.mrf.mxu0
  %v1252 = vadd.f32 0.0, %v1251
  %v1253 = vpop.f32.mrf.mxu0
  %1254 = vmatprep.mubr.bf16.mxu0 0
  %1255 = vmatmul.mubr.bf16.gmra.mxu0 %v711
  %v1256 = vpop.f32.mrf.mxu0
  %v1257 = vadd.f32 0.0, %v1256
  %v1258 = vpop.f32.mrf.mxu0
  %v1259 = vpop.f32.mrf.mxu0
  %v1260 = vadd.f32 0.0, %v1259
  %v1261 = vpop.f32.mrf.mxu0
  %1262 = vmatprep.mubr.bf16.mxu0 0
  %1263 = vmatmul.mubr.bf16.gmra.mxu0 %v714
  %v1264 = vpop.f32.mrf.mxu0
  %v1265 = vadd.f32 0.0, %v1264
  %v1266 = vpop.f32.mrf.mxu0
  %v1267 = vpop.f32.mrf.mxu0
  %v1268 = vadd.f32 0.0, %v1267
  %v1269 = vpop.f32.mrf.mxu0
  %1270 = vmatprep.mubr.bf16.mxu0 0
  %1271 = vmatmul.mubr.bf16.gmra.mxu0 %v717
  %v1272 = vpop.f32.mrf.mxu0
  %v1273 = vadd.f32 0.0, %v1272
  %v1274 = vpop.f32.mrf.mxu0
  %v1275 = vpop.f32.mrf.mxu0
  %v1276 = vadd.f32 0.0, %v1275
  %v1277 = vpop.f32.mrf.mxu0
  %1278 = vmatprep.mubr.bf16.mxu0 0
  %1279 = vmatmul.mubr.bf16.gmra.mxu0 %v720
  %v1280 = vpop.f32.mrf.mxu0
  %v1281 = vadd.f32 0.0, %v1280
  %v1282 = vpop.f32.mrf.mxu0
  %v1283 = vpop.f32.mrf.mxu0
  %v1284 = vadd.f32 0.0, %v1283
  %v1285 = vpop.f32.mrf.mxu0
  %1286 = vmatprep.mubr.bf16.mxu0 0
  %1287 = vmatmul.mubr.bf16.gmra.mxu0 %v723
  %v1288 = vpop.f32.mrf.mxu0
  %v1289 = vadd.f32 0.0, %v1288
  %v1290 = vpop.f32.mrf.mxu0
  %v1291 = vpop.f32.mrf.mxu0
  %v1292 = vadd.f32 0.0, %v1291
  %v1293 = vpop.f32.mrf.mxu0
  %1294 = vmatprep.mubr.bf16.mxu0 0
  %1295 = vmatmul.mubr.bf16.gmra.mxu0 %v726
  %v1296 = vpop.f32.mrf.mxu0
  %v1297 = vadd.f32 0.0, %v1296
  %v1298 = vpop.f32.mrf.mxu0
  %v1299 = vpop.f32.mrf.mxu0
  %v1300 = vadd.f32 0.0, %v1299
  %v1301 = vpop.f32.mrf.mxu0
  %1302 = vmatprep.mubr.bf16.mxu0 0
  %1303 = vmatmul.mubr.bf16.gmra.mxu0 %v729
  %v1304 = vpop.f32.mrf.mxu0
  %v1305 = vadd.f32 0.0, %v1304
  %v1306 = vpop.f32.mrf.mxu0
  %v1307 = vpop.f32.mrf.mxu0
  %v1308 = vadd.f32 0.0, %v1307
  %v1309 = vpop.f32.mrf.mxu0
  %1310 = vmatprep.mubr.bf16.mxu0 0
  %1311 = vmatmul.mubr.bf16.gmra.mxu0 %v732
  %v1312 = vpop.f32.mrf.mxu0
  %v1313 = vadd.f32 0.0, %v1312
  %v1314 = vpop.f32.mrf.mxu0
  %v1315 = vpop.f32.mrf.mxu0
  %v1316 = vadd.f32 0.0, %v1315
  %v1317 = vpop.f32.mrf.mxu0
  %1318 = vdwg.mxu0
  %v1321 = vunpack.c.l.b16 %v21
  %v1322 = vunpack.c.l.b16 %v22
  %v1323 = vpack.c.b16 %v1322, %v1321
  %v1326 = vunpack.c.l.b16 %v161
  %v1327 = vunpack.c.l.b16 %v162
  %v1328 = vpack.c.b16 %v1327, %v1326
  %v1330 = vsel %vm523, %v1323, 0
  %v1333 = vsel %vm734, %v1328, 0
  %1335 = vmatprep.subr.bf16.mxu0 0
  %1336 = vmatpush1.bf16.msra.mxu0 0
  %1337 = vmatprep.subr.bf16.mxu0 0
  %1338 = vmatpush1.bf16.msra.mxu0 0
  %1339 = vmatprep.subr.bf16.mxu0 0
  %1340 = vmatpush1.bf16.msra.mxu0 0
  %1341 = vmatprep.subr.bf16.mxu0 0
  %1342 = vmatpush1.bf16.msra.mxu0 0
  %1343 = vmatprep.subr.bf16.mxu0 0
  %1344 = vmatpush1.bf16.msra.mxu0 0
  %1345 = vmatprep.subr.bf16.mxu0 0
  %1346 = vmatpush1.bf16.msra.mxu0 0
  %1347 = vmatprep.subr.bf16.mxu0 0
  %1348 = vmatpush1.bf16.msra.mxu0 0
  %1349 = vmatprep.subr.bf16.mxu0 0
  %1350 = vmatpush1.bf16.msra.mxu0 %v1333
  %1351 = vmatprep.subr.bf16.mxu0 0
  %1352 = vmatpush2.bf16.msra.mxu0 0
  %1353 = vmatprep.subr.bf16.mxu0 0
  %1354 = vmatpush2.bf16.msra.mxu0 0
  %1355 = vmatprep.subr.bf16.mxu0 0
  %1356 = vmatpush2.bf16.msra.mxu0 0
  %1357 = vmatprep.subr.bf16.mxu0 0
  %1358 = vmatpush2.bf16.msra.mxu0 0
  %1359 = vmatprep.subr.bf16.mxu0 0
  %1360 = vmatpush2.bf16.msra.mxu0 0
  %1361 = vmatprep.subr.bf16.mxu0 0
  %1362 = vmatpush2.bf16.msra.mxu0 0
  %1363 = vmatprep.subr.bf16.mxu0 0
  %1364 = vmatpush2.bf16.msra.mxu0 0
  %1365 = vmatprep.subr.bf16.mxu0 0
  %1366 = vmatpush2.bf16.msra.mxu0 0
  %1367 = vmatprep.mubr.bf16.mxu0 0
  %1368 = vmatmul.mubr.bf16.gmra.mxu0 %v1330
  %v1369 = vpop.f32.mrf.mxu0
  %v1370 = vadd.f32 %v773, %v1369
  %v1371 = vpop.f32.mrf.mxu0
  %v1372 = vpop.f32.mrf.mxu0
  %v1373 = vadd.f32 %v776, %v1372
  %v1374 = vpop.f32.mrf.mxu0
  %1375 = vmatprep.mubr.bf16.mxu0 0
  %1376 = vmatmul.mubr.bf16.gmra.mxu0 %v525
  %v1377 = vpop.f32.mrf.mxu0
  %v1378 = vadd.f32 %v781, %v1377
  %v1379 = vpop.f32.mrf.mxu0
  %v1380 = vpop.f32.mrf.mxu0
  %v1381 = vadd.f32 %v784, %v1380
  %v1382 = vpop.f32.mrf.mxu0
  %1383 = vmatprep.mubr.bf16.mxu0 0
  %1384 = vmatmul.mubr.bf16.gmra.mxu0 %v528
  %v1385 = vpop.f32.mrf.mxu0
  %v1386 = vadd.f32 %v789, %v1385
  %v1387 = vpop.f32.mrf.mxu0
  %v1388 = vpop.f32.mrf.mxu0
  %v1389 = vadd.f32 %v792, %v1388
  %v1390 = vpop.f32.mrf.mxu0
  %1391 = vmatprep.mubr.bf16.mxu0 0
  %1392 = vmatmul.mubr.bf16.gmra.mxu0 %v531
  %v1393 = vpop.f32.mrf.mxu0
  %v1394 = vadd.f32 %v797, %v1393
  %v1395 = vpop.f32.mrf.mxu0
  %v1396 = vpop.f32.mrf.mxu0
  %v1397 = vadd.f32 %v800, %v1396
  %v1398 = vpop.f32.mrf.mxu0
  %1399 = vmatprep.mubr.bf16.mxu0 0
  %1400 = vmatmul.mubr.bf16.gmra.mxu0 %v534
  %v1401 = vpop.f32.mrf.mxu0
  %v1402 = vadd.f32 %v805, %v1401
  %v1403 = vpop.f32.mrf.mxu0
  %v1404 = vpop.f32.mrf.mxu0
  %v1405 = vadd.f32 %v808, %v1404
  %v1406 = vpop.f32.mrf.mxu0
  %1407 = vmatprep.mubr.bf16.mxu0 0
  %1408 = vmatmul.mubr.bf16.gmra.mxu0 %v537
  %v1409 = vpop.f32.mrf.mxu0
  %v1410 = vadd.f32 %v813, %v1409
  %v1411 = vpop.f32.mrf.mxu0
  %v1412 = vpop.f32.mrf.mxu0
  %v1413 = vadd.f32 %v816, %v1412
  %v1414 = vpop.f32.mrf.mxu0
  %1415 = vmatprep.mubr.bf16.mxu0 0
  %1416 = vmatmul.mubr.bf16.gmra.mxu0 %v540
  %v1417 = vpop.f32.mrf.mxu0
  %v1418 = vadd.f32 %v821, %v1417
  %v1419 = vpop.f32.mrf.mxu0
  %v1420 = vpop.f32.mrf.mxu0
  %v1421 = vadd.f32 %v824, %v1420
  %v1422 = vpop.f32.mrf.mxu0
  %1423 = vmatprep.mubr.bf16.mxu0 0
  %1424 = vmatmul.mubr.bf16.gmra.mxu0 %v543
  %v1425 = vpop.f32.mrf.mxu0
  %v1426 = vadd.f32 %v829, %v1425
  %v1427 = vpop.f32.mrf.mxu0
  %v1428 = vpop.f32.mrf.mxu0
  %v1429 = vadd.f32 %v832, %v1428
  %v1430 = vpop.f32.mrf.mxu0
  %1431 = vmatprep.mubr.bf16.mxu0 0
  %1432 = vmatmul.mubr.bf16.gmra.mxu0 %v546
  %v1433 = vpop.f32.mrf.mxu0
  %v1434 = vadd.f32 %v837, %v1433
  %v1435 = vpop.f32.mrf.mxu0
  %v1436 = vpop.f32.mrf.mxu0
  %v1437 = vadd.f32 %v840, %v1436
  %v1438 = vpop.f32.mrf.mxu0
  %1439 = vmatprep.mubr.bf16.mxu0 0
  %1440 = vmatmul.mubr.bf16.gmra.mxu0 %v549
  %v1441 = vpop.f32.mrf.mxu0
  %v1442 = vadd.f32 %v845, %v1441
  %v1443 = vpop.f32.mrf.mxu0
  %v1444 = vpop.f32.mrf.mxu0
  %v1445 = vadd.f32 %v848, %v1444
  %v1446 = vpop.f32.mrf.mxu0
  %1447 = vmatprep.mubr.bf16.mxu0 0
  %1448 = vmatmul.mubr.bf16.gmra.mxu0 %v552
  %v1449 = vpop.f32.mrf.mxu0
  %v1450 = vadd.f32 %v853, %v1449
  %v1451 = vpop.f32.mrf.mxu0
  %v1452 = vpop.f32.mrf.mxu0
  %v1453 = vadd.f32 %v856, %v1452
  %v1454 = vpop.f32.mrf.mxu0
  %1455 = vmatprep.mubr.bf16.mxu0 0
  %1456 = vmatmul.mubr.bf16.gmra.mxu0 %v555
  %v1457 = vpop.f32.mrf.mxu0
  %v1458 = vadd.f32 %v861, %v1457
  %v1459 = vpop.f32.mrf.mxu0
  %v1460 = vpop.f32.mrf.mxu0
  %v1461 = vadd.f32 %v864, %v1460
  %v1462 = vpop.f32.mrf.mxu0
  %1463 = vmatprep.mubr.bf16.mxu0 0
  %1464 = vmatmul.mubr.bf16.gmra.mxu0 %v558
  %v1465 = vpop.f32.mrf.mxu0
  %v1466 = vadd.f32 %v869, %v1465
  %v1467 = vpop.f32.mrf.mxu0
  %v1468 = vpop.f32.mrf.mxu0
  %v1469 = vadd.f32 %v872, %v1468
  %v1470 = vpop.f32.mrf.mxu0
  %1471 = vmatprep.mubr.bf16.mxu0 0
  %1472 = vmatmul.mubr.bf16.gmra.mxu0 %v561
  %v1473 = vpop.f32.mrf.mxu0
  %v1474 = vadd.f32 %v877, %v1473
  %v1475 = vpop.f32.mrf.mxu0
  %v1476 = vpop.f32.mrf.mxu0
  %v1477 = vadd.f32 %v880, %v1476
  %v1478 = vpop.f32.mrf.mxu0
  %1479 = vmatprep.mubr.bf16.mxu0 0
  %1480 = vmatmul.mubr.bf16.gmra.mxu0 %v564
  %v1481 = vpop.f32.mrf.mxu0
  %v1482 = vadd.f32 %v885, %v1481
  %v1483 = vpop.f32.mrf.mxu0
  %v1484 = vpop.f32.mrf.mxu0
  %v1485 = vadd.f32 %v888, %v1484
  %v1486 = vpop.f32.mrf.mxu0
  %1487 = vmatprep.mubr.bf16.mxu0 0
  %1488 = vmatmul.mubr.bf16.gmra.mxu0 %v567
  %v1489 = vpop.f32.mrf.mxu0
  %v1490 = vadd.f32 %v893, %v1489
  %v1491 = vpop.f32.mrf.mxu0
  %v1492 = vpop.f32.mrf.mxu0
  %v1493 = vadd.f32 %v896, %v1492
  %v1494 = vpop.f32.mrf.mxu0
  %1495 = vmatprep.mubr.bf16.mxu0 0
  %1496 = vmatmul.mubr.bf16.gmra.mxu0 %v570
  %v1497 = vpop.f32.mrf.mxu0
  %v1498 = vpop.f32.mrf.mxu0
  %v1499 = vpop.f32.mrf.mxu0
  %v1500 = vpop.f32.mrf.mxu0
  %1501 = vmatprep.mubr.bf16.mxu0 0
  %1502 = vmatmul.mubr.bf16.gmra.mxu0 %v573
  %v1503 = vpop.f32.mrf.mxu0
  %v1504 = vpop.f32.mrf.mxu0
  %v1505 = vpop.f32.mrf.mxu0
  %v1506 = vpop.f32.mrf.mxu0
  %1507 = vmatprep.mubr.bf16.mxu0 0
  %1508 = vmatmul.mubr.bf16.gmra.mxu0 %v576
  %v1509 = vpop.f32.mrf.mxu0
  %v1510 = vadd.f32 %v913, %v1509
  %v1511 = vpop.f32.mrf.mxu0
  %v1512 = vpop.f32.mrf.mxu0
  %v1513 = vadd.f32 %v916, %v1512
  %v1514 = vpop.f32.mrf.mxu0
  %1515 = vmatprep.mubr.bf16.mxu0 0
  %1516 = vmatmul.mubr.bf16.gmra.mxu0 %v579
  %v1517 = vpop.f32.mrf.mxu0
  %v1518 = vadd.f32 %v921, %v1517
  %v1519 = vpop.f32.mrf.mxu0
  %v1520 = vpop.f32.mrf.mxu0
  %v1521 = vadd.f32 %v924, %v1520
  %v1522 = vpop.f32.mrf.mxu0
  %1523 = vmatprep.mubr.bf16.mxu0 0
  %1524 = vmatmul.mubr.bf16.gmra.mxu0 %v582
  %v1525 = vpop.f32.mrf.mxu0
  %v1526 = vadd.f32 %v929, %v1525
  %v1527 = vpop.f32.mrf.mxu0
  %v1528 = vpop.f32.mrf.mxu0
  %v1529 = vadd.f32 %v932, %v1528
  %v1530 = vpop.f32.mrf.mxu0
  %1531 = vmatprep.mubr.bf16.mxu0 0
  %1532 = vmatmul.mubr.bf16.gmra.mxu0 %v585
  %v1533 = vpop.f32.mrf.mxu0
  %v1534 = vadd.f32 %v937, %v1533
  %v1535 = vpop.f32.mrf.mxu0
  %v1536 = vpop.f32.mrf.mxu0
  %v1537 = vadd.f32 %v940, %v1536
  %v1538 = vpop.f32.mrf.mxu0
  %1539 = vmatprep.mubr.bf16.mxu0 0
  %1540 = vmatmul.mubr.bf16.gmra.mxu0 %v588
  %v1541 = vpop.f32.mrf.mxu0
  %v1542 = vadd.f32 %v945, %v1541
  %v1543 = vpop.f32.mrf.mxu0
  %v1544 = vpop.f32.mrf.mxu0
  %v1545 = vadd.f32 %v948, %v1544
  %v1546 = vpop.f32.mrf.mxu0
  %1547 = vmatprep.mubr.bf16.mxu0 0
  %1548 = vmatmul.mubr.bf16.gmra.mxu0 %v591
  %v1549 = vpop.f32.mrf.mxu0
  %v1550 = vadd.f32 %v953, %v1549
  %v1551 = vpop.f32.mrf.mxu0
  %v1552 = vpop.f32.mrf.mxu0
  %v1553 = vadd.f32 %v956, %v1552
  %v1554 = vpop.f32.mrf.mxu0
  %1555 = vmatprep.mubr.bf16.mxu0 0
  %1556 = vmatmul.mubr.bf16.gmra.mxu0 %v594
  %v1557 = vpop.f32.mrf.mxu0
  %v1558 = vadd.f32 %v961, %v1557
  %v1559 = vpop.f32.mrf.mxu0
  %v1560 = vpop.f32.mrf.mxu0
  %v1561 = vadd.f32 %v964, %v1560
  %v1562 = vpop.f32.mrf.mxu0
  %1563 = vmatprep.mubr.bf16.mxu0 0
  %1564 = vmatmul.mubr.bf16.gmra.mxu0 %v597
  %v1565 = vpop.f32.mrf.mxu0
  %v1566 = vadd.f32 %v969, %v1565
  %v1567 = vpop.f32.mrf.mxu0
  %v1568 = vpop.f32.mrf.mxu0
  %v1569 = vadd.f32 %v972, %v1568
  %v1570 = vpop.f32.mrf.mxu0
  %1571 = vmatprep.mubr.bf16.mxu0 0
  %1572 = vmatmul.mubr.bf16.gmra.mxu0 %v600
  %v1573 = vpop.f32.mrf.mxu0
  %v1574 = vadd.f32 %v977, %v1573
  %v1575 = vpop.f32.mrf.mxu0
  %v1576 = vpop.f32.mrf.mxu0
  %v1577 = vadd.f32 %v980, %v1576
  %v1578 = vpop.f32.mrf.mxu0
  %1579 = vmatprep.mubr.bf16.mxu0 0
  %1580 = vmatmul.mubr.bf16.gmra.mxu0 %v603
  %v1581 = vpop.f32.mrf.mxu0
  %v1582 = vadd.f32 %v985, %v1581
  %v1583 = vpop.f32.mrf.mxu0
  %v1584 = vpop.f32.mrf.mxu0
  %v1585 = vadd.f32 %v988, %v1584
  %v1586 = vpop.f32.mrf.mxu0
  %1587 = vmatprep.mubr.bf16.mxu0 0
  %1588 = vmatmul.mubr.bf16.gmra.mxu0 %v606
  %v1589 = vpop.f32.mrf.mxu0
  %v1590 = vadd.f32 %v993, %v1589
  %v1591 = vpop.f32.mrf.mxu0
  %v1592 = vpop.f32.mrf.mxu0
  %v1593 = vadd.f32 %v996, %v1592
  %v1594 = vpop.f32.mrf.mxu0
  %1595 = vmatprep.mubr.bf16.mxu0 0
  %1596 = vmatmul.mubr.bf16.gmra.mxu0 %v609
  %v1597 = vpop.f32.mrf.mxu0
  %v1598 = vadd.f32 %v1001, %v1597
  %v1599 = vpop.f32.mrf.mxu0
  %v1600 = vpop.f32.mrf.mxu0
  %v1601 = vadd.f32 %v1004, %v1600
  %v1602 = vpop.f32.mrf.mxu0
  %1603 = vmatprep.mubr.bf16.mxu0 0
  %1604 = vmatmul.mubr.bf16.gmra.mxu0 %v612
  %v1605 = vpop.f32.mrf.mxu0
  %v1606 = vadd.f32 %v1009, %v1605
  %v1607 = vpop.f32.mrf.mxu0
  %v1608 = vpop.f32.mrf.mxu0
  %v1609 = vadd.f32 %v1012, %v1608
  %v1610 = vpop.f32.mrf.mxu0
  %1611 = vmatprep.mubr.bf16.mxu0 0
  %1612 = vmatmul.mubr.bf16.gmra.mxu0 %v615
  %v1613 = vpop.f32.mrf.mxu0
  %v1614 = vadd.f32 %v1017, %v1613
  %v1615 = vpop.f32.mrf.mxu0
  %v1616 = vpop.f32.mrf.mxu0
  %v1617 = vadd.f32 %v1020, %v1616
  %v1618 = vpop.f32.mrf.mxu0
  %1619 = vmatprep.mubr.bf16.mxu0 0
  %1620 = vmatmul.mubr.bf16.gmra.mxu0 %v618
  %v1621 = vpop.f32.mrf.mxu0
  %v1622 = vadd.f32 %v1025, %v1621
  %v1623 = vpop.f32.mrf.mxu0
  %v1624 = vpop.f32.mrf.mxu0
  %v1625 = vadd.f32 %v1028, %v1624
  %v1626 = vpop.f32.mrf.mxu0
  %1627 = vmatprep.mubr.bf16.mxu0 0
  %1628 = vmatmul.mubr.bf16.gmra.mxu0 %v621
  %v1629 = vpop.f32.mrf.mxu0
  %v1630 = vadd.f32 %v1033, %v1629
  %v1631 = vpop.f32.mrf.mxu0
  %v1632 = vpop.f32.mrf.mxu0
  %v1633 = vadd.f32 %v1036, %v1632
  %v1634 = vpop.f32.mrf.mxu0
  %1635 = vmatprep.mubr.bf16.mxu0 0
  %1636 = vmatmul.mubr.bf16.gmra.mxu0 %v624
  %v1637 = vpop.f32.mrf.mxu0
  %v1638 = vpop.f32.mrf.mxu0
  %v1639 = vpop.f32.mrf.mxu0
  %v1640 = vpop.f32.mrf.mxu0
  %1641 = vmatprep.mubr.bf16.mxu0 0
  %1642 = vmatmul.mubr.bf16.gmra.mxu0 %v627
  %v1643 = vpop.f32.mrf.mxu0
  %v1644 = vpop.f32.mrf.mxu0
  %v1645 = vpop.f32.mrf.mxu0
  %v1646 = vpop.f32.mrf.mxu0
  %1647 = vmatprep.mubr.bf16.mxu0 0
  %1648 = vmatmul.mubr.bf16.gmra.mxu0 %v630
  %v1649 = vpop.f32.mrf.mxu0
  %v1650 = vadd.f32 %v1053, %v1649
  %v1651 = vpop.f32.mrf.mxu0
  %v1652 = vpop.f32.mrf.mxu0
  %v1653 = vadd.f32 %v1056, %v1652
  %v1654 = vpop.f32.mrf.mxu0
  %1655 = vmatprep.mubr.bf16.mxu0 0
  %1656 = vmatmul.mubr.bf16.gmra.mxu0 %v633
  %v1657 = vpop.f32.mrf.mxu0
  %v1658 = vadd.f32 %v1061, %v1657
  %v1659 = vpop.f32.mrf.mxu0
  %v1660 = vpop.f32.mrf.mxu0
  %v1661 = vadd.f32 %v1064, %v1660
  %v1662 = vpop.f32.mrf.mxu0
  %1663 = vmatprep.mubr.bf16.mxu0 0
  %1664 = vmatmul.mubr.bf16.gmra.mxu0 %v636
  %v1665 = vpop.f32.mrf.mxu0
  %v1666 = vadd.f32 %v1069, %v1665
  %v1667 = vpop.f32.mrf.mxu0
  %v1668 = vpop.f32.mrf.mxu0
  %v1669 = vadd.f32 %v1072, %v1668
  %v1670 = vpop.f32.mrf.mxu0
  %1671 = vmatprep.mubr.bf16.mxu0 0
  %1672 = vmatmul.mubr.bf16.gmra.mxu0 %v639
  %v1673 = vpop.f32.mrf.mxu0
  %v1674 = vadd.f32 %v1077, %v1673
  %v1675 = vpop.f32.mrf.mxu0
  %v1676 = vpop.f32.mrf.mxu0
  %v1677 = vadd.f32 %v1080, %v1676
  %v1678 = vpop.f32.mrf.mxu0
  %1679 = vmatprep.mubr.bf16.mxu0 0
  %1680 = vmatmul.mubr.bf16.gmra.mxu0 %v642
  %v1681 = vpop.f32.mrf.mxu0
  %v1682 = vadd.f32 %v1085, %v1681
  %v1683 = vpop.f32.mrf.mxu0
  %v1684 = vpop.f32.mrf.mxu0
  %v1685 = vadd.f32 %v1088, %v1684
  %v1686 = vpop.f32.mrf.mxu0
  %1687 = vmatprep.mubr.bf16.mxu0 0
  %1688 = vmatmul.mubr.bf16.gmra.mxu0 %v645
  %v1689 = vpop.f32.mrf.mxu0
  %v1690 = vadd.f32 %v1093, %v1689
  %v1691 = vpop.f32.mrf.mxu0
  %v1692 = vpop.f32.mrf.mxu0
  %v1693 = vadd.f32 %v1096, %v1692
  %v1694 = vpop.f32.mrf.mxu0
  %1695 = vmatprep.mubr.bf16.mxu0 0
  %1696 = vmatmul.mubr.bf16.gmra.mxu0 %v648
  %v1697 = vpop.f32.mrf.mxu0
  %v1698 = vadd.f32 %v1101, %v1697
  %v1699 = vpop.f32.mrf.mxu0
  %v1700 = vpop.f32.mrf.mxu0
  %v1701 = vadd.f32 %v1104, %v1700
  %v1702 = vpop.f32.mrf.mxu0
  %1703 = vmatprep.mubr.bf16.mxu0 0
  %1704 = vmatmul.mubr.bf16.gmra.mxu0 %v651
  %v1705 = vpop.f32.mrf.mxu0
  %v1706 = vadd.f32 %v1109, %v1705
  %v1707 = vpop.f32.mrf.mxu0
  %v1708 = vpop.f32.mrf.mxu0
  %v1709 = vadd.f32 %v1112, %v1708
  %v1710 = vpop.f32.mrf.mxu0
  %1711 = vmatprep.mubr.bf16.mxu0 0
  %1712 = vmatmul.mubr.bf16.gmra.mxu0 %v654
  %v1713 = vpop.f32.mrf.mxu0
  %v1714 = vadd.f32 %v1117, %v1713
  %v1715 = vpop.f32.mrf.mxu0
  %v1716 = vpop.f32.mrf.mxu0
  %v1717 = vadd.f32 %v1120, %v1716
  %v1718 = vpop.f32.mrf.mxu0
  %1719 = vmatprep.mubr.bf16.mxu0 0
  %1720 = vmatmul.mubr.bf16.gmra.mxu0 %v657
  %v1721 = vpop.f32.mrf.mxu0
  %v1722 = vadd.f32 %v1125, %v1721
  %v1723 = vpop.f32.mrf.mxu0
  %v1724 = vpop.f32.mrf.mxu0
  %v1725 = vadd.f32 %v1128, %v1724
  %v1726 = vpop.f32.mrf.mxu0
  %1727 = vmatprep.mubr.bf16.mxu0 0
  %1728 = vmatmul.mubr.bf16.gmra.mxu0 %v660
  %v1729 = vpop.f32.mrf.mxu0
  %v1730 = vadd.f32 %v1133, %v1729
  %v1731 = vpop.f32.mrf.mxu0
  %v1732 = vpop.f32.mrf.mxu0
  %v1733 = vadd.f32 %v1136, %v1732
  %v1734 = vpop.f32.mrf.mxu0
  %1735 = vmatprep.mubr.bf16.mxu0 0
  %1736 = vmatmul.mubr.bf16.gmra.mxu0 %v663
  %v1737 = vpop.f32.mrf.mxu0
  %v1738 = vadd.f32 %v1141, %v1737
  %v1739 = vpop.f32.mrf.mxu0
  %v1740 = vpop.f32.mrf.mxu0
  %v1741 = vadd.f32 %v1144, %v1740
  %v1742 = vpop.f32.mrf.mxu0
  %1743 = vmatprep.mubr.bf16.mxu0 0
  %1744 = vmatmul.mubr.bf16.gmra.mxu0 %v666
  %v1745 = vpop.f32.mrf.mxu0
  %v1746 = vadd.f32 %v1149, %v1745
  %v1747 = vpop.f32.mrf.mxu0
  %v1748 = vpop.f32.mrf.mxu0
  %v1749 = vadd.f32 %v1152, %v1748
  %v1750 = vpop.f32.mrf.mxu0
  %1751 = vmatprep.mubr.bf16.mxu0 0
  %1752 = vmatmul.mubr.bf16.gmra.mxu0 %v669
  %v1753 = vpop.f32.mrf.mxu0
  %v1754 = vadd.f32 %v1157, %v1753
  %v1755 = vpop.f32.mrf.mxu0
  %v1756 = vpop.f32.mrf.mxu0
  %v1757 = vadd.f32 %v1160, %v1756
  %v1758 = vpop.f32.mrf.mxu0
  %1759 = vmatprep.mubr.bf16.mxu0 0
  %1760 = vmatmul.mubr.bf16.gmra.mxu0 %v672
  %v1761 = vpop.f32.mrf.mxu0
  %v1762 = vadd.f32 %v1165, %v1761
  %v1763 = vpop.f32.mrf.mxu0
  %v1764 = vpop.f32.mrf.mxu0
  %v1765 = vadd.f32 %v1168, %v1764
  %v1766 = vpop.f32.mrf.mxu0
  %1767 = vmatprep.mubr.bf16.mxu0 0
  %1768 = vmatmul.mubr.bf16.gmra.mxu0 %v675
  %v1769 = vpop.f32.mrf.mxu0
  %v1770 = vadd.f32 %v1173, %v1769
  %v1771 = vpop.f32.mrf.mxu0
  %v1772 = vpop.f32.mrf.mxu0
  %v1773 = vadd.f32 %v1176, %v1772
  %v1774 = vpop.f32.mrf.mxu0
  %1775 = vmatprep.mubr.bf16.mxu0 0
  %1776 = vmatmul.mubr.bf16.gmra.mxu0 %v678
  %v1777 = vpop.f32.mrf.mxu0
  %v1778 = vpop.f32.mrf.mxu0
  %v1779 = vpop.f32.mrf.mxu0
  %v1780 = vpop.f32.mrf.mxu0
  %1781 = vmatprep.mubr.bf16.mxu0 0
  %1782 = vmatmul.mubr.bf16.gmra.mxu0 %v681
  %v1783 = vpop.f32.mrf.mxu0
  %v1784 = vpop.f32.mrf.mxu0
  %v1785 = vpop.f32.mrf.mxu0
  %v1786 = vpop.f32.mrf.mxu0
  %1787 = vmatprep.mubr.bf16.mxu0 0
  %1788 = vmatmul.mubr.bf16.gmra.mxu0 %v684
  %v1789 = vpop.f32.mrf.mxu0
  %v1790 = vadd.f32 %v1193, %v1789
  %v1791 = vpop.f32.mrf.mxu0
  %v1792 = vpop.f32.mrf.mxu0
  %v1793 = vadd.f32 %v1196, %v1792
  %v1794 = vpop.f32.mrf.mxu0
  %1795 = vmatprep.mubr.bf16.mxu0 0
  %1796 = vmatmul.mubr.bf16.gmra.mxu0 %v687
  %v1797 = vpop.f32.mrf.mxu0
  %v1798 = vadd.f32 %v1201, %v1797
  %v1799 = vpop.f32.mrf.mxu0
  %v1800 = vpop.f32.mrf.mxu0
  %v1801 = vadd.f32 %v1204, %v1800
  %v1802 = vpop.f32.mrf.mxu0
  %1803 = vmatprep.mubr.bf16.mxu0 0
  %1804 = vmatmul.mubr.bf16.gmra.mxu0 %v690
  %v1805 = vpop.f32.mrf.mxu0
  %v1806 = vadd.f32 %v1209, %v1805
  %v1807 = vpop.f32.mrf.mxu0
  %v1808 = vpop.f32.mrf.mxu0
  %v1809 = vadd.f32 %v1212, %v1808
  %v1810 = vpop.f32.mrf.mxu0
  %1811 = vmatprep.mubr.bf16.mxu0 0
  %1812 = vmatmul.mubr.bf16.gmra.mxu0 %v693
  %v1813 = vpop.f32.mrf.mxu0
  %v1814 = vadd.f32 %v1217, %v1813
  %v1815 = vpop.f32.mrf.mxu0
  %v1816 = vpop.f32.mrf.mxu0
  %v1817 = vadd.f32 %v1220, %v1816
  %v1818 = vpop.f32.mrf.mxu0
  %1819 = vmatprep.mubr.bf16.mxu0 0
  %1820 = vmatmul.mubr.bf16.gmra.mxu0 %v696
  %v1821 = vpop.f32.mrf.mxu0
  %v1822 = vadd.f32 %v1225, %v1821
  %v1823 = vpop.f32.mrf.mxu0
  %v1824 = vpop.f32.mrf.mxu0
  %v1825 = vadd.f32 %v1228, %v1824
  %v1826 = vpop.f32.mrf.mxu0
  %1827 = vmatprep.mubr.bf16.mxu0 0
  %1828 = vmatmul.mubr.bf16.gmra.mxu0 %v699
  %v1829 = vpop.f32.mrf.mxu0
  %v1830 = vadd.f32 %v1233, %v1829
  %v1831 = vpop.f32.mrf.mxu0
  %v1832 = vpop.f32.mrf.mxu0
  %v1833 = vadd.f32 %v1236, %v1832
  %v1834 = vpop.f32.mrf.mxu0
  %1835 = vmatprep.mubr.bf16.mxu0 0
  %1836 = vmatmul.mubr.bf16.gmra.mxu0 %v702
  %v1837 = vpop.f32.mrf.mxu0
  %v1838 = vadd.f32 %v1241, %v1837
  %v1839 = vpop.f32.mrf.mxu0
  %v1840 = vpop.f32.mrf.mxu0
  %v1841 = vadd.f32 %v1244, %v1840
  %v1842 = vpop.f32.mrf.mxu0
  %1843 = vmatprep.mubr.bf16.mxu0 0
  %1844 = vmatmul.mubr.bf16.gmra.mxu0 %v705
  %v1845 = vpop.f32.mrf.mxu0
  %v1846 = vadd.f32 %v1249, %v1845
  %v1847 = vpop.f32.mrf.mxu0
  %v1848 = vpop.f32.mrf.mxu0
  %v1849 = vadd.f32 %v1252, %v1848
  %v1850 = vpop.f32.mrf.mxu0
  %1851 = vmatprep.mubr.bf16.mxu0 0
  %1852 = vmatmul.mubr.bf16.gmra.mxu0 %v708
  %v1853 = vpop.f32.mrf.mxu0
  %v1854 = vadd.f32 %v1257, %v1853
  %v1855 = vpop.f32.mrf.mxu0
  %v1856 = vpop.f32.mrf.mxu0
  %v1857 = vadd.f32 %v1260, %v1856
  %v1858 = vpop.f32.mrf.mxu0
  %1859 = vmatprep.mubr.bf16.mxu0 0
  %1860 = vmatmul.mubr.bf16.gmra.mxu0 %v711
  %v1861 = vpop.f32.mrf.mxu0
  %v1862 = vadd.f32 %v1265, %v1861
  %v1863 = vpop.f32.mrf.mxu0
  %v1864 = vpop.f32.mrf.mxu0
  %v1865 = vadd.f32 %v1268, %v1864
  %v1866 = vpop.f32.mrf.mxu0
  %1867 = vmatprep.mubr.bf16.mxu0 0
  %1868 = vmatmul.mubr.bf16.gmra.mxu0 %v714
  %v1869 = vpop.f32.mrf.mxu0
  %v1870 = vadd.f32 %v1273, %v1869
  %v1871 = vpop.f32.mrf.mxu0
  %v1872 = vpop.f32.mrf.mxu0
  %v1873 = vadd.f32 %v1276, %v1872
  %v1874 = vpop.f32.mrf.mxu0
  %1875 = vmatprep.mubr.bf16.mxu0 0
  %1876 = vmatmul.mubr.bf16.gmra.mxu0 %v717
  %v1877 = vpop.f32.mrf.mxu0
  %v1878 = vadd.f32 %v1281, %v1877
  %v1879 = vpop.f32.mrf.mxu0
  %v1880 = vpop.f32.mrf.mxu0
  %v1881 = vadd.f32 %v1284, %v1880
  %v1882 = vpop.f32.mrf.mxu0
  %1883 = vmatprep.mubr.bf16.mxu0 0
  %1884 = vmatmul.mubr.bf16.gmra.mxu0 %v720
  %v1885 = vpop.f32.mrf.mxu0
  %v1886 = vadd.f32 %v1289, %v1885
  %v1887 = vpop.f32.mrf.mxu0
  %v1888 = vpop.f32.mrf.mxu0
  %v1889 = vadd.f32 %v1292, %v1888
  %v1890 = vpop.f32.mrf.mxu0
  %1891 = vmatprep.mubr.bf16.mxu0 0
  %1892 = vmatmul.mubr.bf16.gmra.mxu0 %v723
  %v1893 = vpop.f32.mrf.mxu0
  %v1894 = vadd.f32 %v1297, %v1893
  %v1895 = vpop.f32.mrf.mxu0
  %v1896 = vpop.f32.mrf.mxu0
  %v1897 = vadd.f32 %v1300, %v1896
  %v1898 = vpop.f32.mrf.mxu0
  %1899 = vmatprep.mubr.bf16.mxu0 0
  %1900 = vmatmul.mubr.bf16.gmra.mxu0 %v726
  %v1901 = vpop.f32.mrf.mxu0
  %v1902 = vadd.f32 %v1305, %v1901
  %v1903 = vpop.f32.mrf.mxu0
  %v1904 = vpop.f32.mrf.mxu0
  %v1905 = vadd.f32 %v1308, %v1904
  %v1906 = vpop.f32.mrf.mxu0
  %1907 = vmatprep.mubr.bf16.mxu0 0
  %1908 = vmatmul.mubr.bf16.gmra.mxu0 %v729
  %v1909 = vpop.f32.mrf.mxu0
  %v1910 = vadd.f32 %v1313, %v1909
  %v1911 = vpop.f32.mrf.mxu0
  %v1912 = vpop.f32.mrf.mxu0
  %v1913 = vadd.f32 %v1316, %v1912
  %v1914 = vpop.f32.mrf.mxu0
  %1915 = vdwg.mxu0
  %v1916 = vld [vmem:[%s0 + $0x10] sm:$0xf]
  %v1917 = vld [vmem:[%s0 + $0x14] sm:$0xf]
  %v1918 = vld [vmem:[%s0 + $0x18] sm:$0xf]
  %v1919 = vld [vmem:[%s0 + $0x1c] sm:$0xf]
  %v1920 = vld [vmem:[%s0 + $0x20] sm:$0xf]
  %v1921 = vld [vmem:[%s0 + $0x24] sm:$0xf]
  %v1922 = vld [vmem:[%s0 + $0x28] sm:$0xf]
  %v1923 = vld [vmem:[%s0 + $0x2c] sm:$0xf]
  %v1924 = vld [vmem:[%s0 + $0x30] sm:$0xf]
  %v1925 = vld [vmem:[%s0 + $0x34] sm:$0xf]
  %v1926 = vld [vmem:[%s0 + $0x38] sm:$0xf]
  %v1927 = vld [vmem:[%s0 + $0x3c] sm:$0xf]
  %v1928 = vld [vmem:[%s0 + $0x40] sm:$0xf]
  %v1929 = vld [vmem:[%s0 + $0x44] sm:$0xf]
  %v1930 = vld [vmem:[%s0 + $0x48] sm:$0xf]
  %v1931 = vld [vmem:[%s0 + $0x4c] sm:$0xf]
  %v1932 = vld [vmem:[%s0 + $0x50] sm:$0xf]
  %v1933 = vld [vmem:[%s0 + $0x54] sm:$0xf]
  %v1934 = vld [vmem:[%s0 + $0x58] sm:$0xf]
  %v1935 = vld [vmem:[%s0 + $0x5c] sm:$0xf]
  %v1936 = vld [vmem:[%s0 + $0x60] sm:$0xf]
  %v1937 = vld [vmem:[%s0 + $0x64] sm:$0xf]
  %v1938 = vld [vmem:[%s0 + $0x68] sm:$0xf]
  %v1939 = vld [vmem:[%s0 + $0x6c] sm:$0xf]
  %v1940 = vld [vmem:[%s0 + $0x70] sm:$0xf]
  %v1941 = vld [vmem:[%s0 + $0x74] sm:$0xf]
  %v1942 = vld [vmem:[%s0 + $0x78] sm:$0xf]
  %v1943 = vld [vmem:[%s0 + $0x7c] sm:$0xf]
  %v1944 = vld [vmem:[%s0 + $0x80] sm:$0xf]
  %v1945 = vld [vmem:[%s0 + $0x84] sm:$0xf]
  %v1946 = vld [vmem:[%s0 + $0x88] sm:$0xf]
  %v1947 = vld [vmem:[%s0 + $0x8c] sm:$0xf]
  %v1948 = vld [vmem:[%s0 + $0x90] sm:$0xf]
  %v1949 = vld [vmem:[%s0 + $0x94] sm:$0xf]
  %v1950 = vld [vmem:[%s0 + $0x98] sm:$0xf]
  %v1951 = vld [vmem:[%s0 + $0x9c] sm:$0xf]
  %v1952 = vld [vmem:[%s0 + $0xa0] sm:$0xf]
  %v1953 = vld [vmem:[%s0 + $0xa4] sm:$0xf]
  %v1954 = vld [vmem:[%s0 + $0xa8] sm:$0xf]
  %v1955 = vld [vmem:[%s0 + $0xac] sm:$0xf]
  %v1956 = vld [vmem:[%s0 + $0xb0] sm:$0xf]
  %v1957 = vld [vmem:[%s0 + $0xb4] sm:$0xf]
  %v1958 = vld [vmem:[%s0 + $0xb8] sm:$0xf]
  %v1959 = vld [vmem:[%s0 + $0xbc] sm:$0xf]
  %v1960 = vld [vmem:[%s0 + $0xc0] sm:$0xf]
  %v1961 = vld [vmem:[%s0 + $0xc4] sm:$0xf]
  %v1962 = vld [vmem:[%s0 + $0xc8] sm:$0xf]
  %v1963 = vld [vmem:[%s0 + $0xcc] sm:$0xf]
  %v1964 = vld [vmem:[%s0 + $0xd0] sm:$0xf]
  %v1965 = vld [vmem:[%s0 + $0xd4] sm:$0xf]
  %v1966 = vld [vmem:[%s0 + $0xd8] sm:$0xf]
  %v1967 = vld [vmem:[%s0 + $0xdc] sm:$0xf]
  %v1968 = vld [vmem:[%s0 + $0xe0] sm:$0xf]
  %v1969 = vld [vmem:[%s0 + $0xe4] sm:$0xf]
  %v1970 = vld [vmem:[%s0 + $0xe8] sm:$0xf]
  %v1971 = vld [vmem:[%s0 + $0xec] sm:$0xf]
  %v1972 = vld [vmem:[%s0 + $0xf0] sm:$0xf]
  %v1973 = vld [vmem:[%s0 + $0xf4] sm:$0xf]
  %v1974 = vld [vmem:[%s0 + $0xf8] sm:$0xf]
  %v1975 = vld [vmem:[%s0 + $0xfc] sm:$0xf]
  %v1976 = vld [vmem:[%s0 + $0x100] sm:$0xf]
  %v1977 = vld [vmem:[%s0 + $0x104] sm:$0xf]
  %v1978 = vld [vmem:[%s0 + $0x108] sm:$0xf]
  %v1979 = vld [vmem:[%s0 + $0x10c] sm:$0xf]
  %v1980 = vld [vmem:[%s0 + $0x110] sm:$0xf]
  %v1981 = vld [vmem:[%s0 + $0x114] sm:$0xf]
  %v1982 = vld [vmem:[%s0 + $0x118] sm:$0xf]
  %v1983 = vld [vmem:[%s0 + $0x11c] sm:$0xf]
  %v1984 = vld [vmem:[%s0 + $0x120] sm:$0xf]
  %v1985 = vld [vmem:[%s0 + $0x124] sm:$0xf]
  %v1986 = vld [vmem:[%s0 + $0x128] sm:$0xf]
  %v1987 = vld [vmem:[%s0 + $0x12c] sm:$0xf]
  %v1988 = vld [vmem:[%s0 + $0x130] sm:$0xf]
  %v1989 = vld [vmem:[%s0 + $0x134] sm:$0xf]
  %v1990 = vld [vmem:[%s0 + $0x138] sm:$0xf]
  %v1991 = vld [vmem:[%s0 + $0x13c] sm:$0xf]
  %v1992 = vld [vmem:[%s0 + $0x140] sm:$0xf]
  %v1993 = vld [vmem:[%s0 + $0x144] sm:$0xf]
  %v1994 = vld [vmem:[%s0 + $0x148] sm:$0xf]
  %v1995 = vld [vmem:[%s0 + $0x14c] sm:$0xf]
  %v1996 = vld [vmem:[%s0 + $0x150] sm:$0xf]
  %v1997 = vld [vmem:[%s0 + $0x154] sm:$0xf]
  %v1998 = vld [vmem:[%s0 + $0x158] sm:$0xf]
  %v1999 = vld [vmem:[%s0 + $0x15c] sm:$0xf]
  %v2000 = vld [vmem:[%s0 + $0x160] sm:$0xf]
  %v2001 = vld [vmem:[%s0 + $0x164] sm:$0xf]
  %v2002 = vld [vmem:[%s0 + $0x168] sm:$0xf]
  %v2003 = vld [vmem:[%s0 + $0x16c] sm:$0xf]
  %v2004 = vld [vmem:[%s0 + $0x170] sm:$0xf]
  %v2005 = vld [vmem:[%s0 + $0x174] sm:$0xf]
  %v2006 = vld [vmem:[%s0 + $0x178] sm:$0xf]
  %v2007 = vld [vmem:[%s0 + $0x17c] sm:$0xf]
  %v2008 = vld [vmem:[%s0 + $0x180] sm:$0xf]
  %v2009 = vld [vmem:[%s0 + $0x184] sm:$0xf]
  %v2010 = vld [vmem:[%s0 + $0x188] sm:$0xf]
  %v2011 = vld [vmem:[%s0 + $0x18c] sm:$0xf]
  %v2012 = vld [vmem:[%s0 + $0x190] sm:$0xf]
  %v2013 = vld [vmem:[%s0 + $0x194] sm:$0xf]
  %v2014 = vld [vmem:[%s0 + $0x198] sm:$0xf]
  %v2015 = vld [vmem:[%s0 + $0x19c] sm:$0xf]
  %v2016 = vld [vmem:[%s0 + $0x1a0] sm:$0xf]
  %v2017 = vld [vmem:[%s0 + $0x1a4] sm:$0xf]
  %v2018 = vld [vmem:[%s0 + $0x1a8] sm:$0xf]
  %v2019 = vld [vmem:[%s0 + $0x1ac] sm:$0xf]
  %v2020 = vld [vmem:[%s0 + $0x1b0] sm:$0xf]
  %v2021 = vld [vmem:[%s0 + $0x1b4] sm:$0xf]
  %v2022 = vld [vmem:[%s0 + $0x1b8] sm:$0xf]
  %v2023 = vld [vmem:[%s0 + $0x1bc] sm:$0xf]
  %v2024 = vld [vmem:[%s0 + $0x1c0] sm:$0xf]
  %v2025 = vld [vmem:[%s0 + $0x1c4] sm:$0xf]
  %v2026 = vld [vmem:[%s0 + $0x1c8] sm:$0xf]
  %v2027 = vld [vmem:[%s0 + $0x1cc] sm:$0xf]
  %v2028 = vld [vmem:[%s0 + $0x1d0] sm:$0xf]
  %v2029 = vld [vmem:[%s0 + $0x1d4] sm:$0xf]
  %v2030 = vld [vmem:[%s0 + $0x1d8] sm:$0xf]
  %v2031 = vld [vmem:[%s0 + $0x1dc] sm:$0xf]
  %v2032 = vld [vmem:[%s0 + $0x1e0] sm:$0xf]
  %v2033 = vld [vmem:[%s0 + $0x1e4] sm:$0xf]
  %v2034 = vld [vmem:[%s0 + $0x1e8] sm:$0xf]
  %v2035 = vld [vmem:[%s0 + $0x1ec] sm:$0xf]
  %v2036 = vld [vmem:[%s0 + $0x1f0] sm:$0xf]
  %v2037 = vld [vmem:[%s0 + $0x1f4] sm:$0xf]
  %v2038 = vld [vmem:[%s0 + $0x1f8] sm:$0xf]
  %v2039 = vld [vmem:[%s0 + $0x1fc] sm:$0xf]
  %v2040 = vld [vmem:[%s0 + $0x200] sm:$0xf]
  %v2041 = vld [vmem:[%s0 + $0x204] sm:$0xf]
  %v2042 = vld [vmem:[%s0 + $0x208] sm:$0xf]
  %v2043 = vld [vmem:[%s0 + $0x20c] sm:$0xf]
  %v2044 = vld [vmem:[%s0 + $0x210] sm:$0xf]
  %v2045 = vld [vmem:[%s0 + $0x214] sm:$0xf]
  %v2046 = vld [vmem:[%s0 + $0x218] sm:$0xf]
  %v2047 = vld [vmem:[%s0 + $0x21c] sm:$0xf]
  %v2048 = vld [vmem:[%s0 + $0x220] sm:$0xf]
  %v2049 = vld [vmem:[%s0 + $0x224] sm:$0xf]
  %v2050 = vld [vmem:[%s0 + $0x228] sm:$0xf]
  %v2051 = vld [vmem:[%s0 + $0x22c] sm:$0xf]
  %v2052 = vld [vmem:[%s0 + $0x230] sm:$0xf]
  %v2053 = vld [vmem:[%s0 + $0x234] sm:$0xf]
  %v2054 = vld [vmem:[%s0 + $0x238] sm:$0xf]
  %v2055 = vld [vmem:[%s0 + $0x23c] sm:$0xf]
  %s2056 = scalar_lea.vmem %s1, 16
  %v2057 = vld [vmem:[%s2056] sm:$0xf]
  %v2058 = vld [vmem:[%s2056 + $0x4] sm:$0x3]
  %v2199 = vunpack.c.l.b16 %v1916
  %v2200 = vunpack.c.l.b16 %v1917
  %v2201 = vunpack.c.l.b16 %v1918
  %v2202 = vunpack.c.l.b16 %v1919
  %v2203 = vunpack.c.l.b16 %v1920
  %v2204 = vunpack.c.l.b16 %v1921
  %v2205 = vunpack.c.l.b16 %v1922
  %v2206 = vunpack.c.l.b16 %v1923
  %v2207 = vunpack.c.l.b16 %v1924
  %v2208 = vunpack.c.l.b16 %v1925
  %v2209 = vunpack.c.l.b16 %v1926
  %v2210 = vunpack.c.l.b16 %v1927
  %v2211 = vunpack.c.l.b16 %v1928
  %v2212 = vunpack.c.l.b16 %v1929
  %v2213 = vunpack.c.l.b16 %v1930
  %v2214 = vunpack.c.l.b16 %v1931
  %v2215 = vunpack.c.l.b16 %v1932
  %v2216 = vunpack.c.l.b16 %v1933
  %v2217 = vunpack.c.l.b16 %v1934
  %v2218 = vunpack.c.l.b16 %v1935
  %v2219 = vunpack.c.l.b16 %v1936
  %v2220 = vunpack.c.l.b16 %v1937
  %v2221 = vunpack.c.l.b16 %v1938
  %v2222 = vunpack.c.l.b16 %v1939
  %v2223 = vunpack.c.l.b16 %v1940
  %v2224 = vunpack.c.l.b16 %v1941
  %v2225 = vunpack.c.l.b16 %v1942
  %v2226 = vunpack.c.l.b16 %v1943
  %v2227 = vunpack.c.l.b16 %v1944
  %v2228 = vunpack.c.l.b16 %v1945
  %v2229 = vunpack.c.l.b16 %v1946
  %v2230 = vunpack.c.l.b16 %v1947
  %v2231 = vunpack.c.l.b16 %v1948
  %v2232 = vunpack.c.l.b16 %v1949
  %v2233 = vunpack.c.l.b16 %v1950
  %v2234 = vunpack.c.l.b16 %v1951
  %v2235 = vunpack.c.l.b16 %v1952
  %v2236 = vunpack.c.l.b16 %v1953
  %v2237 = vunpack.c.l.b16 %v1954
  %v2238 = vunpack.c.l.b16 %v1955
  %v2239 = vunpack.c.l.b16 %v1956
  %v2240 = vunpack.c.l.b16 %v1957
  %v2241 = vunpack.c.l.b16 %v1958
  %v2242 = vunpack.c.l.b16 %v1959
  %v2243 = vunpack.c.l.b16 %v1960
  %v2244 = vunpack.c.l.b16 %v1961
  %v2245 = vunpack.c.l.b16 %v1962
  %v2246 = vunpack.c.l.b16 %v1963
  %v2247 = vunpack.c.l.b16 %v1964
  %v2248 = vunpack.c.l.b16 %v1965
  %v2249 = vunpack.c.l.b16 %v1966
  %v2250 = vunpack.c.l.b16 %v1967
  %v2251 = vunpack.c.l.b16 %v1968
  %v2252 = vunpack.c.l.b16 %v1969
  %v2253 = vunpack.c.l.b16 %v1970
  %v2254 = vunpack.c.l.b16 %v1971
  %v2255 = vunpack.c.l.b16 %v1972
  %v2256 = vunpack.c.l.b16 %v1973
  %v2257 = vunpack.c.l.b16 %v1974
  %v2258 = vunpack.c.l.b16 %v1975
  %v2259 = vunpack.c.l.b16 %v1976
  %v2260 = vunpack.c.l.b16 %v1977
  %v2261 = vunpack.c.l.b16 %v1978
  %v2262 = vunpack.c.l.b16 %v1979
  %v2263 = vunpack.c.l.b16 %v1980
  %v2264 = vunpack.c.l.b16 %v1981
  %v2265 = vunpack.c.l.b16 %v1982
  %v2266 = vunpack.c.l.b16 %v1983
  %v2267 = vunpack.c.l.b16 %v1984
  %v2268 = vunpack.c.l.b16 %v1985
  %v2269 = vunpack.c.l.b16 %v1986
  %v2270 = vunpack.c.l.b16 %v1987
  %v2271 = vunpack.c.l.b16 %v1988
  %v2272 = vunpack.c.l.b16 %v1989
  %v2273 = vunpack.c.l.b16 %v1990
  %v2274 = vunpack.c.l.b16 %v1991
  %v2275 = vunpack.c.l.b16 %v1992
  %v2276 = vunpack.c.l.b16 %v1993
  %v2277 = vunpack.c.l.b16 %v1994
  %v2278 = vunpack.c.l.b16 %v1995
  %v2279 = vunpack.c.l.b16 %v1996
  %v2280 = vunpack.c.l.b16 %v1997
  %v2281 = vunpack.c.l.b16 %v1998
  %v2282 = vunpack.c.l.b16 %v1999
  %v2283 = vunpack.c.l.b16 %v2000
  %v2284 = vunpack.c.l.b16 %v2001
  %v2285 = vunpack.c.l.b16 %v2002
  %v2286 = vunpack.c.l.b16 %v2003
  %v2287 = vunpack.c.l.b16 %v2004
  %v2288 = vunpack.c.l.b16 %v2005
  %v2289 = vunpack.c.l.b16 %v2006
  %v2290 = vunpack.c.l.b16 %v2007
  %v2291 = vunpack.c.l.b16 %v2008
  %v2292 = vunpack.c.l.b16 %v2009
  %v2293 = vunpack.c.l.b16 %v2010
  %v2294 = vunpack.c.l.b16 %v2011
  %v2295 = vunpack.c.l.b16 %v2012
  %v2296 = vunpack.c.l.b16 %v2013
  %v2297 = vunpack.c.l.b16 %v2014
  %v2298 = vunpack.c.l.b16 %v2015
  %v2299 = vunpack.c.l.b16 %v2016
  %v2300 = vunpack.c.l.b16 %v2017
  %v2301 = vunpack.c.l.b16 %v2018
  %v2302 = vunpack.c.l.b16 %v2019
  %v2303 = vunpack.c.l.b16 %v2020
  %v2304 = vunpack.c.l.b16 %v2021
  %v2305 = vunpack.c.l.b16 %v2022
  %v2306 = vunpack.c.l.b16 %v2023
  %v2307 = vunpack.c.l.b16 %v2024
  %v2308 = vunpack.c.l.b16 %v2025
  %v2309 = vunpack.c.l.b16 %v2026
  %v2310 = vunpack.c.l.b16 %v2027
  %v2311 = vunpack.c.l.b16 %v2028
  %v2312 = vunpack.c.l.b16 %v2029
  %v2313 = vunpack.c.l.b16 %v2030
  %v2314 = vunpack.c.l.b16 %v2031
  %v2315 = vunpack.c.l.b16 %v2032
  %v2316 = vunpack.c.l.b16 %v2033
  %v2317 = vunpack.c.l.b16 %v2034
  %v2318 = vunpack.c.l.b16 %v2035
  %v2319 = vunpack.c.l.b16 %v2036
  %v2320 = vunpack.c.l.b16 %v2037
  %v2321 = vunpack.c.l.b16 %v2038
  %v2322 = vunpack.c.l.b16 %v2039
  %v2323 = vunpack.c.l.b16 %v2040
  %v2324 = vunpack.c.l.b16 %v2041
  %v2325 = vunpack.c.l.b16 %v2042
  %v2326 = vunpack.c.l.b16 %v2043
  %v2327 = vunpack.c.l.b16 %v2044
  %v2328 = vunpack.c.l.b16 %v2045
  %v2329 = vunpack.c.l.b16 %v2046
  %v2330 = vunpack.c.l.b16 %v2047
  %v2331 = vunpack.c.l.b16 %v2048
  %v2332 = vunpack.c.l.b16 %v2049
  %v2333 = vunpack.c.l.b16 %v2050
  %v2334 = vunpack.c.l.b16 %v2051
  %v2335 = vunpack.c.l.b16 %v2052
  %v2336 = vunpack.c.l.b16 %v2053
  %v2337 = vunpack.c.l.b16 %v2054
  %v2338 = vunpack.c.l.b16 %v2055
  %v2339 = vpack.c.b16 %v2200, %v2199
  %v2340 = vpack.c.b16 %v2202, %v2201
  %v2341 = vpack.c.b16 %v2204, %v2203
  %v2342 = vpack.c.b16 %v2206, %v2205
  %v2343 = vpack.c.b16 %v2208, %v2207
  %v2344 = vpack.c.b16 %v2210, %v2209
  %v2345 = vpack.c.b16 %v2212, %v2211
  %v2346 = vpack.c.b16 %v2214, %v2213
  %v2347 = vpack.c.b16 %v2216, %v2215
  %v2348 = vpack.c.b16 %v2218, %v2217
  %v2349 = vpack.c.b16 %v2220, %v2219
  %v2350 = vpack.c.b16 %v2222, %v2221
  %v2351 = vpack.c.b16 %v2224, %v2223
  %v2352 = vpack.c.b16 %v2226, %v2225
  %v2353 = vpack.c.b16 %v2228, %v2227
  %v2354 = vpack.c.b16 %v2230, %v2229
  %v2355 = vpack.c.b16 %v2232, %v2231
  %v2356 = vpack.c.b16 %v2234, %v2233
  %v2357 = vpack.c.b16 %v2236, %v2235
  %v2358 = vpack.c.b16 %v2238, %v2237
  %v2359 = vpack.c.b16 %v2240, %v2239
  %v2360 = vpack.c.b16 %v2242, %v2241
  %v2361 = vpack.c.b16 %v2244, %v2243
  %v2362 = vpack.c.b16 %v2246, %v2245
  %v2363 = vpack.c.b16 %v2248, %v2247
  %v2364 = vpack.c.b16 %v2250, %v2249
  %v2365 = vpack.c.b16 %v2252, %v2251
  %v2366 = vpack.c.b16 %v2254, %v2253
  %v2367 = vpack.c.b16 %v2256, %v2255
  %v2368 = vpack.c.b16 %v2258, %v2257
  %v2369 = vpack.c.b16 %v2260, %v2259
  %v2370 = vpack.c.b16 %v2262, %v2261
  %v2371 = vpack.c.b16 %v2264, %v2263
  %v2372 = vpack.c.b16 %v2266, %v2265
  %v2373 = vpack.c.b16 %v2268, %v2267
  %v2374 = vpack.c.b16 %v2270, %v2269
  %v2375 = vpack.c.b16 %v2272, %v2271
  %v2376 = vpack.c.b16 %v2274, %v2273
  %v2377 = vpack.c.b16 %v2276, %v2275
  %v2378 = vpack.c.b16 %v2278, %v2277
  %v2379 = vpack.c.b16 %v2280, %v2279
  %v2380 = vpack.c.b16 %v2282, %v2281
  %v2381 = vpack.c.b16 %v2284, %v2283
  %v2382 = vpack.c.b16 %v2286, %v2285
  %v2383 = vpack.c.b16 %v2288, %v2287
  %v2384 = vpack.c.b16 %v2290, %v2289
  %v2385 = vpack.c.b16 %v2292, %v2291
  %v2386 = vpack.c.b16 %v2294, %v2293
  %v2387 = vpack.c.b16 %v2296, %v2295
  %v2388 = vpack.c.b16 %v2298, %v2297
  %v2389 = vpack.c.b16 %v2300, %v2299
  %v2390 = vpack.c.b16 %v2302, %v2301
  %v2391 = vpack.c.b16 %v2304, %v2303
  %v2392 = vpack.c.b16 %v2306, %v2305
  %v2393 = vpack.c.b16 %v2308, %v2307
  %v2394 = vpack.c.b16 %v2310, %v2309
  %v2395 = vpack.c.b16 %v2312, %v2311
  %v2396 = vpack.c.b16 %v2314, %v2313
  %v2397 = vpack.c.b16 %v2316, %v2315
  %v2398 = vpack.c.b16 %v2318, %v2317
  %v2399 = vpack.c.b16 %v2320, %v2319
  %v2400 = vpack.c.b16 %v2322, %v2321
  %v2401 = vpack.c.b16 %v2324, %v2323
  %v2402 = vpack.c.b16 %v2326, %v2325
  %v2403 = vpack.c.b16 %v2328, %v2327
  %v2404 = vpack.c.b16 %v2330, %v2329
  %v2405 = vpack.c.b16 %v2332, %v2331
  %v2406 = vpack.c.b16 %v2334, %v2333
  %v2407 = vpack.c.b16 %v2336, %v2335
  %v2408 = vpack.c.b16 %v2338, %v2337
  %v2411 = vunpack.c.l.b16 %v2057
  %v2412 = vunpack.c.l.b16 %v2058
  %v2413 = vpack.c.b16 %v2412, %v2411
  %v2415 = vsel %vm523, %v2339, 0
  %v2418 = vsel %vm523, %v2340, 0
  %v2421 = vsel %vm523, %v2341, 0
  %v2424 = vsel %vm523, %v2342, 0
  %v2427 = vsel %vm523, %v2343, 0
  %v2430 = vsel %vm523, %v2344, 0
  %v2433 = vsel %vm523, %v2345, 0
  %v2436 = vsel %vm523, %v2346, 0
  %v2439 = vsel %vm523, %v2347, 0
  %v2442 = vsel %vm523, %v2348, 0
  %v2445 = vsel %vm523, %v2349, 0
  %v2448 = vsel %vm523, %v2350, 0
  %v2451 = vsel %vm523, %v2351, 0
  %v2454 = vsel %vm523, %v2352, 0
  %v2457 = vsel %vm523, %v2353, 0
  %v2460 = vsel %vm523, %v2354, 0
  %v2463 = vsel %vm523, %v2355, 0
  %v2466 = vsel %vm523, %v2356, 0
  %v2469 = vsel %vm523, %v2357, 0
  %v2472 = vsel %vm523, %v2358, 0
  %v2475 = vsel %vm523, %v2359, 0
  %v2478 = vsel %vm523, %v2360, 0
  %v2481 = vsel %vm523, %v2361, 0
  %v2484 = vsel %vm523, %v2362, 0
  %v2487 = vsel %vm523, %v2363, 0
  %v2490 = vsel %vm523, %v2364, 0
  %v2493 = vsel %vm523, %v2365, 0
  %v2496 = vsel %vm523, %v2366, 0
  %v2499 = vsel %vm523, %v2367, 0
  %v2502 = vsel %vm523, %v2368, 0
  %v2505 = vsel %vm523, %v2369, 0
  %v2508 = vsel %vm523, %v2370, 0
  %v2511 = vsel %vm523, %v2371, 0
  %v2514 = vsel %vm523, %v2372, 0
  %v2517 = vsel %vm523, %v2373, 0
  %v2520 = vsel %vm523, %v2374, 0
  %v2523 = vsel %vm523, %v2375, 0
  %v2526 = vsel %vm523, %v2376, 0
  %v2529 = vsel %vm523, %v2377, 0
  %v2532 = vsel %vm523, %v2378, 0
  %v2535 = vsel %vm523, %v2379, 0
  %v2538 = vsel %vm523, %v2380, 0
  %v2541 = vsel %vm523, %v2381, 0
  %v2544 = vsel %vm523, %v2382, 0
  %v2547 = vsel %vm523, %v2383, 0
  %v2550 = vsel %vm523, %v2384, 0
  %v2553 = vsel %vm523, %v2385, 0
  %v2556 = vsel %vm523, %v2386, 0
  %v2559 = vsel %vm523, %v2387, 0
  %v2562 = vsel %vm523, %v2388, 0
  %v2565 = vsel %vm523, %v2389, 0
  %v2568 = vsel %vm523, %v2390, 0
  %v2571 = vsel %vm523, %v2391, 0
  %v2574 = vsel %vm523, %v2392, 0
  %v2577 = vsel %vm523, %v2393, 0
  %v2580 = vsel %vm523, %v2394, 0
  %v2583 = vsel %vm523, %v2395, 0
  %v2586 = vsel %vm523, %v2396, 0
  %v2589 = vsel %vm523, %v2397, 0
  %v2592 = vsel %vm523, %v2398, 0
  %v2595 = vsel %vm523, %v2399, 0
  %v2598 = vsel %vm523, %v2400, 0
  %v2601 = vsel %vm523, %v2401, 0
  %v2604 = vsel %vm523, %v2402, 0
  %v2607 = vsel %vm523, %v2403, 0
  %v2610 = vsel %vm523, %v2404, 0
  %v2613 = vsel %vm523, %v2405, 0
  %v2616 = vsel %vm523, %v2406, 0
  %v2619 = vsel %vm523, %v2407, 0
  %v2622 = vsel %vm523, %v2408, 0
  %v2625 = vsel %vm734, %v2413, 0
  %2627 = vmatprep.subr.bf16.mxu0 0
  %2628 = vmatpush1.bf16.msra.mxu0 0
  %2629 = vmatprep.subr.bf16.mxu0 0
  %2630 = vmatpush1.bf16.msra.mxu0 0
  %2631 = vmatprep.subr.bf16.mxu0 0
  %2632 = vmatpush1.bf16.msra.mxu0 0
  %2633 = vmatprep.subr.bf16.mxu0 0
  %2634 = vmatpush1.bf16.msra.mxu0 0
  %2635 = vmatprep.subr.bf16.mxu0 0
  %2636 = vmatpush1.bf16.msra.mxu0 0
  %2637 = vmatprep.subr.bf16.mxu0 0
  %2638 = vmatpush1.bf16.msra.mxu0 0
  %2639 = vmatprep.subr.bf16.mxu0 0
  %2640 = vmatpush1.bf16.msra.mxu0 0
  %2641 = vmatprep.subr.bf16.mxu0 0
  %2642 = vmatpush1.bf16.msra.mxu0 %v2625
  %2643 = vmatprep.subr.bf16.mxu0 0
  %2644 = vmatpush2.bf16.msra.mxu0 0
  %2645 = vmatprep.subr.bf16.mxu0 0
  %2646 = vmatpush2.bf16.msra.mxu0 0
  %2647 = vmatprep.subr.bf16.mxu0 0
  %2648 = vmatpush2.bf16.msra.mxu0 0
  %2649 = vmatprep.subr.bf16.mxu0 0
  %2650 = vmatpush2.bf16.msra.mxu0 0
  %2651 = vmatprep.subr.bf16.mxu0 0
  %2652 = vmatpush2.bf16.msra.mxu0 0
  %2653 = vmatprep.subr.bf16.mxu0 0
  %2654 = vmatpush2.bf16.msra.mxu0 0
  %2655 = vmatprep.subr.bf16.mxu0 0
  %2656 = vmatpush2.bf16.msra.mxu0 0
  %2657 = vmatprep.subr.bf16.mxu0 0
  %2658 = vmatpush2.bf16.msra.mxu0 0
  %2659 = vmatprep.mubr.bf16.mxu0 0
  %2660 = vmatmul.mubr.bf16.gmra.mxu0 %v2415
  %v2661 = vpop.f32.mrf.mxu0
  %v2662 = vadd.f32 0.0, %v2661
  %v2663 = vpop.f32.mrf.mxu0
  %v2664 = vpop.f32.mrf.mxu0
  %v2665 = vadd.f32 0.0, %v2664
  %v2666 = vpop.f32.mrf.mxu0
  %2667 = vmatprep.mubr.bf16.mxu0 0
  %2668 = vmatmul.mubr.bf16.gmra.mxu0 %v2418
  %v2669 = vpop.f32.mrf.mxu0
  %v2670 = vadd.f32 0.0, %v2669
  %v2671 = vpop.f32.mrf.mxu0
  %v2672 = vpop.f32.mrf.mxu0
  %v2673 = vadd.f32 0.0, %v2672
  %v2674 = vpop.f32.mrf.mxu0
  %2675 = vmatprep.mubr.bf16.mxu0 0
  %2676 = vmatmul.mubr.bf16.gmra.mxu0 %v2421
  %v2677 = vpop.f32.mrf.mxu0
  %v2678 = vadd.f32 0.0, %v2677
  %v2679 = vpop.f32.mrf.mxu0
  %v2680 = vpop.f32.mrf.mxu0
  %v2681 = vadd.f32 0.0, %v2680
  %v2682 = vpop.f32.mrf.mxu0
  %2683 = vmatprep.mubr.bf16.mxu0 0
  %2684 = vmatmul.mubr.bf16.gmra.mxu0 %v2424
  %v2685 = vpop.f32.mrf.mxu0
  %v2686 = vadd.f32 0.0, %v2685
  %v2687 = vpop.f32.mrf.mxu0
  %v2688 = vpop.f32.mrf.mxu0
  %v2689 = vadd.f32 0.0, %v2688
  %v2690 = vpop.f32.mrf.mxu0
  %2691 = vmatprep.mubr.bf16.mxu0 0
  %2692 = vmatmul.mubr.bf16.gmra.mxu0 %v2427
  %v2693 = vpop.f32.mrf.mxu0
  %v2694 = vadd.f32 0.0, %v2693
  %v2695 = vpop.f32.mrf.mxu0
  %v2696 = vpop.f32.mrf.mxu0
  %v2697 = vadd.f32 0.0, %v2696
  %v2698 = vpop.f32.mrf.mxu0
  %2699 = vmatprep.mubr.bf16.mxu0 0
  %2700 = vmatmul.mubr.bf16.gmra.mxu0 %v2430
  %v2701 = vpop.f32.mrf.mxu0
  %v2702 = vadd.f32 0.0, %v2701
  %v2703 = vpop.f32.mrf.mxu0
  %v2704 = vpop.f32.mrf.mxu0
  %v2705 = vadd.f32 0.0, %v2704
  %v2706 = vpop.f32.mrf.mxu0
  %2707 = vmatprep.mubr.bf16.mxu0 0
  %2708 = vmatmul.mubr.bf16.gmra.mxu0 %v2433
  %v2709 = vpop.f32.mrf.mxu0
  %v2710 = vadd.f32 0.0, %v2709
  %v2711 = vpop.f32.mrf.mxu0
  %v2712 = vpop.f32.mrf.mxu0
  %v2713 = vadd.f32 0.0, %v2712
  %v2714 = vpop.f32.mrf.mxu0
  %2715 = vmatprep.mubr.bf16.mxu0 0
  %2716 = vmatmul.mubr.bf16.gmra.mxu0 %v2436
  %v2717 = vpop.f32.mrf.mxu0
  %v2718 = vadd.f32 0.0, %v2717
  %v2719 = vpop.f32.mrf.mxu0
  %v2720 = vpop.f32.mrf.mxu0
  %v2721 = vadd.f32 0.0, %v2720
  %v2722 = vpop.f32.mrf.mxu0
  %2723 = vmatprep.mubr.bf16.mxu0 0
  %2724 = vmatmul.mubr.bf16.gmra.mxu0 %v2439
  %v2725 = vpop.f32.mrf.mxu0
  %v2726 = vadd.f32 0.0, %v2725
  %v2727 = vpop.f32.mrf.mxu0
  %v2728 = vpop.f32.mrf.mxu0
  %v2729 = vadd.f32 0.0, %v2728
  %v2730 = vpop.f32.mrf.mxu0
  %2731 = vmatprep.mubr.bf16.mxu0 0
  %2732 = vmatmul.mubr.bf16.gmra.mxu0 %v2442
  %v2733 = vpop.f32.mrf.mxu0
  %v2734 = vadd.f32 0.0, %v2733
  %v2735 = vpop.f32.mrf.mxu0
  %v2736 = vpop.f32.mrf.mxu0
  %v2737 = vadd.f32 0.0, %v2736
  %v2738 = vpop.f32.mrf.mxu0
  %2739 = vmatprep.mubr.bf16.mxu0 0
  %2740 = vmatmul.mubr.bf16.gmra.mxu0 %v2445
  %v2741 = vpop.f32.mrf.mxu0
  %v2742 = vadd.f32 0.0, %v2741
  %v2743 = vpop.f32.mrf.mxu0
  %v2744 = vpop.f32.mrf.mxu0
  %v2745 = vadd.f32 0.0, %v2744
  %v2746 = vpop.f32.mrf.mxu0
  %2747 = vmatprep.mubr.bf16.mxu0 0
  %2748 = vmatmul.mubr.bf16.gmra.mxu0 %v2448
  %v2749 = vpop.f32.mrf.mxu0
  %v2750 = vadd.f32 0.0, %v2749
  %v2751 = vpop.f32.mrf.mxu0
  %v2752 = vpop.f32.mrf.mxu0
  %v2753 = vadd.f32 0.0, %v2752
  %v2754 = vpop.f32.mrf.mxu0
  %2755 = vmatprep.mubr.bf16.mxu0 0
  %2756 = vmatmul.mubr.bf16.gmra.mxu0 %v2451
  %v2757 = vpop.f32.mrf.mxu0
  %v2758 = vadd.f32 0.0, %v2757
  %v2759 = vpop.f32.mrf.mxu0
  %v2760 = vpop.f32.mrf.mxu0
  %v2761 = vadd.f32 0.0, %v2760
  %v2762 = vpop.f32.mrf.mxu0
  %2763 = vmatprep.mubr.bf16.mxu0 0
  %2764 = vmatmul.mubr.bf16.gmra.mxu0 %v2454
  %v2765 = vpop.f32.mrf.mxu0
  %v2766 = vadd.f32 0.0, %v2765
  %v2767 = vpop.f32.mrf.mxu0
  %v2768 = vpop.f32.mrf.mxu0
  %v2769 = vadd.f32 0.0, %v2768
  %v2770 = vpop.f32.mrf.mxu0
  %2771 = vmatprep.mubr.bf16.mxu0 0
  %2772 = vmatmul.mubr.bf16.gmra.mxu0 %v2457
  %v2773 = vpop.f32.mrf.mxu0
  %v2774 = vadd.f32 0.0, %v2773
  %v2775 = vpop.f32.mrf.mxu0
  %v2776 = vpop.f32.mrf.mxu0
  %v2777 = vadd.f32 0.0, %v2776
  %v2778 = vpop.f32.mrf.mxu0
  %2779 = vmatprep.mubr.bf16.mxu0 0
  %2780 = vmatmul.mubr.bf16.gmra.mxu0 %v2460
  %v2781 = vpop.f32.mrf.mxu0
  %v2782 = vadd.f32 0.0, %v2781
  %v2783 = vpop.f32.mrf.mxu0
  %v2784 = vpop.f32.mrf.mxu0
  %v2785 = vadd.f32 0.0, %v2784
  %v2786 = vpop.f32.mrf.mxu0
  %2787 = vmatprep.mubr.bf16.mxu0 0
  %2788 = vmatmul.mubr.bf16.gmra.mxu0 %v2463
  %v2789 = vpop.f32.mrf.mxu0
  %v2790 = vpop.f32.mrf.mxu0
  %v2791 = vpop.f32.mrf.mxu0
  %v2792 = vpop.f32.mrf.mxu0
  %2793 = vmatprep.mubr.bf16.mxu0 0
  %2794 = vmatmul.mubr.bf16.gmra.mxu0 %v2466
  %v2795 = vpop.f32.mrf.mxu0
  %v2796 = vpop.f32.mrf.mxu0
  %v2797 = vpop.f32.mrf.mxu0
  %v2798 = vpop.f32.mrf.mxu0
  %2799 = vmatprep.mubr.bf16.mxu0 0
  %2800 = vmatmul.mubr.bf16.gmra.mxu0 %v2469
  %v2801 = vpop.f32.mrf.mxu0
  %v2802 = vadd.f32 0.0, %v2801
  %v2803 = vpop.f32.mrf.mxu0
  %v2804 = vpop.f32.mrf.mxu0
  %v2805 = vadd.f32 0.0, %v2804
  %v2806 = vpop.f32.mrf.mxu0
  %2807 = vmatprep.mubr.bf16.mxu0 0
  %2808 = vmatmul.mubr.bf16.gmra.mxu0 %v2472
  %v2809 = vpop.f32.mrf.mxu0
  %v2810 = vadd.f32 0.0, %v2809
  %v2811 = vpop.f32.mrf.mxu0
  %v2812 = vpop.f32.mrf.mxu0
  %v2813 = vadd.f32 0.0, %v2812
  %v2814 = vpop.f32.mrf.mxu0
  %2815 = vmatprep.mubr.bf16.mxu0 0
  %2816 = vmatmul.mubr.bf16.gmra.mxu0 %v2475
  %v2817 = vpop.f32.mrf.mxu0
  %v2818 = vadd.f32 0.0, %v2817
  %v2819 = vpop.f32.mrf.mxu0
  %v2820 = vpop.f32.mrf.mxu0
  %v2821 = vadd.f32 0.0, %v2820
  %v2822 = vpop.f32.mrf.mxu0
  %2823 = vmatprep.mubr.bf16.mxu0 0
  %2824 = vmatmul.mubr.bf16.gmra.mxu0 %v2478
  %v2825 = vpop.f32.mrf.mxu0
  %v2826 = vadd.f32 0.0, %v2825
  %v2827 = vpop.f32.mrf.mxu0
  %v2828 = vpop.f32.mrf.mxu0
  %v2829 = vadd.f32 0.0, %v2828
  %v2830 = vpop.f32.mrf.mxu0
  %2831 = vmatprep.mubr.bf16.mxu0 0
  %2832 = vmatmul.mubr.bf16.gmra.mxu0 %v2481
  %v2833 = vpop.f32.mrf.mxu0
  %v2834 = vadd.f32 0.0, %v2833
  %v2835 = vpop.f32.mrf.mxu0
  %v2836 = vpop.f32.mrf.mxu0
  %v2837 = vadd.f32 0.0, %v2836
  %v2838 = vpop.f32.mrf.mxu0
  %2839 = vmatprep.mubr.bf16.mxu0 0
  %2840 = vmatmul.mubr.bf16.gmra.mxu0 %v2484
  %v2841 = vpop.f32.mrf.mxu0
  %v2842 = vadd.f32 0.0, %v2841
  %v2843 = vpop.f32.mrf.mxu0
  %v2844 = vpop.f32.mrf.mxu0
  %v2845 = vadd.f32 0.0, %v2844
  %v2846 = vpop.f32.mrf.mxu0
  %2847 = vmatprep.mubr.bf16.mxu0 0
  %2848 = vmatmul.mubr.bf16.gmra.mxu0 %v2487
  %v2849 = vpop.f32.mrf.mxu0
  %v2850 = vadd.f32 0.0, %v2849
  %v2851 = vpop.f32.mrf.mxu0
  %v2852 = vpop.f32.mrf.mxu0
  %v2853 = vadd.f32 0.0, %v2852
  %v2854 = vpop.f32.mrf.mxu0
  %2855 = vmatprep.mubr.bf16.mxu0 0
  %2856 = vmatmul.mubr.bf16.gmra.mxu0 %v2490
  %v2857 = vpop.f32.mrf.mxu0
  %v2858 = vadd.f32 0.0, %v2857
  %v2859 = vpop.f32.mrf.mxu0
  %v2860 = vpop.f32.mrf.mxu0
  %v2861 = vadd.f32 0.0, %v2860
  %v2862 = vpop.f32.mrf.mxu0
  %2863 = vmatprep.mubr.bf16.mxu0 0
  %2864 = vmatmul.mubr.bf16.gmra.mxu0 %v2493
  %v2865 = vpop.f32.mrf.mxu0
  %v2866 = vadd.f32 0.0, %v2865
  %v2867 = vpop.f32.mrf.mxu0
  %v2868 = vpop.f32.mrf.mxu0
  %v2869 = vadd.f32 0.0, %v2868
  %v2870 = vpop.f32.mrf.mxu0
  %2871 = vmatprep.mubr.bf16.mxu0 0
  %2872 = vmatmul.mubr.bf16.gmra.mxu0 %v2496
  %v2873 = vpop.f32.mrf.mxu0
  %v2874 = vadd.f32 0.0, %v2873
  %v2875 = vpop.f32.mrf.mxu0
  %v2876 = vpop.f32.mrf.mxu0
  %v2877 = vadd.f32 0.0, %v2876
  %v2878 = vpop.f32.mrf.mxu0
  %2879 = vmatprep.mubr.bf16.mxu0 0
  %2880 = vmatmul.mubr.bf16.gmra.mxu0 %v2499
  %v2881 = vpop.f32.mrf.mxu0
  %v2882 = vadd.f32 0.0, %v2881
  %v2883 = vpop.f32.mrf.mxu0
  %v2884 = vpop.f32.mrf.mxu0
  %v2885 = vadd.f32 0.0, %v2884
  %v2886 = vpop.f32.mrf.mxu0
  %2887 = vmatprep.mubr.bf16.mxu0 0
  %2888 = vmatmul.mubr.bf16.gmra.mxu0 %v2502
  %v2889 = vpop.f32.mrf.mxu0
  %v2890 = vadd.f32 0.0, %v2889
  %v2891 = vpop.f32.mrf.mxu0
  %v2892 = vpop.f32.mrf.mxu0
  %v2893 = vadd.f32 0.0, %v2892
  %v2894 = vpop.f32.mrf.mxu0
  %2895 = vmatprep.mubr.bf16.mxu0 0
  %2896 = vmatmul.mubr.bf16.gmra.mxu0 %v2505
  %v2897 = vpop.f32.mrf.mxu0
  %v2898 = vadd.f32 0.0, %v2897
  %v2899 = vpop.f32.mrf.mxu0
  %v2900 = vpop.f32.mrf.mxu0
  %v2901 = vadd.f32 0.0, %v2900
  %v2902 = vpop.f32.mrf.mxu0
  %2903 = vmatprep.mubr.bf16.mxu0 0
  %2904 = vmatmul.mubr.bf16.gmra.mxu0 %v2508
  %v2905 = vpop.f32.mrf.mxu0
  %v2906 = vadd.f32 0.0, %v2905
  %v2907 = vpop.f32.mrf.mxu0
  %v2908 = vpop.f32.mrf.mxu0
  %v2909 = vadd.f32 0.0, %v2908
  %v2910 = vpop.f32.mrf.mxu0
  %2911 = vmatprep.mubr.bf16.mxu0 0
  %2912 = vmatmul.mubr.bf16.gmra.mxu0 %v2511
  %v2913 = vpop.f32.mrf.mxu0
  %v2914 = vadd.f32 0.0, %v2913
  %v2915 = vpop.f32.mrf.mxu0
  %v2916 = vpop.f32.mrf.mxu0
  %v2917 = vadd.f32 0.0, %v2916
  %v2918 = vpop.f32.mrf.mxu0
  %2919 = vmatprep.mubr.bf16.mxu0 0
  %2920 = vmatmul.mubr.bf16.gmra.mxu0 %v2514
  %v2921 = vpop.f32.mrf.mxu0
  %v2922 = vadd.f32 0.0, %v2921
  %v2923 = vpop.f32.mrf.mxu0
  %v2924 = vpop.f32.mrf.mxu0
  %v2925 = vadd.f32 0.0, %v2924
  %v2926 = vpop.f32.mrf.mxu0
  %2927 = vmatprep.mubr.bf16.mxu0 0
  %2928 = vmatmul.mubr.bf16.gmra.mxu0 %v2517
  %v2929 = vpop.f32.mrf.mxu0
  %v2930 = vpop.f32.mrf.mxu0
  %v2931 = vpop.f32.mrf.mxu0
  %v2932 = vpop.f32.mrf.mxu0
  %2933 = vmatprep.mubr.bf16.mxu0 0
  %2934 = vmatmul.mubr.bf16.gmra.mxu0 %v2520
  %v2935 = vpop.f32.mrf.mxu0
  %v2936 = vpop.f32.mrf.mxu0
  %v2937 = vpop.f32.mrf.mxu0
  %v2938 = vpop.f32.mrf.mxu0
  %2939 = vmatprep.mubr.bf16.mxu0 0
  %2940 = vmatmul.mubr.bf16.gmra.mxu0 %v2523
  %v2941 = vpop.f32.mrf.mxu0
  %v2942 = vadd.f32 0.0, %v2941
  %v2943 = vpop.f32.mrf.mxu0
  %v2944 = vpop.f32.mrf.mxu0
  %v2945 = vadd.f32 0.0, %v2944
  %v2946 = vpop.f32.mrf.mxu0
  %2947 = vmatprep.mubr.bf16.mxu0 0
  %2948 = vmatmul.mubr.bf16.gmra.mxu0 %v2526
  %v2949 = vpop.f32.mrf.mxu0
  %v2950 = vadd.f32 0.0, %v2949
  %v2951 = vpop.f32.mrf.mxu0
  %v2952 = vpop.f32.mrf.mxu0
  %v2953 = vadd.f32 0.0, %v2952
  %v2954 = vpop.f32.mrf.mxu0
  %2955 = vmatprep.mubr.bf16.mxu0 0
  %2956 = vmatmul.mubr.bf16.gmra.mxu0 %v2529
  %v2957 = vpop.f32.mrf.mxu0
  %v2958 = vadd.f32 0.0, %v2957
  %v2959 = vpop.f32.mrf.mxu0
  %v2960 = vpop.f32.mrf.mxu0
  %v2961 = vadd.f32 0.0, %v2960
  %v2962 = vpop.f32.mrf.mxu0
  %2963 = vmatprep.mubr.bf16.mxu0 0
  %2964 = vmatmul.mubr.bf16.gmra.mxu0 %v2532
  %v2965 = vpop.f32.mrf.mxu0
  %v2966 = vadd.f32 0.0, %v2965
  %v2967 = vpop.f32.mrf.mxu0
  %v2968 = vpop.f32.mrf.mxu0
  %v2969 = vadd.f32 0.0, %v2968
  %v2970 = vpop.f32.mrf.mxu0
  %2971 = vmatprep.mubr.bf16.mxu0 0
  %2972 = vmatmul.mubr.bf16.gmra.mxu0 %v2535
  %v2973 = vpop.f32.mrf.mxu0
  %v2974 = vadd.f32 0.0, %v2973
  %v2975 = vpop.f32.mrf.mxu0
  %v2976 = vpop.f32.mrf.mxu0
  %v2977 = vadd.f32 0.0, %v2976
  %v2978 = vpop.f32.mrf.mxu0
  %2979 = vmatprep.mubr.bf16.mxu0 0
  %2980 = vmatmul.mubr.bf16.gmra.mxu0 %v2538
  %v2981 = vpop.f32.mrf.mxu0
  %v2982 = vadd.f32 0.0, %v2981
  %v2983 = vpop.f32.mrf.mxu0
  %v2984 = vpop.f32.mrf.mxu0
  %v2985 = vadd.f32 0.0, %v2984
  %v2986 = vpop.f32.mrf.mxu0
  %2987 = vmatprep.mubr.bf16.mxu0 0
  %2988 = vmatmul.mubr.bf16.gmra.mxu0 %v2541
  %v2989 = vpop.f32.mrf.mxu0
  %v2990 = vadd.f32 0.0, %v2989
  %v2991 = vpop.f32.mrf.mxu0
  %v2992 = vpop.f32.mrf.mxu0
  %v2993 = vadd.f32 0.0, %v2992
  %v2994 = vpop.f32.mrf.mxu0
  %2995 = vmatprep.mubr.bf16.mxu0 0
  %2996 = vmatmul.mubr.bf16.gmra.mxu0 %v2544
  %v2997 = vpop.f32.mrf.mxu0
  %v2998 = vadd.f32 0.0, %v2997
  %v2999 = vpop.f32.mrf.mxu0
  %v3000 = vpop.f32.mrf.mxu0
  %v3001 = vadd.f32 0.0, %v3000
  %v3002 = vpop.f32.mrf.mxu0
  %3003 = vmatprep.mubr.bf16.mxu0 0
  %3004 = vmatmul.mubr.bf16.gmra.mxu0 %v2547
  %v3005 = vpop.f32.mrf.mxu0
  %v3006 = vadd.f32 0.0, %v3005
  %v3007 = vpop.f32.mrf.mxu0
  %v3008 = vpop.f32.mrf.mxu0
  %v3009 = vadd.f32 0.0, %v3008
  %v3010 = vpop.f32.mrf.mxu0
  %3011 = vmatprep.mubr.bf16.mxu0 0
  %3012 = vmatmul.mubr.bf16.gmra.mxu0 %v2550
  %v3013 = vpop.f32.mrf.mxu0
  %v3014 = vadd.f32 0.0, %v3013
  %v3015 = vpop.f32.mrf.mxu0
  %v3016 = vpop.f32.mrf.mxu0
  %v3017 = vadd.f32 0.0, %v3016
  %v3018 = vpop.f32.mrf.mxu0
  %3019 = vmatprep.mubr.bf16.mxu0 0
  %3020 = vmatmul.mubr.bf16.gmra.mxu0 %v2553
  %v3021 = vpop.f32.mrf.mxu0
  %v3022 = vadd.f32 0.0, %v3021
  %v3023 = vpop.f32.mrf.mxu0
  %v3024 = vpop.f32.mrf.mxu0
  %v3025 = vadd.f32 0.0, %v3024
  %v3026 = vpop.f32.mrf.mxu0
  %3027 = vmatprep.mubr.bf16.mxu0 0
  %3028 = vmatmul.mubr.bf16.gmra.mxu0 %v2556
  %v3029 = vpop.f32.mrf.mxu0
  %v3030 = vadd.f32 0.0, %v3029
  %v3031 = vpop.f32.mrf.mxu0
  %v3032 = vpop.f32.mrf.mxu0
  %v3033 = vadd.f32 0.0, %v3032
  %v3034 = vpop.f32.mrf.mxu0
  %3035 = vmatprep.mubr.bf16.mxu0 0
  %3036 = vmatmul.mubr.bf16.gmra.mxu0 %v2559
  %v3037 = vpop.f32.mrf.mxu0
  %v3038 = vadd.f32 0.0, %v3037
  %v3039 = vpop.f32.mrf.mxu0
  %v3040 = vpop.f32.mrf.mxu0
  %v3041 = vadd.f32 0.0, %v3040
  %v3042 = vpop.f32.mrf.mxu0
  %3043 = vmatprep.mubr.bf16.mxu0 0
  %3044 = vmatmul.mubr.bf16.gmra.mxu0 %v2562
  %v3045 = vpop.f32.mrf.mxu0
  %v3046 = vadd.f32 0.0, %v3045
  %v3047 = vpop.f32.mrf.mxu0
  %v3048 = vpop.f32.mrf.mxu0
  %v3049 = vadd.f32 0.0, %v3048
  %v3050 = vpop.f32.mrf.mxu0
  %3051 = vmatprep.mubr.bf16.mxu0 0
  %3052 = vmatmul.mubr.bf16.gmra.mxu0 %v2565
  %v3053 = vpop.f32.mrf.mxu0
  %v3054 = vadd.f32 0.0, %v3053
  %v3055 = vpop.f32.mrf.mxu0
  %v3056 = vpop.f32.mrf.mxu0
  %v3057 = vadd.f32 0.0, %v3056
  %v3058 = vpop.f32.mrf.mxu0
  %3059 = vmatprep.mubr.bf16.mxu0 0
  %3060 = vmatmul.mubr.bf16.gmra.mxu0 %v2568
  %v3061 = vpop.f32.mrf.mxu0
  %v3062 = vadd.f32 0.0, %v3061
  %v3063 = vpop.f32.mrf.mxu0
  %v3064 = vpop.f32.mrf.mxu0
  %v3065 = vadd.f32 0.0, %v3064
  %v3066 = vpop.f32.mrf.mxu0
  %3067 = vmatprep.mubr.bf16.mxu0 0
  %3068 = vmatmul.mubr.bf16.gmra.mxu0 %v2571
  %v3069 = vpop.f32.mrf.mxu0
  %v3070 = vpop.f32.mrf.mxu0
  %v3071 = vpop.f32.mrf.mxu0
  %v3072 = vpop.f32.mrf.mxu0
  %3073 = vmatprep.mubr.bf16.mxu0 0
  %3074 = vmatmul.mubr.bf16.gmra.mxu0 %v2574
  %v3075 = vpop.f32.mrf.mxu0
  %v3076 = vpop.f32.mrf.mxu0
  %v3077 = vpop.f32.mrf.mxu0
  %v3078 = vpop.f32.mrf.mxu0
  %3079 = vmatprep.mubr.bf16.mxu0 0
  %3080 = vmatmul.mubr.bf16.gmra.mxu0 %v2577
  %v3081 = vpop.f32.mrf.mxu0
  %v3082 = vadd.f32 0.0, %v3081
  %v3083 = vpop.f32.mrf.mxu0
  %v3084 = vpop.f32.mrf.mxu0
  %v3085 = vadd.f32 0.0, %v3084
  %v3086 = vpop.f32.mrf.mxu0
  %3087 = vmatprep.mubr.bf16.mxu0 0
  %3088 = vmatmul.mubr.bf16.gmra.mxu0 %v2580
  %v3089 = vpop.f32.mrf.mxu0
  %v3090 = vadd.f32 0.0, %v3089
  %v3091 = vpop.f32.mrf.mxu0
  %v3092 = vpop.f32.mrf.mxu0
  %v3093 = vadd.f32 0.0, %v3092
  %v3094 = vpop.f32.mrf.mxu0
  %3095 = vmatprep.mubr.bf16.mxu0 0
  %3096 = vmatmul.mubr.bf16.gmra.mxu0 %v2583
  %v3097 = vpop.f32.mrf.mxu0
  %v3098 = vadd.f32 0.0, %v3097
  %v3099 = vpop.f32.mrf.mxu0
  %v3100 = vpop.f32.mrf.mxu0
  %v3101 = vadd.f32 0.0, %v3100
  %v3102 = vpop.f32.mrf.mxu0
  %3103 = vmatprep.mubr.bf16.mxu0 0
  %3104 = vmatmul.mubr.bf16.gmra.mxu0 %v2586
  %v3105 = vpop.f32.mrf.mxu0
  %v3106 = vadd.f32 0.0, %v3105
  %v3107 = vpop.f32.mrf.mxu0
  %v3108 = vpop.f32.mrf.mxu0
  %v3109 = vadd.f32 0.0, %v3108
  %v3110 = vpop.f32.mrf.mxu0
  %3111 = vmatprep.mubr.bf16.mxu0 0
  %3112 = vmatmul.mubr.bf16.gmra.mxu0 %v2589
  %v3113 = vpop.f32.mrf.mxu0
  %v3114 = vadd.f32 0.0, %v3113
  %v3115 = vpop.f32.mrf.mxu0
  %v3116 = vpop.f32.mrf.mxu0
  %v3117 = vadd.f32 0.0, %v3116
  %v3118 = vpop.f32.mrf.mxu0
  %3119 = vmatprep.mubr.bf16.mxu0 0
  %3120 = vmatmul.mubr.bf16.gmra.mxu0 %v2592
  %v3121 = vpop.f32.mrf.mxu0
  %v3122 = vadd.f32 0.0, %v3121
  %v3123 = vpop.f32.mrf.mxu0
  %v3124 = vpop.f32.mrf.mxu0
  %v3125 = vadd.f32 0.0, %v3124
  %v3126 = vpop.f32.mrf.mxu0
  %3127 = vmatprep.mubr.bf16.mxu0 0
  %3128 = vmatmul.mubr.bf16.gmra.mxu0 %v2595
  %v3129 = vpop.f32.mrf.mxu0
  %v3130 = vadd.f32 0.0, %v3129
  %v3131 = vpop.f32.mrf.mxu0
  %v3132 = vpop.f32.mrf.mxu0
  %v3133 = vadd.f32 0.0, %v3132
  %v3134 = vpop.f32.mrf.mxu0
  %3135 = vmatprep.mubr.bf16.mxu0 0
  %3136 = vmatmul.mubr.bf16.gmra.mxu0 %v2598
  %v3137 = vpop.f32.mrf.mxu0
  %v3138 = vadd.f32 0.0, %v3137
  %v3139 = vpop.f32.mrf.mxu0
  %v3140 = vpop.f32.mrf.mxu0
  %v3141 = vadd.f32 0.0, %v3140
  %v3142 = vpop.f32.mrf.mxu0
  %3143 = vmatprep.mubr.bf16.mxu0 0
  %3144 = vmatmul.mubr.bf16.gmra.mxu0 %v2601
  %v3145 = vpop.f32.mrf.mxu0
  %v3146 = vadd.f32 0.0, %v3145
  %v3147 = vpop.f32.mrf.mxu0
  %v3148 = vpop.f32.mrf.mxu0
  %v3149 = vadd.f32 0.0, %v3148
  %v3150 = vpop.f32.mrf.mxu0
  %3151 = vmatprep.mubr.bf16.mxu0 0
  %3152 = vmatmul.mubr.bf16.gmra.mxu0 %v2604
  %v3153 = vpop.f32.mrf.mxu0
  %v3154 = vadd.f32 0.0, %v3153
  %v3155 = vpop.f32.mrf.mxu0
  %v3156 = vpop.f32.mrf.mxu0
  %v3157 = vadd.f32 0.0, %v3156
  %v3158 = vpop.f32.mrf.mxu0
  %3159 = vmatprep.mubr.bf16.mxu0 0
  %3160 = vmatmul.mubr.bf16.gmra.mxu0 %v2607
  %v3161 = vpop.f32.mrf.mxu0
  %v3162 = vadd.f32 0.0, %v3161
  %v3163 = vpop.f32.mrf.mxu0
  %v3164 = vpop.f32.mrf.mxu0
  %v3165 = vadd.f32 0.0, %v3164
  %v3166 = vpop.f32.mrf.mxu0
  %3167 = vmatprep.mubr.bf16.mxu0 0
  %3168 = vmatmul.mubr.bf16.gmra.mxu0 %v2610
  %v3169 = vpop.f32.mrf.mxu0
  %v3170 = vadd.f32 0.0, %v3169
  %v3171 = vpop.f32.mrf.mxu0
  %v3172 = vpop.f32.mrf.mxu0
  %v3173 = vadd.f32 0.0, %v3172
  %v3174 = vpop.f32.mrf.mxu0
  %3175 = vmatprep.mubr.bf16.mxu0 0
  %3176 = vmatmul.mubr.bf16.gmra.mxu0 %v2613
  %v3177 = vpop.f32.mrf.mxu0
  %v3178 = vadd.f32 0.0, %v3177
  %v3179 = vpop.f32.mrf.mxu0
  %v3180 = vpop.f32.mrf.mxu0
  %v3181 = vadd.f32 0.0, %v3180
  %v3182 = vpop.f32.mrf.mxu0
  %3183 = vmatprep.mubr.bf16.mxu0 0
  %3184 = vmatmul.mubr.bf16.gmra.mxu0 %v2616
  %v3185 = vpop.f32.mrf.mxu0
  %v3186 = vadd.f32 0.0, %v3185
  %v3187 = vpop.f32.mrf.mxu0
  %v3188 = vpop.f32.mrf.mxu0
  %v3189 = vadd.f32 0.0, %v3188
  %v3190 = vpop.f32.mrf.mxu0
  %3191 = vmatprep.mubr.bf16.mxu0 0
  %3192 = vmatmul.mubr.bf16.gmra.mxu0 %v2619
  %v3193 = vpop.f32.mrf.mxu0
  %v3194 = vadd.f32 0.0, %v3193
  %v3195 = vpop.f32.mrf.mxu0
  %v3196 = vpop.f32.mrf.mxu0
  %v3197 = vadd.f32 0.0, %v3196
  %v3198 = vpop.f32.mrf.mxu0
  %3199 = vmatprep.mubr.bf16.mxu0 0
  %3200 = vmatmul.mubr.bf16.gmra.mxu0 %v2622
  %v3201 = vpop.f32.mrf.mxu0
  %v3202 = vadd.f32 0.0, %v3201
  %v3203 = vpop.f32.mrf.mxu0
  %v3204 = vpop.f32.mrf.mxu0
  %v3205 = vadd.f32 0.0, %v3204
  %v3206 = vpop.f32.mrf.mxu0
  %3207 = vdwg.mxu0
  %v3208 = vadd.f32 %v1370, %v2662
  %v3209 = vadd.f32 %v1373, %v2665
  %v3210 = vadd.f32 %v1378, %v2670
  %v3211 = vadd.f32 %v1381, %v2673
  %v3212 = vadd.f32 %v1386, %v2678
  %v3213 = vadd.f32 %v1389, %v2681
  %v3214 = vadd.f32 %v1394, %v2686
  %v3215 = vadd.f32 %v1397, %v2689
  %v3216 = vadd.f32 %v1402, %v2694
  %v3217 = vadd.f32 %v1405, %v2697
  %v3218 = vadd.f32 %v1410, %v2702
  %v3219 = vadd.f32 %v1413, %v2705
  %v3220 = vadd.f32 %v1418, %v2710
  %v3221 = vadd.f32 %v1421, %v2713
  %v3222 = vadd.f32 %v1426, %v2718
  %v3223 = vadd.f32 %v1429, %v2721
  %v3224 = vadd.f32 %v1434, %v2726
  %v3225 = vadd.f32 %v1437, %v2729
  %v3226 = vadd.f32 %v1442, %v2734
  %v3227 = vadd.f32 %v1445, %v2737
  %v3228 = vadd.f32 %v1450, %v2742
  %v3229 = vadd.f32 %v1453, %v2745
  %v3230 = vadd.f32 %v1458, %v2750
  %v3231 = vadd.f32 %v1461, %v2753
  %v3232 = vadd.f32 %v1466, %v2758
  %v3233 = vadd.f32 %v1469, %v2761
  %v3234 = vadd.f32 %v1474, %v2766
  %v3235 = vadd.f32 %v1477, %v2769
  %v3236 = vadd.f32 %v1482, %v2774
  %v3237 = vadd.f32 %v1485, %v2777
  %v3238 = vadd.f32 %v1490, %v2782
  %v3239 = vadd.f32 %v1493, %v2785
  %v3240 = vadd.f32 %v1510, %v2802
  %v3241 = vadd.f32 %v1513, %v2805
  %v3242 = vadd.f32 %v1518, %v2810
  %v3243 = vadd.f32 %v1521, %v2813
  %v3244 = vadd.f32 %v1526, %v2818
  %v3245 = vadd.f32 %v1529, %v2821
  %v3246 = vadd.f32 %v1534, %v2826
  %v3247 = vadd.f32 %v1537, %v2829
  %v3248 = vadd.f32 %v1542, %v2834
  %v3249 = vadd.f32 %v1545, %v2837
  %v3250 = vadd.f32 %v1550, %v2842
  %v3251 = vadd.f32 %v1553, %v2845
  %v3252 = vadd.f32 %v1558, %v2850
  %v3253 = vadd.f32 %v1561, %v2853
  %v3254 = vadd.f32 %v1566, %v2858
  %v3255 = vadd.f32 %v1569, %v2861
  %v3256 = vadd.f32 %v1574, %v2866
  %v3257 = vadd.f32 %v1577, %v2869
  %v3258 = vadd.f32 %v1582, %v2874
  %v3259 = vadd.f32 %v1585, %v2877
  %v3260 = vadd.f32 %v1590, %v2882
  %v3261 = vadd.f32 %v1593, %v2885
  %v3262 = vadd.f32 %v1598, %v2890
  %v3263 = vadd.f32 %v1601, %v2893
  %v3264 = vadd.f32 %v1606, %v2898
  %v3265 = vadd.f32 %v1609, %v2901
  %v3266 = vadd.f32 %v1614, %v2906
  %v3267 = vadd.f32 %v1617, %v2909
  %v3268 = vadd.f32 %v1622, %v2914
  %v3269 = vadd.f32 %v1625, %v2917
  %v3270 = vadd.f32 %v1630, %v2922
  %v3271 = vadd.f32 %v1633, %v2925
  %v3272 = vadd.f32 %v1650, %v2942
  %v3273 = vadd.f32 %v1653, %v2945
  %v3274 = vadd.f32 %v1658, %v2950
  %v3275 = vadd.f32 %v1661, %v2953
  %v3276 = vadd.f32 %v1666, %v2958
  %v3277 = vadd.f32 %v1669, %v2961
  %v3278 = vadd.f32 %v1674, %v2966
  %v3279 = vadd.f32 %v1677, %v2969
  %v3280 = vadd.f32 %v1682, %v2974
  %v3281 = vadd.f32 %v1685, %v2977
  %v3282 = vadd.f32 %v1690, %v2982
  %v3283 = vadd.f32 %v1693, %v2985
  %v3284 = vadd.f32 %v1698, %v2990
  %v3285 = vadd.f32 %v1701, %v2993
  %v3286 = vadd.f32 %v1706, %v2998
  %v3287 = vadd.f32 %v1709, %v3001
  %v3288 = vadd.f32 %v1714, %v3006
  %v3289 = vadd.f32 %v1717, %v3009
  %v3290 = vadd.f32 %v1722, %v3014
  %v3291 = vadd.f32 %v1725, %v3017
  %v3292 = vadd.f32 %v1730, %v3022
  %v3293 = vadd.f32 %v1733, %v3025
  %v3294 = vadd.f32 %v1738, %v3030
  %v3295 = vadd.f32 %v1741, %v3033
  %v3296 = vadd.f32 %v1746, %v3038
  %v3297 = vadd.f32 %v1749, %v3041
  %v3298 = vadd.f32 %v1754, %v3046
  %v3299 = vadd.f32 %v1757, %v3049
  %v3300 = vadd.f32 %v1762, %v3054
  %v3301 = vadd.f32 %v1765, %v3057
  %v3302 = vadd.f32 %v1770, %v3062
  %v3303 = vadd.f32 %v1773, %v3065
  %v3304 = vadd.f32 %v1790, %v3082
  %v3305 = vadd.f32 %v1793, %v3085
  %v3306 = vadd.f32 %v1798, %v3090
  %v3307 = vadd.f32 %v1801, %v3093
  %v3308 = vadd.f32 %v1806, %v3098
  %v3309 = vadd.f32 %v1809, %v3101
  %v3310 = vadd.f32 %v1814, %v3106
  %v3311 = vadd.f32 %v1817, %v3109
  %v3312 = vadd.f32 %v1822, %v3114
  %v3313 = vadd.f32 %v1825, %v3117
  %v3314 = vadd.f32 %v1830, %v3122
  %v3315 = vadd.f32 %v1833, %v3125
  %v3316 = vadd.f32 %v1838, %v3130
  %v3317 = vadd.f32 %v1841, %v3133
  %v3318 = vadd.f32 %v1846, %v3138
  %v3319 = vadd.f32 %v1849, %v3141
  %v3320 = vadd.f32 %v1854, %v3146
  %v3321 = vadd.f32 %v1857, %v3149
  %v3322 = vadd.f32 %v1862, %v3154
  %v3323 = vadd.f32 %v1865, %v3157
  %v3324 = vadd.f32 %v1870, %v3162
  %v3325 = vadd.f32 %v1873, %v3165
  %v3326 = vadd.f32 %v1878, %v3170
  %v3327 = vadd.f32 %v1881, %v3173
  %v3328 = vadd.f32 %v1886, %v3178
  %v3329 = vadd.f32 %v1889, %v3181
  %v3330 = vadd.f32 %v1894, %v3186
  %v3331 = vadd.f32 %v1897, %v3189
  %v3332 = vadd.f32 %v1902, %v3194
  %v3333 = vadd.f32 %v1905, %v3197
  %v3334 = vadd.f32 %v1910, %v3202
  %v3335 = vadd.f32 %v1913, %v3205
  %v3336 = vld [vmem:[%s2] sm:$0x1]
  %v3338 = vlaneseq
  %v3339 = vshrl.u32 %v3338, 7
  %v3340 = vsub.s32 0, %v3339
  %v3341 = vrot.slane %v3336, %v3340
  %v3343 = vadd.f32 %v3208, %v3341
  %v3344 = vadd.f32 %v3209, %v3341
  %v3345 = vadd.f32 %v3210, %v3341
  %v3346 = vadd.f32 %v3211, %v3341
  %v3347 = vadd.f32 %v3212, %v3341
  %v3348 = vadd.f32 %v3213, %v3341
  %v3349 = vadd.f32 %v3214, %v3341
  %v3350 = vadd.f32 %v3215, %v3341
  %v3351 = vadd.f32 %v3216, %v3341
  %v3352 = vadd.f32 %v3217, %v3341
  %v3353 = vadd.f32 %v3218, %v3341
  %v3354 = vadd.f32 %v3219, %v3341
  %v3355 = vadd.f32 %v3220, %v3341
  %v3356 = vadd.f32 %v3221, %v3341
  %v3357 = vadd.f32 %v3222, %v3341
  %v3358 = vadd.f32 %v3223, %v3341
  %v3359 = vadd.f32 %v3224, %v3341
  %v3360 = vadd.f32 %v3225, %v3341
  %v3361 = vadd.f32 %v3226, %v3341
  %v3362 = vadd.f32 %v3227, %v3341
  %v3363 = vadd.f32 %v3228, %v3341
  %v3364 = vadd.f32 %v3229, %v3341
  %v3365 = vadd.f32 %v3230, %v3341
  %v3366 = vadd.f32 %v3231, %v3341
  %v3367 = vadd.f32 %v3232, %v3341
  %v3368 = vadd.f32 %v3233, %v3341
  %v3369 = vadd.f32 %v3234, %v3341
  %v3370 = vadd.f32 %v3235, %v3341
  %v3371 = vadd.f32 %v3236, %v3341
  %v3372 = vadd.f32 %v3237, %v3341
  %v3373 = vadd.f32 %v3238, %v3341
  %v3374 = vadd.f32 %v3239, %v3341
  %v3375 = vadd.f32 %v3240, %v3341
  %v3376 = vadd.f32 %v3241, %v3341
  %v3377 = vadd.f32 %v3242, %v3341
  %v3378 = vadd.f32 %v3243, %v3341
  %v3379 = vadd.f32 %v3244, %v3341
  %v3380 = vadd.f32 %v3245, %v3341
  %v3381 = vadd.f32 %v3246, %v3341
  %v3382 = vadd.f32 %v3247, %v3341
  %v3383 = vadd.f32 %v3248, %v3341
  %v3384 = vadd.f32 %v3249, %v3341
  %v3385 = vadd.f32 %v3250, %v3341
  %v3386 = vadd.f32 %v3251, %v3341
  %v3387 = vadd.f32 %v3252, %v3341
  %v3388 = vadd.f32 %v3253, %v3341
  %v3389 = vadd.f32 %v3254, %v3341
  %v3390 = vadd.f32 %v3255, %v3341
  %v3391 = vadd.f32 %v3256, %v3341
  %v3392 = vadd.f32 %v3257, %v3341
  %v3393 = vadd.f32 %v3258, %v3341
  %v3394 = vadd.f32 %v3259, %v3341
  %v3395 = vadd.f32 %v3260, %v3341
  %v3396 = vadd.f32 %v3261, %v3341
  %v3397 = vadd.f32 %v3262, %v3341
  %v3398 = vadd.f32 %v3263, %v3341
  %v3399 = vadd.f32 %v3264, %v3341
  %v3400 = vadd.f32 %v3265, %v3341
  %v3401 = vadd.f32 %v3266, %v3341
  %v3402 = vadd.f32 %v3267, %v3341
  %v3403 = vadd.f32 %v3268, %v3341
  %v3404 = vadd.f32 %v3269, %v3341
  %v3405 = vadd.f32 %v3270, %v3341
  %v3406 = vadd.f32 %v3271, %v3341
  %v3407 = vadd.f32 %v3272, %v3341
  %v3408 = vadd.f32 %v3273, %v3341
  %v3409 = vadd.f32 %v3274, %v3341
  %v3410 = vadd.f32 %v3275, %v3341
  %v3411 = vadd.f32 %v3276, %v3341
  %v3412 = vadd.f32 %v3277, %v3341
  %v3413 = vadd.f32 %v3278, %v3341
  %v3414 = vadd.f32 %v3279, %v3341
  %v3415 = vadd.f32 %v3280, %v3341
  %v3416 = vadd.f32 %v3281, %v3341
  %v3417 = vadd.f32 %v3282, %v3341
  %v3418 = vadd.f32 %v3283, %v3341
  %v3419 = vadd.f32 %v3284, %v3341
  %v3420 = vadd.f32 %v3285, %v3341
  %v3421 = vadd.f32 %v3286, %v3341
  %v3422 = vadd.f32 %v3287, %v3341
  %v3423 = vadd.f32 %v3288, %v3341
  %v3424 = vadd.f32 %v3289, %v3341
  %v3425 = vadd.f32 %v3290, %v3341
  %v3426 = vadd.f32 %v3291, %v3341
  %v3427 = vadd.f32 %v3292, %v3341
  %v3428 = vadd.f32 %v3293, %v3341
  %v3429 = vadd.f32 %v3294, %v3341
  %v3430 = vadd.f32 %v3295, %v3341
  %v3431 = vadd.f32 %v3296, %v3341
  %v3432 = vadd.f32 %v3297, %v3341
  %v3433 = vadd.f32 %v3298, %v3341
  %v3434 = vadd.f32 %v3299, %v3341
  %v3435 = vadd.f32 %v3300, %v3341
  %v3436 = vadd.f32 %v3301, %v3341
  %v3437 = vadd.f32 %v3302, %v3341
  %v3438 = vadd.f32 %v3303, %v3341
  %v3439 = vadd.f32 %v3304, %v3341
  %v3440 = vadd.f32 %v3305, %v3341
  %v3441 = vadd.f32 %v3306, %v3341
  %v3442 = vadd.f32 %v3307, %v3341
  %v3443 = vadd.f32 %v3308, %v3341
  %v3444 = vadd.f32 %v3309, %v3341
  %v3445 = vadd.f32 %v3310, %v3341
  %v3446 = vadd.f32 %v3311, %v3341
  %v3447 = vadd.f32 %v3312, %v3341
  %v3448 = vadd.f32 %v3313, %v3341
  %v3449 = vadd.f32 %v3314, %v3341
  %v3450 = vadd.f32 %v3315, %v3341
  %v3451 = vadd.f32 %v3316, %v3341
  %v3452 = vadd.f32 %v3317, %v3341
  %v3453 = vadd.f32 %v3318, %v3341
  %v3454 = vadd.f32 %v3319, %v3341
  %v3455 = vadd.f32 %v3320, %v3341
  %v3456 = vadd.f32 %v3321, %v3341
  %v3457 = vadd.f32 %v3322, %v3341
  %v3458 = vadd.f32 %v3323, %v3341
  %v3459 = vadd.f32 %v3324, %v3341
  %v3460 = vadd.f32 %v3325, %v3341
  %v3461 = vadd.f32 %v3326, %v3341
  %v3462 = vadd.f32 %v3327, %v3341
  %v3463 = vadd.f32 %v3328, %v3341
  %v3464 = vadd.f32 %v3329, %v3341
  %v3465 = vadd.f32 %v3330, %v3341
  %v3466 = vadd.f32 %v3331, %v3341
  %v3467 = vadd.f32 %v3332, %v3341
  %v3468 = vadd.f32 %v3333, %v3341
  %v3469 = vadd.f32 %v3334, %v3341
  %v3470 = vadd.f32 %v3335, %v3341
  %v3471 = vmax.f32 %v3343, 0.0
  %v3472 = vmax.f32 %v3344, 0.0
  %v3473 = vmax.f32 %v3345, 0.0
  %v3474 = vmax.f32 %v3346, 0.0
  %v3475 = vmax.f32 %v3347, 0.0
  %v3476 = vmax.f32 %v3348, 0.0
  %v3477 = vmax.f32 %v3349, 0.0
  %v3478 = vmax.f32 %v3350, 0.0
  %v3479 = vmax.f32 %v3351, 0.0
  %v3480 = vmax.f32 %v3352, 0.0
  %v3481 = vmax.f32 %v3353, 0.0
  %v3482 = vmax.f32 %v3354, 0.0
  %v3483 = vmax.f32 %v3355, 0.0
  %v3484 = vmax.f32 %v3356, 0.0
  %v3485 = vmax.f32 %v3357, 0.0
  %v3486 = vmax.f32 %v3358, 0.0
  %v3487 = vmax.f32 %v3359, 0.0
  %v3488 = vmax.f32 %v3360, 0.0
  %v3489 = vmax.f32 %v3361, 0.0
  %v3490 = vmax.f32 %v3362, 0.0
  %v3491 = vmax.f32 %v3363, 0.0
  %v3492 = vmax.f32 %v3364, 0.0
  %v3493 = vmax.f32 %v3365, 0.0
  %v3494 = vmax.f32 %v3366, 0.0
  %v3495 = vmax.f32 %v3367, 0.0
  %v3496 = vmax.f32 %v3368, 0.0
  %v3497 = vmax.f32 %v3369, 0.0
  %v3498 = vmax.f32 %v3370, 0.0
  %v3499 = vmax.f32 %v3371, 0.0
  %v3500 = vmax.f32 %v3372, 0.0
  %v3501 = vmax.f32 %v3373, 0.0
  %v3502 = vmax.f32 %v3374, 0.0
  %v3503 = vmax.f32 %v3375, 0.0
  %v3504 = vmax.f32 %v3376, 0.0
  %v3505 = vmax.f32 %v3377, 0.0
  %v3506 = vmax.f32 %v3378, 0.0
  %v3507 = vmax.f32 %v3379, 0.0
  %v3508 = vmax.f32 %v3380, 0.0
  %v3509 = vmax.f32 %v3381, 0.0
  %v3510 = vmax.f32 %v3382, 0.0
  %v3511 = vmax.f32 %v3383, 0.0
  %v3512 = vmax.f32 %v3384, 0.0
  %v3513 = vmax.f32 %v3385, 0.0
  %v3514 = vmax.f32 %v3386, 0.0
  %v3515 = vmax.f32 %v3387, 0.0
  %v3516 = vmax.f32 %v3388, 0.0
  %v3517 = vmax.f32 %v3389, 0.0
  %v3518 = vmax.f32 %v3390, 0.0
  %v3519 = vmax.f32 %v3391, 0.0
  %v3520 = vmax.f32 %v3392, 0.0
  %v3521 = vmax.f32 %v3393, 0.0
  %v3522 = vmax.f32 %v3394, 0.0
  %v3523 = vmax.f32 %v3395, 0.0
  %v3524 = vmax.f32 %v3396, 0.0
  %v3525 = vmax.f32 %v3397, 0.0
  %v3526 = vmax.f32 %v3398, 0.0
  %v3527 = vmax.f32 %v3399, 0.0
  %v3528 = vmax.f32 %v3400, 0.0
  %v3529 = vmax.f32 %v3401, 0.0
  %v3530 = vmax.f32 %v3402, 0.0
  %v3531 = vmax.f32 %v3403, 0.0
  %v3532 = vmax.f32 %v3404, 0.0
  %v3533 = vmax.f32 %v3405, 0.0
  %v3534 = vmax.f32 %v3406, 0.0
  %v3535 = vmax.f32 %v3407, 0.0
  %v3536 = vmax.f32 %v3408, 0.0
  %v3537 = vmax.f32 %v3409, 0.0
  %v3538 = vmax.f32 %v3410, 0.0
  %v3539 = vmax.f32 %v3411, 0.0
  %v3540 = vmax.f32 %v3412, 0.0
  %v3541 = vmax.f32 %v3413, 0.0
  %v3542 = vmax.f32 %v3414, 0.0
  %v3543 = vmax.f32 %v3415, 0.0
  %v3544 = vmax.f32 %v3416, 0.0
  %v3545 = vmax.f32 %v3417, 0.0
  %v3546 = vmax.f32 %v3418, 0.0
  %v3547 = vmax.f32 %v3419, 0.0
  %v3548 = vmax.f32 %v3420, 0.0
  %v3549 = vmax.f32 %v3421, 0.0
  %v3550 = vmax.f32 %v3422, 0.0
  %v3551 = vmax.f32 %v3423, 0.0
  %v3552 = vmax.f32 %v3424, 0.0
  %v3553 = vmax.f32 %v3425, 0.0
  %v3554 = vmax.f32 %v3426, 0.0
  %v3555 = vmax.f32 %v3427, 0.0
  %v3556 = vmax.f32 %v3428, 0.0
  %v3557 = vmax.f32 %v3429, 0.0
  %v3558 = vmax.f32 %v3430, 0.0
  %v3559 = vmax.f32 %v3431, 0.0
  %v3560 = vmax.f32 %v3432, 0.0
  %v3561 = vmax.f32 %v3433, 0.0
  %v3562 = vmax.f32 %v3434, 0.0
  %v3563 = vmax.f32 %v3435, 0.0
  %v3564 = vmax.f32 %v3436, 0.0
  %v3565 = vmax.f32 %v3437, 0.0
  %v3566 = vmax.f32 %v3438, 0.0
  %v3567 = vmax.f32 %v3439, 0.0
  %v3568 = vmax.f32 %v3440, 0.0
  %v3569 = vmax.f32 %v3441, 0.0
  %v3570 = vmax.f32 %v3442, 0.0
  %v3571 = vmax.f32 %v3443, 0.0
  %v3572 = vmax.f32 %v3444, 0.0
  %v3573 = vmax.f32 %v3445, 0.0
  %v3574 = vmax.f32 %v3446, 0.0
  %v3575 = vmax.f32 %v3447, 0.0
  %v3576 = vmax.f32 %v3448, 0.0
  %v3577 = vmax.f32 %v3449, 0.0
  %v3578 = vmax.f32 %v3450, 0.0
  %v3579 = vmax.f32 %v3451, 0.0
  %v3580 = vmax.f32 %v3452, 0.0
  %v3581 = vmax.f32 %v3453, 0.0
  %v3582 = vmax.f32 %v3454, 0.0
  %v3583 = vmax.f32 %v3455, 0.0
  %v3584 = vmax.f32 %v3456, 0.0
  %v3585 = vmax.f32 %v3457, 0.0
  %v3586 = vmax.f32 %v3458, 0.0
  %v3587 = vmax.f32 %v3459, 0.0
  %v3588 = vmax.f32 %v3460, 0.0
  %v3589 = vmax.f32 %v3461, 0.0
  %v3590 = vmax.f32 %v3462, 0.0
  %v3591 = vmax.f32 %v3463, 0.0
  %v3592 = vmax.f32 %v3464, 0.0
  %v3593 = vmax.f32 %v3465, 0.0
  %v3594 = vmax.f32 %v3466, 0.0
  %v3595 = vmax.f32 %v3467, 0.0
  %v3596 = vmax.f32 %v3468, 0.0
  %v3597 = vmax.f32 %v3469, 0.0
  %v3598 = vmax.f32 %v3470, 0.0
  %v3599 = vadd.f32 %v3471, %v3472
  %v3600 = vadd.f32 %v3599, %v3473
  %v3601 = vadd.f32 %v3600, %v3474
  %v3602 = vadd.f32 %v3601, %v3475
  %v3603 = vadd.f32 %v3602, %v3476
  %v3604 = vadd.f32 %v3603, %v3477
  %v3605 = vadd.f32 %v3604, %v3478
  %v3606 = vadd.f32 %v3605, %v3479
  %v3607 = vadd.f32 %v3606, %v3480
  %v3608 = vadd.f32 %v3607, %v3481
  %v3609 = vadd.f32 %v3608, %v3482
  %v3610 = vadd.f32 %v3609, %v3483
  %v3611 = vadd.f32 %v3610, %v3484
  %v3612 = vadd.f32 %v3611, %v3485
  %v3613 = vadd.f32 %v3612, %v3486
  %v3614 = vadd.f32 %v3613, %v3487
  %v3615 = vadd.f32 %v3614, %v3488
  %v3616 = vadd.f32 %v3615, %v3489
  %v3617 = vadd.f32 %v3616, %v3490
  %v3618 = vadd.f32 %v3617, %v3491
  %v3619 = vadd.f32 %v3618, %v3492
  %v3620 = vadd.f32 %v3619, %v3493
  %v3621 = vadd.f32 %v3620, %v3494
  %v3622 = vadd.f32 %v3621, %v3495
  %v3623 = vadd.f32 %v3622, %v3496
  %v3624 = vadd.f32 %v3623, %v3497
  %v3625 = vadd.f32 %v3624, %v3498
  %v3626 = vadd.f32 %v3625, %v3499
  %v3627 = vadd.f32 %v3626, %v3500
  %v3628 = vadd.f32 %v3627, %v3501
  %v3629 = vadd.f32 %v3628, %v3502
  %v3630 = vrot.slane %v3629, 4
  %v3631 = vadd.f32 %v3629, %v3630
  %v3632 = vrot.slane %v3631, 2
  %v3633 = vadd.f32 %v3631, %v3632
  %v3634 = vrot.slane %v3633, 1
  %v3635 = vadd.f32 %v3633, %v3634
  %3636 = vst [vmem:[#allocation2] sm:$0x1] %v3635
  %v3637 = vadd.f32 %v3503, %v3504
  %v3638 = vadd.f32 %v3637, %v3505
  %v3639 = vadd.f32 %v3638, %v3506
  %v3640 = vadd.f32 %v3639, %v3507
  %v3641 = vadd.f32 %v3640, %v3508
  %v3642 = vadd.f32 %v3641, %v3509
  %v3643 = vadd.f32 %v3642, %v3510
  %v3644 = vadd.f32 %v3643, %v3511
  %v3645 = vadd.f32 %v3644, %v3512
  %v3646 = vadd.f32 %v3645, %v3513
  %v3647 = vadd.f32 %v3646, %v3514
  %v3648 = vadd.f32 %v3647, %v3515
  %v3649 = vadd.f32 %v3648, %v3516
  %v3650 = vadd.f32 %v3649, %v3517
  %v3651 = vadd.f32 %v3650, %v3518
  %v3652 = vadd.f32 %v3651, %v3519
  %v3653 = vadd.f32 %v3652, %v3520
  %v3654 = vadd.f32 %v3653, %v3521
  %v3655 = vadd.f32 %v3654, %v3522
  %v3656 = vadd.f32 %v3655, %v3523
  %v3657 = vadd.f32 %v3656, %v3524
  %v3658 = vadd.f32 %v3657, %v3525
  %v3659 = vadd.f32 %v3658, %v3526
  %v3660 = vadd.f32 %v3659, %v3527
  %v3661 = vadd.f32 %v3660, %v3528
  %v3662 = vadd.f32 %v3661, %v3529
  %v3663 = vadd.f32 %v3662, %v3530
  %v3664 = vadd.f32 %v3663, %v3531
  %v3665 = vadd.f32 %v3664, %v3532
  %v3666 = vadd.f32 %v3665, %v3533
  %v3667 = vadd.f32 %v3666, %v3534
  %v3668 = vrot.slane %v3667, 4
  %v3669 = vadd.f32 %v3667, %v3668
  %v3670 = vrot.slane %v3669, 2
  %v3671 = vadd.f32 %v3669, %v3670
  %v3672 = vrot.slane %v3671, 1
  %v3673 = vadd.f32 %v3671, %v3672
  %3674 = vst [vmem:[#allocation2 + $0x1] sm:$0x1] %v3673
  %v3675 = vadd.f32 %v3535, %v3536
  %v3676 = vadd.f32 %v3675, %v3537
  %v3677 = vadd.f32 %v3676, %v3538
  %v3678 = vadd.f32 %v3677, %v3539
  %v3679 = vadd.f32 %v3678, %v3540
  %v3680 = vadd.f32 %v3679, %v3541
  %v3681 = vadd.f32 %v3680, %v3542
  %v3682 = vadd.f32 %v3681, %v3543
  %v3683 = vadd.f32 %v3682, %v3544
  %v3684 = vadd.f32 %v3683, %v3545
  %v3685 = vadd.f32 %v3684, %v3546
  %v3686 = vadd.f32 %v3685, %v3547
  %v3687 = vadd.f32 %v3686, %v3548
  %v3688 = vadd.f32 %v3687, %v3549
  %v3689 = vadd.f32 %v3688, %v3550
  %v3690 = vadd.f32 %v3689, %v3551
  %v3691 = vadd.f32 %v3690, %v3552
  %v3692 = vadd.f32 %v3691, %v3553
  %v3693 = vadd.f32 %v3692, %v3554
  %v3694 = vadd.f32 %v3693, %v3555
  %v3695 = vadd.f32 %v3694, %v3556
  %v3696 = vadd.f32 %v3695, %v3557
  %v3697 = vadd.f32 %v3696, %v3558
  %v3698 = vadd.f32 %v3697, %v3559
  %v3699 = vadd.f32 %v3698, %v3560
  %v3700 = vadd.f32 %v3699, %v3561
  %v3701 = vadd.f32 %v3700, %v3562
  %v3702 = vadd.f32 %v3701, %v3563
  %v3703 = vadd.f32 %v3702, %v3564
  %v3704 = vadd.f32 %v3703, %v3565
  %v3705 = vadd.f32 %v3704, %v3566
  %v3706 = vrot.slane %v3705, 4
  %v3707 = vadd.f32 %v3705, %v3706
  %v3708 = vrot.slane %v3707, 2
  %v3709 = vadd.f32 %v3707, %v3708
  %v3710 = vrot.slane %v3709, 1
  %v3711 = vadd.f32 %v3709, %v3710
  %3712 = vst [vmem:[#allocation2 + $0x2] sm:$0x1] %v3711
  %v3713 = vadd.f32 %v3567, %v3568
  %v3714 = vadd.f32 %v3713, %v3569
  %v3715 = vadd.f32 %v3714, %v3570
  %v3716 = vadd.f32 %v3715, %v3571
  %v3717 = vadd.f32 %v3716, %v3572
  %v3718 = vadd.f32 %v3717, %v3573
  %v3719 = vadd.f32 %v3718, %v3574
  %v3720 = vadd.f32 %v3719, %v3575
  %v3721 = vadd.f32 %v3720, %v3576
  %v3722 = vadd.f32 %v3721, %v3577
  %v3723 = vadd.f32 %v3722, %v3578
  %v3724 = vadd.f32 %v3723, %v3579
  %v3725 = vadd.f32 %v3724, %v3580
  %v3726 = vadd.f32 %v3725, %v3581
  %v3727 = vadd.f32 %v3726, %v3582
  %v3728 = vadd.f32 %v3727, %v3583
  %v3729 = vadd.f32 %v3728, %v3584
  %v3730 = vadd.f32 %v3729, %v3585
  %v3731 = vadd.f32 %v3730, %v3586
  %v3732 = vadd.f32 %v3731, %v3587
  %v3733 = vadd.f32 %v3732, %v3588
  %v3734 = vadd.f32 %v3733, %v3589
  %v3735 = vadd.f32 %v3734, %v3590
  %v3736 = vadd.f32 %v3735, %v3591
  %v3737 = vadd.f32 %v3736, %v3592
  %v3738 = vadd.f32 %v3737, %v3593
  %v3739 = vadd.f32 %v3738, %v3594
  %v3740 = vadd.f32 %v3739, %v3595
  %v3741 = vadd.f32 %v3740, %v3596
  %v3742 = vadd.f32 %v3741, %v3597
  %v3743 = vadd.f32 %v3742, %v3598
  %v3744 = vrot.slane %v3743, 4
  %v3745 = vadd.f32 %v3743, %v3744
  %v3746 = vrot.slane %v3745, 2
  %v3747 = vadd.f32 %v3745, %v3746
  %v3748 = vrot.slane %v3747, 1
  %v3749 = vadd.f32 %v3747, %v3748
  %3750 = vst [vmem:[#allocation2 + $0x3] sm:$0x1] %v3749
  %v3751 = vld [vmem:[#allocation2] sm:$0xf]
  %v3752 = vld [vmem:[%s3] sm:$0xff]
  %v3753 = vld [vmem:[%s3 + $0x8] sm:$0xff]
  %v3754 = vld [vmem:[%s3 + $0x10] sm:$0xff]
  %v3755 = vld [vmem:[%s3 + $0x18] sm:$0xff]
  %v3756 = vld [vmem:[%s3 + $0x20] sm:$0xff]
  %v3757 = vld [vmem:[%s3 + $0x28] sm:$0xff]
  %v3758 = vld [vmem:[%s3 + $0x30] sm:$0xff]
  %v3759 = vld [vmem:[%s3 + $0x38] sm:$0xff]
  %v3760 = vld [vmem:[%s3 + $0x40] sm:$0xff]
  %v3761 = vld [vmem:[%s3 + $0x48] sm:$0xff]
  %v3762 = vld [vmem:[%s3 + $0x50] sm:$0xff]
  %v3763 = vld [vmem:[%s3 + $0x58] sm:$0xff]
  %v3764 = vld [vmem:[%s3 + $0x60] sm:$0xff]
  %v3765 = vld [vmem:[%s3 + $0x68] sm:$0xff]
  %v3766 = vld [vmem:[%s3 + $0x70] sm:$0xff]
  %v3767 = vld [vmem:[%s3 + $0x78] sm:$0xff]
  %v3768 = vld [vmem:[%s4] sm:$0x1]
  %v3770 = vlaneseq
  %v3771 = vshrl.u32 %v3770, 7
  %v3772 = vsub.s32 0, %v3771
  %v3773 = vrot.slane %v3768, %v3772
  %3775 = vmatprep.subr.mxu0 0.0
  %3776 = vmatpush1.msra.mxu0 %v3767
  %3777 = vmatprep.subr.mxu0 0.0
  %3778 = vmatpush1.msra.mxu0 %v3766
  %3779 = vmatprep.subr.mxu0 0.0
  %3780 = vmatpush1.msra.mxu0 %v3765
  %3781 = vmatprep.subr.mxu0 0.0
  %3782 = vmatpush1.msra.mxu0 %v3764
  %3783 = vmatprep.subr.mxu0 0.0
  %3784 = vmatpush1.msra.mxu0 %v3763
  %3785 = vmatprep.subr.mxu0 0.0
  %3786 = vmatpush1.msra.mxu0 %v3762
  %3787 = vmatprep.subr.mxu0 0.0
  %3788 = vmatpush1.msra.mxu0 %v3761
  %3789 = vmatprep.subr.mxu0 0.0
  %3790 = vmatpush1.msra.mxu0 %v3760
  %3791 = vmatprep.subr.mxu0 0.0
  %3792 = vmatpush1.msra.mxu0 %v3759
  %3793 = vmatprep.subr.mxu0 0.0
  %3794 = vmatpush1.msra.mxu0 %v3758
  %3795 = vmatprep.subr.mxu0 0.0
  %3796 = vmatpush1.msra.mxu0 %v3757
  %3797 = vmatprep.subr.mxu0 0.0
  %3798 = vmatpush1.msra.mxu0 %v3756
  %3799 = vmatprep.subr.mxu0 0.0
  %3800 = vmatpush1.msra.mxu0 %v3755
  %3801 = vmatprep.subr.mxu0 0.0
  %3802 = vmatpush1.msra.mxu0 %v3754
  %3803 = vmatprep.subr.mxu0 0.0
  %3804 = vmatpush1.msra.mxu0 %v3753
  %3805 = vmatprep.subr.mxu0 0.0
  %3806 = vmatpush1.msra.mxu0 %v3752
  %3807 = vmatprep.subr.mxu0 0.0
  %3808 = vmatpush2.msra.mxu0 0.0
  %3809 = vmatprep.subr.mxu0 0.0
  %3810 = vmatpush2.msra.mxu0 0.0
  %3811 = vmatprep.subr.mxu0 0.0
  %3812 = vmatpush2.msra.mxu0 0.0
  %3813 = vmatprep.subr.mxu0 0.0
  %3814 = vmatpush2.msra.mxu0 0.0
  %3815 = vmatprep.subr.mxu0 0.0
  %3816 = vmatpush2.msra.mxu0 0.0
  %3817 = vmatprep.subr.mxu0 0.0
  %3818 = vmatpush2.msra.mxu0 0.0
  %3819 = vmatprep.subr.mxu0 0.0
  %3820 = vmatpush2.msra.mxu0 0.0
  %3821 = vmatprep.subr.mxu0 0.0
  %3822 = vmatpush2.msra.mxu0 0.0
  %3823 = vmatprep.subr.mxu0 0.0
  %3824 = vmatpush2.msra.mxu0 0.0
  %3825 = vmatprep.subr.mxu0 0.0
  %3826 = vmatpush2.msra.mxu0 0.0
  %3827 = vmatprep.subr.mxu0 0.0
  %3828 = vmatpush2.msra.mxu0 0.0
  %3829 = vmatprep.subr.mxu0 0.0
  %3830 = vmatpush2.msra.mxu0 0.0
  %3831 = vmatprep.subr.mxu0 0.0
  %3832 = vmatpush2.msra.mxu0 0.0
  %3833 = vmatprep.subr.mxu0 0.0
  %3834 = vmatpush2.msra.mxu0 0.0
  %3835 = vmatprep.subr.mxu0 0.0
  %3836 = vmatpush2.msra.mxu0 0.0
  %3837 = vmatprep.subr.mxu0 0.0
  %3838 = vmatpush2.msra.mxu0 0.0
  %3839 = vmatprep.mubr.f32.mxu0 0.0
  %3840 = vmatmul.mubr.f32.gmra.mxu0 %v3751
  %v3841 = vpop.f32.mrf.mxu0
  %v3842 = vadd.f32 %v3773, %v3841
  %v3843 = vpop.f32.mrf.mxu0
  %3844 = vdwg.mxu0
  %3845 = vst [vmem:[%s5] sm:$0xf] %v3842
  // Predicated region
  $region22: #{seqnet_forward.1} parent=0 // pred_check
    _
  $region23: #{seqnet_forward.1} parent=0 // pred_check_branch
    %3847 = sbr.rel (0) target = $region25
  $region24: #{seqnet_forward.1} parent=0 // pred_region
    _
  $region25: #{seqnet_forward.1} parent=0 // pred_fallthru
    _
  // Predicated region
  $region26: #{seqnet_forward.1} parent=0 // pred_check
    _
  $region27: #{seqnet_forward.1} parent=0 // pred_check_branch
    %3849 = sbr.rel (0) target = $region29
  $region28: #{seqnet_forward.1} parent=0 // pred_region
    _
  $region29: #{seqnet_forward.1} parent=0 // pred_fallthru
    _

</llo_original>
